<compile_context>
chip_gen: v6e
topology: v6e:2x2x1
jax: 0.10.0
libtpu: 0.0.40
codegen_flags: <defaults>
</compile_context>

<pallas_src>
import functools

import jax
import jax.numpy as jnp
from jax.experimental import pallas as pl
from jax.experimental.pallas import tpu as pltpu

_BN_EPS = 1e-5


def _round_up(x, m):
    return ((x + m - 1) // m) * m


# ------------------------------ fused kernel ---------------------------------
def _lstm_bn_fc_kernel(x_ref, wih0_ref, whh0_ref, b0_ref,
                       wih1_ref, whh1_ref, b1_ref, wfc_ref, bfc_ref,
                       out_ref,
                       gx_ref, hbuf_ref, h0_ref, c0_ref, h1_ref, c1_ref,
                       *, TC, BB, H):
    """One (batch_block, time_chunk) grid step.

    x_ref   : (TC*BB, I)   bf16, rows ordered (t, b) within the chunk
    wih0    : (I,  GP)     bf16   layer-0 input->gate weights (packed gates)
    whh0    : (H,  GP)     f32    layer-0 hidden->gate weights
    wih1    : (H,  GP)     bf16   layer-1 input->gate weights
    whh1    : (H,  GP)     f32
    b0/b1   : (1,  GP)     f32    summed gate bias (b_ih + b_hh)
    wfc     : (H,  OP)     bf16   FC weights with eval-mode BN folded, 128-lane padded
    bfc     : (1,  OP)     f32
    out_ref : (TC*BB, OP)  f32    lane-dense output slab
    gx_ref  : (TC*BB, GP)  f32    scratch: hoisted input-projection gates
    hbuf_ref: (TC*BB, H)   f32    scratch: per-step hidden states of current layer
    h*/c*   : (BB, H)      f32    scratch: LSTM state carried across time chunks
    """
    t = pl.program_id(1)

    @pl.when(t == 0)
    def _init():
        z = jnp.zeros((BB, H), jnp.float32)
        h0_ref[...] = z
        c0_ref[...] = z
        h1_ref[...] = z
        c1_ref[...] = z

    # ---- layer-0 input projection for this chunk: one bf16 MXU GEMM ----------
    gx_ref[...] = jnp.dot(x_ref[...], wih0_ref[...],
                          preferred_element_type=jnp.float32) + b0_ref[...]

    def run_layer(whh_ref, h_ref, c_ref):
        # W_hh read ONCE per chunk; stationary across the serial time loop.
        whh = whh_ref[...]

        def step(s, carry):
            h, c = carry
            row = pl.multiple_of(s * BB, BB)
            gates = gx_ref[pl.ds(row, BB), :] + jnp.dot(
                h, whh, preferred_element_type=jnp.float32)
            # Packed gate layout: i|f|g|o at natural H-wide offsets.
            i = jax.nn.sigmoid(gates[:, 0 * H:1 * H])
            f = jax.nn.sigmoid(gates[:, 1 * H:2 * H])
            g = jnp.tanh(gates[:, 2 * H:3 * H])
            o = jax.nn.sigmoid(gates[:, 3 * H:4 * H])
            c = f * c + i * g
            h = o * jnp.tanh(c)
            hbuf_ref[pl.ds(row, BB), :] = h
            return h, c

        h_fin, c_fin = jax.lax.fori_loop(
            0, TC, step, (h_ref[...], c_ref[...]), unroll=min(8, TC))
        h_ref[...] = h_fin
        c_ref[...] = c_fin

    run_layer(whh0_ref, h0_ref, c0_ref)

    # ---- layer-1 input projection from layer-0 hiddens (bf16 GEMM) ----------
    # TODO(synk): training-mode inter-layer dropout (p=0.1) omitted (eval forward).
    gx_ref[...] = jnp.dot(hbuf_ref[...].astype(jnp.bfloat16), wih1_ref[...],
                          preferred_element_type=jnp.float32) + b1_ref[...]
    run_layer(whh1_ref, h1_ref, c1_ref)

    # ---- folded BatchNorm + FC: one bf16 GEMM, lane-dense 128-wide store -----
    out_ref[...] = jnp.dot(hbuf_ref[...].astype(jnp.bfloat16), wfc_ref[...],
                           preferred_element_type=jnp.float32) + bfc_ref[...]


# ------------------------------ parameters ------------------------------------
def init_params(key, input_size, hidden_size, output_size, num_layers=2):
    """Raw PyTorch-layout parameters."""
    k = 1.0 / jnp.sqrt(hidden_size)
    p = {"lstm": []}
    for layer in range(num_layers):
        in_sz = input_size if layer == 0 else hidden_size
        key, k1, k2, k3, k4 = jax.random.split(key, 5)
        p["lstm"].append({
            "w_ih": jax.random.uniform(k1, (4 * hidden_size, in_sz), jnp.float32, -k, k),
            "w_hh": jax.random.uniform(k2, (4 * hidden_size, hidden_size), jnp.float32, -k, k),
            "b_ih": jax.random.uniform(k3, (4 * hidden_size,), jnp.float32, -k, k),
            "b_hh": jax.random.uniform(k4, (4 * hidden_size,), jnp.float32, -k, k),
        })
    # BatchNorm1d (eval mode). Non-trivial stats to actually exercise the fold.
    key, kg, kb, km, kv = jax.random.split(key, 5)
    p["bn_gamma"] = 1.0 + 0.1 * jax.random.normal(kg, (hidden_size,), jnp.float32)
    p["bn_beta"] = 0.1 * jax.random.normal(kb, (hidden_size,), jnp.float32)
    p["bn_mean"] = 0.1 * jax.random.normal(km, (hidden_size,), jnp.float32)
    p["bn_var"] = jnp.abs(1.0 + 0.1 * jax.random.normal(kv, (hidden_size,), jnp.float32))
    key, k5, k6 = jax.random.split(key, 3)
    p["fc_w"] = jax.random.uniform(k5, (output_size, hidden_size), jnp.float32, -k, k)
    p["fc_b"] = jax.random.uniform(k6, (output_size,), jnp.float32, -k, k)
    return p


def prep_kernel_params(p, hidden_size, output_size):
    """Packed-gate layout, bf16 MXU weights, BN folded into FC, lane-dense FC."""
    H = hidden_size
    GP = _round_up(4 * H, 128)          # packed gate width (i|f|g|o + padding)
    OP = _round_up(output_size, 128)    # lane-dense FC output width

    def gates_packed(w):                # torch (4H, in) -> (in, GP)
        out = jnp.zeros((w.shape[1], GP), jnp.float32)
        return out.at[:, :4 * H].set(w.T)

    def bias_packed(b):                 # (4H,) -> (1, GP)
        return jnp.zeros((1, GP), jnp.float32).at[0, :4 * H].set(b)

    l0, l1 = p["lstm"]
    kp = {
        "wih0": gates_packed(l0["w_ih"]).astype(jnp.bfloat16),   # (I,  GP) bf16
        "whh0": gates_packed(l0["w_hh"]),                        # (H,  GP) f32
        "b0":   bias_packed(l0["b_ih"] + l0["b_hh"]),            # (1,  GP) f32
        "wih1": gates_packed(l1["w_ih"]).astype(jnp.bfloat16),   # (H,  GP) bf16
        "whh1": gates_packed(l1["w_hh"]),                        # (H,  GP) f32
        "b1":   bias_packed(l1["b_ih"] + l1["b_hh"]),            # (1,  GP) f32
    }
    # Fold eval-mode BatchNorm (running stats) into the FC layer (exact algebra).
    scale = p["bn_gamma"] * jax.lax.rsqrt(p["bn_var"] + _BN_EPS)   # (H,)
    shift = p["bn_beta"] - p["bn_mean"] * scale                    # (H,)
    w_fc_t = p["fc_w"].T                                           # (H, O)
    wfc = jnp.zeros((H, OP), jnp.float32).at[:, :output_size].set(scale[:, None] * w_fc_t)
    bfc = jnp.zeros((1, OP), jnp.float32).at[0, :output_size].set(p["fc_b"] + shift @ w_fc_t)
    kp["wfc"] = wfc.astype(jnp.bfloat16)
    kp["bfc"] = bfc
    kp["out_features"] = int(output_size)
    return kp


# ------------------------------ model forward ---------------------------------
def lstm_model_forward(kp, x_bti):
    # x_bti: (B, T, input_size) -> (B, T, output_size)
    B, T, I = x_bti.shape
    H = kp["whh0"].shape[0]
    GP = kp["whh0"].shape[1]
    OP = kp["wfc"].shape[1]
    O = kp["out_features"]

    # Batch padding / blocking: 2 batch blocks ("parallel" axis -> v7x megacore)
    # whenever the batch is big enough, otherwise one 8-row block.
    if B <= 8:
        BP, NB = 8, 1
    else:
        BP, NB = _round_up(B, 16), 2
    BB = BP // NB
    # Time chunking: bounds VMEM independent of T and pipelines x/out DMAs.
    TC = min(T, 32)
    T_pad = _round_up(T, TC)
    NT = T_pad // TC

    # (B,T,I) -> zero-pad -> (NB, T_pad*BB, I), row inside a block = t*BB + b.
    x = jnp.pad(x_bti.astype(jnp.float32), ((0, BP - B), (0, T_pad - T), (0, 0)))
    x = x.reshape(NB, BB, T_pad, I).transpose(0, 2, 1, 3).reshape(NB, T_pad * BB, I)
    x = x.astype(jnp.bfloat16)

    kernel = functools.partial(_lstm_bn_fc_kernel, TC=TC, BB=BB, H=H)

    # VMEM budget from actual slab sizes (chunks double-buffered, weights single).
    lane = lambda n: _round_up(n, 128)
    sub = lambda n: _round_up(n, 8)
    vmem_bytes = (
        2 * TC * BB * lane(I) * 2          # x chunk (bf16, double-buffered)
        + 2 * TC * BB * lane(OP) * 4       # out chunk (f32, double-buffered)
        + sub(I) * lane(GP) * 2            # wih0
        + 2 * sub(H) * lane(GP) * 4        # whh0, whh1
        + sub(H) * lane(GP) * 2            # wih1
        + 2 * sub(1) * lane(GP) * 4        # b0, b1
        + sub(H) * lane(OP) * 2            # wfc
        + sub(1) * lane(OP) * 4            # bfc
        + TC * BB * lane(GP) * 4           # gx scratch
        + TC * BB * lane(H) * 4            # hbuf scratch
        + 4 * sub(BB) * lane(H) * 4        # h0/c0/h1/c1 scratch
    )
    vmem_limit = int(min(max(2 * vmem_bytes, 32 << 20), 64 << 20))

    weight_spec = pl.BlockSpec(memory_space=pltpu.MemorySpace.VMEM)  # no double-buffer
    out = pl.pallas_call(
        kernel,
        out_shape=jax.ShapeDtypeStruct((NB, T_pad * BB, OP), jnp.float32),
        grid=(NB, NT),
        in_specs=[pl.BlockSpec((None, TC * BB, I), lambda b, t: (b, t, 0))]
                 + [weight_spec] * 8,
        out_specs=pl.BlockSpec((None, TC * BB, OP), lambda b, t: (b, t, 0)),
        scratch_shapes=[
            pltpu.VMEM((TC * BB, GP), jnp.float32),   # gx (hoisted input gates)
            pltpu.VMEM((TC * BB, H), jnp.float32),    # hbuf (chunk hidden states)
            pltpu.VMEM((BB, H), jnp.float32),         # h (layer 0)
            pltpu.VMEM((BB, H), jnp.float32),         # c (layer 0)
            pltpu.VMEM((BB, H), jnp.float32),         # h (layer 1)
            pltpu.VMEM((BB, H), jnp.float32),         # c (layer 1)
        ],
        compiler_params=pltpu.CompilerParams(
            dimension_semantics=("parallel", "arbitrary"),
            vmem_limit_bytes=vmem_limit),
    )(x, kp["wih0"], kp["whh0"], kp["b0"],
      kp["wih1"], kp["whh1"], kp["b1"], kp["wfc"], kp["bfc"])

    out = out.reshape(NB, T_pad, BB, OP).transpose(0, 2, 1, 3).reshape(BP, T_pad, OP)
    return out[:B, :T, :O]


# ----------------------------- pure-JAX reference ------------------------------
def reference_forward(p, x_bti):
    h = x_bti.astype(jnp.float32)
    for lyr in p["lstm"]:
        w_ih, w_hh = lyr["w_ih"], lyr["w_hh"]
        bias = lyr["b_ih"] + lyr["b_hh"]
        B = h.shape[0]
        H = w_hh.shape[1]

        def step(carry, x_t, w_ih=w_ih, w_hh=w_hh, bias=bias):
            hh, cc = carry
            gates = x_t @ w_ih.T + hh @ w_hh.T + bias
            i, f, g, o = jnp.split(gates, 4, axis=-1)
            cc = jax.nn.sigmoid(f) * cc + jax.nn.sigmoid(i) * jnp.tanh(g)
            hh = jax.nn.sigmoid(o) * jnp.tanh(cc)
            return (hh, cc), hh

        x_tbi = jnp.transpose(h, (1, 0, 2))
        init = (jnp.zeros((B, H), jnp.float32), jnp.zeros((B, H), jnp.float32))
        _, hs = jax.lax.scan(step, init, x_tbi)
        h = jnp.transpose(hs, (1, 0, 2))
    scale = p["bn_gamma"] * jax.lax.rsqrt(p["bn_var"] + _BN_EPS)
    hn = (h - p["bn_mean"]) * scale + p["bn_beta"]
    return hn @ p["fc_w"].T + p["fc_b"]


if __name__ == "__main__":
    B, T, I, H, O = 2, 8, 16, 32, 4
    key = jax.random.PRNGKey(0)
    key, kx, kparam = jax.random.split(key, 3)
    x = jax.random.normal(kx, (B, T, I), jnp.float32)

    params = init_params(kparam, I, H, O, num_layers=2)
    kernel_params = prep_kernel_params(params, H, O)

    out = lstm_model_forward(kernel_params, x)
    out = jax.block_until_ready(out)

    ref = reference_forward(params, x)
    assert out.shape == (B, T, O), out.shape
    err = float(jnp.max(jnp.abs(out - ref)))
    # bf16 on the MXU GEMM paths (recurrence stays f32) -> relaxed tolerance.
    assert jnp.allclose(out, ref, atol=3e-2, rtol=3e-2), f"mismatch vs reference: {err}"
    print("KERNEL_OK")
</pallas_src>

<mosaic_0001>
module attributes {stable_mosaic.version = 11 : i64} {
  func.func @_lstm_bn_fc_kernel(%arg0: i32, %arg1: i32, %arg2: memref<1x64x16xbf16, #tpu.memory_space<vmem>>, %arg3: memref<16x128xbf16, #tpu.memory_space<vmem>>, %arg4: memref<32x128xf32, #tpu.memory_space<vmem>>, %arg5: memref<1x128xf32, #tpu.memory_space<vmem>>, %arg6: memref<32x128xbf16, #tpu.memory_space<vmem>>, %arg7: memref<32x128xf32, #tpu.memory_space<vmem>>, %arg8: memref<1x128xf32, #tpu.memory_space<vmem>>, %arg9: memref<32x128xbf16, #tpu.memory_space<vmem>>, %arg10: memref<1x128xf32, #tpu.memory_space<vmem>>, %arg11: memref<1x64x128xf32, #tpu.memory_space<vmem>>, %arg12: memref<64x128xf32, #tpu.memory_space<vmem>>, %arg13: memref<64x32xf32, #tpu.memory_space<vmem>>, %arg14: memref<8x32xf32, #tpu.memory_space<vmem>>, %arg15: memref<8x32xf32, #tpu.memory_space<vmem>>, %arg16: memref<8x32xf32, #tpu.memory_space<vmem>>, %arg17: memref<8x32xf32, #tpu.memory_space<vmem>>) attributes {dimension_semantics = [#tpu.dimension_semantics<parallel>, #tpu.dimension_semantics<arbitrary>], iteration_bounds = array<i64: 1, 1>, scalar_prefetch = 0 : i64, scratch_operands = 6 : i64, tpu.core_type = #tpu.core_type<tc>, window_params = [{transform_indices = @transform_0, window_bounds = array<i64: 1, 64, 16>}, {pipeline_mode = #tpu.pipeline_mode<synchronous>, transform_indices = @transform_1, window_bounds = array<i64: 16, 128>}, {pipeline_mode = #tpu.pipeline_mode<synchronous>, transform_indices = @transform_2, window_bounds = array<i64: 32, 128>}, {pipeline_mode = #tpu.pipeline_mode<synchronous>, transform_indices = @transform_3, window_bounds = array<i64: 1, 128>}, {pipeline_mode = #tpu.pipeline_mode<synchronous>, transform_indices = @transform_4, window_bounds = array<i64: 32, 128>}, {pipeline_mode = #tpu.pipeline_mode<synchronous>, transform_indices = @transform_5, window_bounds = array<i64: 32, 128>}, {pipeline_mode = #tpu.pipeline_mode<synchronous>, transform_indices = @transform_6, window_bounds = array<i64: 1, 128>}, {pipeline_mode = #tpu.pipeline_mode<synchronous>, transform_indices = @transform_7, window_bounds = array<i64: 32, 128>}, {pipeline_mode = #tpu.pipeline_mode<synchronous>, transform_indices = @transform_8, window_bounds = array<i64: 1, 128>}, {transform_indices = @transform_9, window_bounds = array<i64: 1, 64, 128>}]} {
    %c0_i32 = arith.constant 0 : i32
    %0 = arith.cmpi eq, %arg1, %c0_i32 : i32
    %1 = arith.extui %0 : i1 to i32
    %c0_i32_0 = arith.constant 0 : i32
    %2 = arith.cmpi ne, %1, %c0_i32_0 : i32
    scf.if %2 {
      %cst_170 = arith.constant 0.000000e+00 : f32
      %567 = vector.broadcast %cst_170 : f32 to vector<8x32xf32>
      %c0_171 = arith.constant 0 : index
      %c0_172 = arith.constant 0 : index
      %568 = vector.load %arg14[%c0_171, %c0_172] : memref<8x32xf32, #tpu.memory_space<vmem>>, vector<8x32xf32>
      tpu.vector_store %arg14[%c0_171, %c0_172], %567 {strides = array<i32>} : memref<8x32xf32, #tpu.memory_space<vmem>>, vector<8x32xf32>,
      %c0_173 = arith.constant 0 : index
      %c0_174 = arith.constant 0 : index
      %569 = vector.load %arg15[%c0_173, %c0_174] : memref<8x32xf32, #tpu.memory_space<vmem>>, vector<8x32xf32>
      tpu.vector_store %arg15[%c0_173, %c0_174], %567 {strides = array<i32>} : memref<8x32xf32, #tpu.memory_space<vmem>>, vector<8x32xf32>,
      %c0_175 = arith.constant 0 : index
      %c0_176 = arith.constant 0 : index
      %570 = vector.load %arg16[%c0_175, %c0_176] : memref<8x32xf32, #tpu.memory_space<vmem>>, vector<8x32xf32>
      tpu.vector_store %arg16[%c0_175, %c0_176], %567 {strides = array<i32>} : memref<8x32xf32, #tpu.memory_space<vmem>>, vector<8x32xf32>,
      %c0_177 = arith.constant 0 : index
      %c0_178 = arith.constant 0 : index
      %571 = vector.load %arg17[%c0_177, %c0_178] : memref<8x32xf32, #tpu.memory_space<vmem>>, vector<8x32xf32>
      tpu.vector_store %arg17[%c0_177, %c0_178], %567 {strides = array<i32>} : memref<8x32xf32, #tpu.memory_space<vmem>>, vector<8x32xf32>,
    } else {
    }
    %c0 = arith.constant 0 : index
    %c0_1 = arith.constant 0 : index
    %c0_2 = arith.constant 0 : index
    %3 = vector.load %arg2[%c0, %c0_1, %c0_2] : memref<1x64x16xbf16, #tpu.memory_space<vmem>>, vector<1x64x16xbf16>
    %4 = vector.shape_cast %3 : vector<1x64x16xbf16> to vector<64x16xbf16>
    %c0_3 = arith.constant 0 : index
    %c0_4 = arith.constant 0 : index
    %5 = vector.load %arg3[%c0_3, %c0_4] : memref<16x128xbf16, #tpu.memory_space<vmem>>, vector<16x128xbf16>
    %cst = arith.constant dense<0.000000e+00> : vector<64x128xf32>
    %6 = tpu.matmul %4, %5, %cst {dimension_numbers = #tpu.dot_dimension_numbers<[1], [0], [0], [1], [0, 0, 1, 1], [], []>} : vector<64x16xbf16>, vector<16x128xbf16>, vector<64x128xf32> -> vector<64x128xf32>
    %c0_5 = arith.constant 0 : index
    %c0_6 = arith.constant 0 : index
    %7 = vector.load %arg5[%c0_5, %c0_6] : memref<1x128xf32, #tpu.memory_space<vmem>>, vector<1x128xf32>
    %8 = vector.broadcast %7 : vector<1x128xf32> to vector<64x128xf32>
    %9 = arith.addf %6, %8 : vector<64x128xf32>
    %c0_7 = arith.constant 0 : index
    %c0_8 = arith.constant 0 : index
    %10 = vector.load %arg12[%c0_7, %c0_8] : memref<64x128xf32, #tpu.memory_space<vmem>>, vector<64x128xf32>
    tpu.vector_store %arg12[%c0_7, %c0_8], %9 {strides = array<i32>} : memref<64x128xf32, #tpu.memory_space<vmem>>, vector<64x128xf32>,
    %c0_9 = arith.constant 0 : index
    %c0_10 = arith.constant 0 : index
    %11 = vector.load %arg4[%c0_9, %c0_10] : memref<32x128xf32, #tpu.memory_space<vmem>>, vector<32x128xf32>
    %c0_11 = arith.constant 0 : index
    %c0_12 = arith.constant 0 : index
    %12 = vector.load %arg14[%c0_11, %c0_12] : memref<8x32xf32, #tpu.memory_space<vmem>>, vector<8x32xf32>
    %c0_13 = arith.constant 0 : index
    %c0_14 = arith.constant 0 : index
    %13 = vector.load %arg15[%c0_13, %c0_14] : memref<8x32xf32, #tpu.memory_space<vmem>>, vector<8x32xf32>
    %c0_i32_15 = arith.constant 0 : i32
    %c8_i32 = arith.constant 8 : i32
    %14 = arith.muli %c0_i32_15, %c8_i32 : i32
    %15 = tpu.assume_multiple %14, 8 : i32
    %16 = arith.index_cast %15 : i32 to index
    %c0_16 = arith.constant 0 : index
    %17 = vector.load %arg12[%16, %c0_16] : memref<64x128xf32, #tpu.memory_space<vmem>>, vector<8x128xf32>
    %cst_17 = arith.constant dense<0.000000e+00> : vector<8x128xf32>
    %18 = tpu.matmul %12, %11, %cst_17 {dimension_numbers = #tpu.dot_dimension_numbers<[1], [0], [0], [1], [0, 0, 1, 1], [], []>} : vector<8x32xf32>, vector<32x128xf32>, vector<8x128xf32> -> vector<8x128xf32>
    %19 = arith.addf %17, %18 : vector<8x128xf32>
    %20 = vector.extract_strided_slice %19 {offsets = [0, 0], sizes = [8, 32], strides = [1, 1]} : vector<8x128xf32> to vector<8x32xf32>
    %21 = arith.negf %20 : vector<8x32xf32>
    %22 = math.exp %21 : vector<8x32xf32>
    %cst_18 = arith.constant 1.000000e+00 : f32
    %23 = vector.broadcast %cst_18 : f32 to vector<8x32xf32>
    %24 = arith.addf %23, %22 : vector<8x32xf32>
    %25 = arith.divf %23, %24 : vector<8x32xf32>
    %26 = vector.extract_strided_slice %19 {offsets = [0, 32], sizes = [8, 32], strides = [1, 1]} : vector<8x128xf32> to vector<8x32xf32>
    %27 = arith.negf %26 : vector<8x32xf32>
    %28 = math.exp %27 : vector<8x32xf32>
    %cst_19 = arith.constant 1.000000e+00 : f32
    %29 = vector.broadcast %cst_19 : f32 to vector<8x32xf32>
    %30 = arith.addf %29, %28 : vector<8x32xf32>
    %31 = arith.divf %29, %30 : vector<8x32xf32>
    %32 = vector.extract_strided_slice %19 {offsets = [0, 64], sizes = [8, 32], strides = [1, 1]} : vector<8x128xf32> to vector<8x32xf32>
    %33 = math.tanh %32 : vector<8x32xf32>
    %34 = vector.extract_strided_slice %19 {offsets = [0, 96], sizes = [8, 32], strides = [1, 1]} : vector<8x128xf32> to vector<8x32xf32>
    %35 = arith.negf %34 : vector<8x32xf32>
    %36 = math.exp %35 : vector<8x32xf32>
    %cst_20 = arith.constant 1.000000e+00 : f32
    %37 = vector.broadcast %cst_20 : f32 to vector<8x32xf32>
    %38 = arith.addf %37, %36 : vector<8x32xf32>
    %39 = arith.divf %37, %38 : vector<8x32xf32>
    %40 = arith.mulf %31, %13 : vector<8x32xf32>
    %41 = arith.mulf %25, %33 : vector<8x32xf32>
    %42 = arith.addf %40, %41 : vector<8x32xf32>
    %43 = math.tanh %42 : vector<8x32xf32>
    %44 = arith.mulf %39, %43 : vector<8x32xf32>
    %45 = arith.index_cast %15 : i32 to index
    %c0_21 = arith.constant 0 : index
    %46 = vector.load %arg13[%45, %c0_21] : memref<64x32xf32, #tpu.memory_space<vmem>>, vector<8x32xf32>
    tpu.vector_store %arg13[%45, %c0_21], %44 {strides = array<i32>} : memref<64x32xf32, #tpu.memory_space<vmem>>, vector<8x32xf32>,
    %c1_i32 = arith.constant 1 : i32
    %c8_i32_22 = arith.constant 8 : i32
    %47 = arith.muli %c1_i32, %c8_i32_22 : i32
    %48 = tpu.assume_multiple %47, 8 : i32
    %49 = arith.index_cast %48 : i32 to index
    %c0_23 = arith.constant 0 : index
    %50 = vector.load %arg12[%49, %c0_23] : memref<64x128xf32, #tpu.memory_space<vmem>>, vector<8x128xf32>
    %cst_24 = arith.constant dense<0.000000e+00> : vector<8x128xf32>
    %51 = tpu.matmul %44, %11, %cst_24 {dimension_numbers = #tpu.dot_dimension_numbers<[1], [0], [0], [1], [0, 0, 1, 1], [], []>} : vector<8x32xf32>, vector<32x128xf32>, vector<8x128xf32> -> vector<8x128xf32>
    %52 = arith.addf %50, %51 : vector<8x128xf32>
    %53 = vector.extract_strided_slice %52 {offsets = [0, 0], sizes = [8, 32], strides = [1, 1]} : vector<8x128xf32> to vector<8x32xf32>
    %54 = arith.negf %53 : vector<8x32xf32>
    %55 = math.exp %54 : vector<8x32xf32>
    %cst_25 = arith.constant 1.000000e+00 : f32
    %56 = vector.broadcast %cst_25 : f32 to vector<8x32xf32>
    %57 = arith.addf %56, %55 : vector<8x32xf32>
    %58 = arith.divf %56, %57 : vector<8x32xf32>
    %59 = vector.extract_strided_slice %52 {offsets = [0, 32], sizes = [8, 32], strides = [1, 1]} : vector<8x128xf32> to vector<8x32xf32>
    %60 = arith.negf %59 : vector<8x32xf32>
    %61 = math.exp %60 : vector<8x32xf32>
    %cst_26 = arith.constant 1.000000e+00 : f32
    %62 = vector.broadcast %cst_26 : f32 to vector<8x32xf32>
    %63 = arith.addf %62, %61 : vector<8x32xf32>
    %64 = arith.divf %62, %63 : vector<8x32xf32>
    %65 = vector.extract_strided_slice %52 {offsets = [0, 64], sizes = [8, 32], strides = [1, 1]} : vector<8x128xf32> to vector<8x32xf32>
    %66 = math.tanh %65 : vector<8x32xf32>
    %67 = vector.extract_strided_slice %52 {offsets = [0, 96], sizes = [8, 32], strides = [1, 1]} : vector<8x128xf32> to vector<8x32xf32>
    %68 = arith.negf %67 : vector<8x32xf32>
    %69 = math.exp %68 : vector<8x32xf32>
    %cst_27 = arith.constant 1.000000e+00 : f32
    %70 = vector.broadcast %cst_27 : f32 to vector<8x32xf32>
    %71 = arith.addf %70, %69 : vector<8x32xf32>
    %72 = arith.divf %70, %71 : vector<8x32xf32>
    %73 = arith.mulf %64, %42 : vector<8x32xf32>
    %74 = arith.mulf %58, %66 : vector<8x32xf32>
    %75 = arith.addf %73, %74 : vector<8x32xf32>
    %76 = math.tanh %75 : vector<8x32xf32>
    %77 = arith.mulf %72, %76 : vector<8x32xf32>
    %78 = arith.index_cast %48 : i32 to index
    %c0_28 = arith.constant 0 : index
    %79 = vector.load %arg13[%78, %c0_28] : memref<64x32xf32, #tpu.memory_space<vmem>>, vector<8x32xf32>
    tpu.vector_store %arg13[%78, %c0_28], %77 {strides = array<i32>} : memref<64x32xf32, #tpu.memory_space<vmem>>, vector<8x32xf32>,
    %c2_i32 = arith.constant 2 : i32
    %c8_i32_29 = arith.constant 8 : i32
    %80 = arith.muli %c2_i32, %c8_i32_29 : i32
    %81 = tpu.assume_multiple %80, 8 : i32
    %82 = arith.index_cast %81 : i32 to index
    %c0_30 = arith.constant 0 : index
    %83 = vector.load %arg12[%82, %c0_30] : memref<64x128xf32, #tpu.memory_space<vmem>>, vector<8x128xf32>
    %cst_31 = arith.constant dense<0.000000e+00> : vector<8x128xf32>
    %84 = tpu.matmul %77, %11, %cst_31 {dimension_numbers = #tpu.dot_dimension_numbers<[1], [0], [0], [1], [0, 0, 1, 1], [], []>} : vector<8x32xf32>, vector<32x128xf32>, vector<8x128xf32> -> vector<8x128xf32>
    %85 = arith.addf %83, %84 : vector<8x128xf32>
    %86 = vector.extract_strided_slice %85 {offsets = [0, 0], sizes = [8, 32], strides = [1, 1]} : vector<8x128xf32> to vector<8x32xf32>
    %87 = arith.negf %86 : vector<8x32xf32>
    %88 = math.exp %87 : vector<8x32xf32>
    %cst_32 = arith.constant 1.000000e+00 : f32
    %89 = vector.broadcast %cst_32 : f32 to vector<8x32xf32>
    %90 = arith.addf %89, %88 : vector<8x32xf32>
    %91 = arith.divf %89, %90 : vector<8x32xf32>
    %92 = vector.extract_strided_slice %85 {offsets = [0, 32], sizes = [8, 32], strides = [1, 1]} : vector<8x128xf32> to vector<8x32xf32>
    %93 = arith.negf %92 : vector<8x32xf32>
    %94 = math.exp %93 : vector<8x32xf32>
    %cst_33 = arith.constant 1.000000e+00 : f32
    %95 = vector.broadcast %cst_33 : f32 to vector<8x32xf32>
    %96 = arith.addf %95, %94 : vector<8x32xf32>
    %97 = arith.divf %95, %96 : vector<8x32xf32>
    %98 = vector.extract_strided_slice %85 {offsets = [0, 64], sizes = [8, 32], strides = [1, 1]} : vector<8x128xf32> to vector<8x32xf32>
    %99 = math.tanh %98 : vector<8x32xf32>
    %100 = vector.extract_strided_slice %85 {offsets = [0, 96], sizes = [8, 32], strides = [1, 1]} : vector<8x128xf32> to vector<8x32xf32>
    %101 = arith.negf %100 : vector<8x32xf32>
    %102 = math.exp %101 : vector<8x32xf32>
    %cst_34 = arith.constant 1.000000e+00 : f32
    %103 = vector.broadcast %cst_34 : f32 to vector<8x32xf32>
    %104 = arith.addf %103, %102 : vector<8x32xf32>
    %105 = arith.divf %103, %104 : vector<8x32xf32>
    %106 = arith.mulf %97, %75 : vector<8x32xf32>
    %107 = arith.mulf %91, %99 : vector<8x32xf32>
    %108 = arith.addf %106, %107 : vector<8x32xf32>
    %109 = math.tanh %108 : vector<8x32xf32>
    %110 = arith.mulf %105, %109 : vector<8x32xf32>
    %111 = arith.index_cast %81 : i32 to index
    %c0_35 = arith.constant 0 : index
    %112 = vector.load %arg13[%111, %c0_35] : memref<64x32xf32, #tpu.memory_space<vmem>>, vector<8x32xf32>
    tpu.vector_store %arg13[%111, %c0_35], %110 {strides = array<i32>} : memref<64x32xf32, #tpu.memory_space<vmem>>, vector<8x32xf32>,
    %c3_i32 = arith.constant 3 : i32
    %c8_i32_36 = arith.constant 8 : i32
    %113 = arith.muli %c3_i32, %c8_i32_36 : i32
    %114 = tpu.assume_multiple %113, 8 : i32
    %115 = arith.index_cast %114 : i32 to index
    %c0_37 = arith.constant 0 : index
    %116 = vector.load %arg12[%115, %c0_37] : memref<64x128xf32, #tpu.memory_space<vmem>>, vector<8x128xf32>
    %cst_38 = arith.constant dense<0.000000e+00> : vector<8x128xf32>
    %117 = tpu.matmul %110, %11, %cst_38 {dimension_numbers = #tpu.dot_dimension_numbers<[1], [0], [0], [1], [0, 0, 1, 1], [], []>} : vector<8x32xf32>, vector<32x128xf32>, vector<8x128xf32> -> vector<8x128xf32>
    %118 = arith.addf %116, %117 : vector<8x128xf32>
    %119 = vector.extract_strided_slice %118 {offsets = [0, 0], sizes = [8, 32], strides = [1, 1]} : vector<8x128xf32> to vector<8x32xf32>
    %120 = arith.negf %119 : vector<8x32xf32>
    %121 = math.exp %120 : vector<8x32xf32>
    %cst_39 = arith.constant 1.000000e+00 : f32
    %122 = vector.broadcast %cst_39 : f32 to vector<8x32xf32>
    %123 = arith.addf %122, %121 : vector<8x32xf32>
    %124 = arith.divf %122, %123 : vector<8x32xf32>
    %125 = vector.extract_strided_slice %118 {offsets = [0, 32], sizes = [8, 32], strides = [1, 1]} : vector<8x128xf32> to vector<8x32xf32>
    %126 = arith.negf %125 : vector<8x32xf32>
    %127 = math.exp %126 : vector<8x32xf32>
    %cst_40 = arith.constant 1.000000e+00 : f32
    %128 = vector.broadcast %cst_40 : f32 to vector<8x32xf32>
    %129 = arith.addf %128, %127 : vector<8x32xf32>
    %130 = arith.divf %128, %129 : vector<8x32xf32>
    %131 = vector.extract_strided_slice %118 {offsets = [0, 64], sizes = [8, 32], strides = [1, 1]} : vector<8x128xf32> to vector<8x32xf32>
    %132 = math.tanh %131 : vector<8x32xf32>
    %133 = vector.extract_strided_slice %118 {offsets = [0, 96], sizes = [8, 32], strides = [1, 1]} : vector<8x128xf32> to vector<8x32xf32>
    %134 = arith.negf %133 : vector<8x32xf32>
    %135 = math.exp %134 : vector<8x32xf32>
    %cst_41 = arith.constant 1.000000e+00 : f32
    %136 = vector.broadcast %cst_41 : f32 to vector<8x32xf32>
    %137 = arith.addf %136, %135 : vector<8x32xf32>
    %138 = arith.divf %136, %137 : vector<8x32xf32>
    %139 = arith.mulf %130, %108 : vector<8x32xf32>
    %140 = arith.mulf %124, %132 : vector<8x32xf32>
    %141 = arith.addf %139, %140 : vector<8x32xf32>
    %142 = math.tanh %141 : vector<8x32xf32>
    %143 = arith.mulf %138, %142 : vector<8x32xf32>
    %144 = arith.index_cast %114 : i32 to index
    %c0_42 = arith.constant 0 : index
    %145 = vector.load %arg13[%144, %c0_42] : memref<64x32xf32, #tpu.memory_space<vmem>>, vector<8x32xf32>
    tpu.vector_store %arg13[%144, %c0_42], %143 {strides = array<i32>} : memref<64x32xf32, #tpu.memory_space<vmem>>, vector<8x32xf32>,
    %c4_i32 = arith.constant 4 : i32
    %c8_i32_43 = arith.constant 8 : i32
    %146 = arith.muli %c4_i32, %c8_i32_43 : i32
    %147 = tpu.assume_multiple %146, 8 : i32
    %148 = arith.index_cast %147 : i32 to index
    %c0_44 = arith.constant 0 : index
    %149 = vector.load %arg12[%148, %c0_44] : memref<64x128xf32, #tpu.memory_space<vmem>>, vector<8x128xf32>
    %cst_45 = arith.constant dense<0.000000e+00> : vector<8x128xf32>
    %150 = tpu.matmul %143, %11, %cst_45 {dimension_numbers = #tpu.dot_dimension_numbers<[1], [0], [0], [1], [0, 0, 1, 1], [], []>} : vector<8x32xf32>, vector<32x128xf32>, vector<8x128xf32> -> vector<8x128xf32>
    %151 = arith.addf %149, %150 : vector<8x128xf32>
    %152 = vector.extract_strided_slice %151 {offsets = [0, 0], sizes = [8, 32], strides = [1, 1]} : vector<8x128xf32> to vector<8x32xf32>
    %153 = arith.negf %152 : vector<8x32xf32>
    %154 = math.exp %153 : vector<8x32xf32>
    %cst_46 = arith.constant 1.000000e+00 : f32
    %155 = vector.broadcast %cst_46 : f32 to vector<8x32xf32>
    %156 = arith.addf %155, %154 : vector<8x32xf32>
    %157 = arith.divf %155, %156 : vector<8x32xf32>
    %158 = vector.extract_strided_slice %151 {offsets = [0, 32], sizes = [8, 32], strides = [1, 1]} : vector<8x128xf32> to vector<8x32xf32>
    %159 = arith.negf %158 : vector<8x32xf32>
    %160 = math.exp %159 : vector<8x32xf32>
    %cst_47 = arith.constant 1.000000e+00 : f32
    %161 = vector.broadcast %cst_47 : f32 to vector<8x32xf32>
    %162 = arith.addf %161, %160 : vector<8x32xf32>
    %163 = arith.divf %161, %162 : vector<8x32xf32>
    %164 = vector.extract_strided_slice %151 {offsets = [0, 64], sizes = [8, 32], strides = [1, 1]} : vector<8x128xf32> to vector<8x32xf32>
    %165 = math.tanh %164 : vector<8x32xf32>
    %166 = vector.extract_strided_slice %151 {offsets = [0, 96], sizes = [8, 32], strides = [1, 1]} : vector<8x128xf32> to vector<8x32xf32>
    %167 = arith.negf %166 : vector<8x32xf32>
    %168 = math.exp %167 : vector<8x32xf32>
    %cst_48 = arith.constant 1.000000e+00 : f32
    %169 = vector.broadcast %cst_48 : f32 to vector<8x32xf32>
    %170 = arith.addf %169, %168 : vector<8x32xf32>
    %171 = arith.divf %169, %170 : vector<8x32xf32>
    %172 = arith.mulf %163, %141 : vector<8x32xf32>
    %173 = arith.mulf %157, %165 : vector<8x32xf32>
    %174 = arith.addf %172, %173 : vector<8x32xf32>
    %175 = math.tanh %174 : vector<8x32xf32>
    %176 = arith.mulf %171, %175 : vector<8x32xf32>
    %177 = arith.index_cast %147 : i32 to index
    %c0_49 = arith.constant 0 : index
    %178 = vector.load %arg13[%177, %c0_49] : memref<64x32xf32, #tpu.memory_space<vmem>>, vector<8x32xf32>
    tpu.vector_store %arg13[%177, %c0_49], %176 {strides = array<i32>} : memref<64x32xf32, #tpu.memory_space<vmem>>, vector<8x32xf32>,
    %c5_i32 = arith.constant 5 : i32
    %c8_i32_50 = arith.constant 8 : i32
    %179 = arith.muli %c5_i32, %c8_i32_50 : i32
    %180 = tpu.assume_multiple %179, 8 : i32
    %181 = arith.index_cast %180 : i32 to index
    %c0_51 = arith.constant 0 : index
    %182 = vector.load %arg12[%181, %c0_51] : memref<64x128xf32, #tpu.memory_space<vmem>>, vector<8x128xf32>
    %cst_52 = arith.constant dense<0.000000e+00> : vector<8x128xf32>
    %183 = tpu.matmul %176, %11, %cst_52 {dimension_numbers = #tpu.dot_dimension_numbers<[1], [0], [0], [1], [0, 0, 1, 1], [], []>} : vector<8x32xf32>, vector<32x128xf32>, vector<8x128xf32> -> vector<8x128xf32>
    %184 = arith.addf %182, %183 : vector<8x128xf32>
    %185 = vector.extract_strided_slice %184 {offsets = [0, 0], sizes = [8, 32], strides = [1, 1]} : vector<8x128xf32> to vector<8x32xf32>
    %186 = arith.negf %185 : vector<8x32xf32>
    %187 = math.exp %186 : vector<8x32xf32>
    %cst_53 = arith.constant 1.000000e+00 : f32
    %188 = vector.broadcast %cst_53 : f32 to vector<8x32xf32>
    %189 = arith.addf %188, %187 : vector<8x32xf32>
    %190 = arith.divf %188, %189 : vector<8x32xf32>
    %191 = vector.extract_strided_slice %184 {offsets = [0, 32], sizes = [8, 32], strides = [1, 1]} : vector<8x128xf32> to vector<8x32xf32>
    %192 = arith.negf %191 : vector<8x32xf32>
    %193 = math.exp %192 : vector<8x32xf32>
    %cst_54 = arith.constant 1.000000e+00 : f32
    %194 = vector.broadcast %cst_54 : f32 to vector<8x32xf32>
    %195 = arith.addf %194, %193 : vector<8x32xf32>
    %196 = arith.divf %194, %195 : vector<8x32xf32>
    %197 = vector.extract_strided_slice %184 {offsets = [0, 64], sizes = [8, 32], strides = [1, 1]} : vector<8x128xf32> to vector<8x32xf32>
    %198 = math.tanh %197 : vector<8x32xf32>
    %199 = vector.extract_strided_slice %184 {offsets = [0, 96], sizes = [8, 32], strides = [1, 1]} : vector<8x128xf32> to vector<8x32xf32>
    %200 = arith.negf %199 : vector<8x32xf32>
    %201 = math.exp %200 : vector<8x32xf32>
    %cst_55 = arith.constant 1.000000e+00 : f32
    %202 = vector.broadcast %cst_55 : f32 to vector<8x32xf32>
    %203 = arith.addf %202, %201 : vector<8x32xf32>
    %204 = arith.divf %202, %203 : vector<8x32xf32>
    %205 = arith.mulf %196, %174 : vector<8x32xf32>
    %206 = arith.mulf %190, %198 : vector<8x32xf32>
    %207 = arith.addf %205, %206 : vector<8x32xf32>
    %208 = math.tanh %207 : vector<8x32xf32>
    %209 = arith.mulf %204, %208 : vector<8x32xf32>
    %210 = arith.index_cast %180 : i32 to index
    %c0_56 = arith.constant 0 : index
    %211 = vector.load %arg13[%210, %c0_56] : memref<64x32xf32, #tpu.memory_space<vmem>>, vector<8x32xf32>
    tpu.vector_store %arg13[%210, %c0_56], %209 {strides = array<i32>} : memref<64x32xf32, #tpu.memory_space<vmem>>, vector<8x32xf32>,
    %c6_i32 = arith.constant 6 : i32
    %c8_i32_57 = arith.constant 8 : i32
    %212 = arith.muli %c6_i32, %c8_i32_57 : i32
    %213 = tpu.assume_multiple %212, 8 : i32
    %214 = arith.index_cast %213 : i32 to index
    %c0_58 = arith.constant 0 : index
    %215 = vector.load %arg12[%214, %c0_58] : memref<64x128xf32, #tpu.memory_space<vmem>>, vector<8x128xf32>
    %cst_59 = arith.constant dense<0.000000e+00> : vector<8x128xf32>
    %216 = tpu.matmul %209, %11, %cst_59 {dimension_numbers = #tpu.dot_dimension_numbers<[1], [0], [0], [1], [0, 0, 1, 1], [], []>} : vector<8x32xf32>, vector<32x128xf32>, vector<8x128xf32> -> vector<8x128xf32>
    %217 = arith.addf %215, %216 : vector<8x128xf32>
    %218 = vector.extract_strided_slice %217 {offsets = [0, 0], sizes = [8, 32], strides = [1, 1]} : vector<8x128xf32> to vector<8x32xf32>
    %219 = arith.negf %218 : vector<8x32xf32>
    %220 = math.exp %219 : vector<8x32xf32>
    %cst_60 = arith.constant 1.000000e+00 : f32
    %221 = vector.broadcast %cst_60 : f32 to vector<8x32xf32>
    %222 = arith.addf %221, %220 : vector<8x32xf32>
    %223 = arith.divf %221, %222 : vector<8x32xf32>
    %224 = vector.extract_strided_slice %217 {offsets = [0, 32], sizes = [8, 32], strides = [1, 1]} : vector<8x128xf32> to vector<8x32xf32>
    %225 = arith.negf %224 : vector<8x32xf32>
    %226 = math.exp %225 : vector<8x32xf32>
    %cst_61 = arith.constant 1.000000e+00 : f32
    %227 = vector.broadcast %cst_61 : f32 to vector<8x32xf32>
    %228 = arith.addf %227, %226 : vector<8x32xf32>
    %229 = arith.divf %227, %228 : vector<8x32xf32>
    %230 = vector.extract_strided_slice %217 {offsets = [0, 64], sizes = [8, 32], strides = [1, 1]} : vector<8x128xf32> to vector<8x32xf32>
    %231 = math.tanh %230 : vector<8x32xf32>
    %232 = vector.extract_strided_slice %217 {offsets = [0, 96], sizes = [8, 32], strides = [1, 1]} : vector<8x128xf32> to vector<8x32xf32>
    %233 = arith.negf %232 : vector<8x32xf32>
    %234 = math.exp %233 : vector<8x32xf32>
    %cst_62 = arith.constant 1.000000e+00 : f32
    %235 = vector.broadcast %cst_62 : f32 to vector<8x32xf32>
    %236 = arith.addf %235, %234 : vector<8x32xf32>
    %237 = arith.divf %235, %236 : vector<8x32xf32>
    %238 = arith.mulf %229, %207 : vector<8x32xf32>
    %239 = arith.mulf %223, %231 : vector<8x32xf32>
    %240 = arith.addf %238, %239 : vector<8x32xf32>
    %241 = math.tanh %240 : vector<8x32xf32>
    %242 = arith.mulf %237, %241 : vector<8x32xf32>
    %243 = arith.index_cast %213 : i32 to index
    %c0_63 = arith.constant 0 : index
    %244 = vector.load %arg13[%243, %c0_63] : memref<64x32xf32, #tpu.memory_space<vmem>>, vector<8x32xf32>
    tpu.vector_store %arg13[%243, %c0_63], %242 {strides = array<i32>} : memref<64x32xf32, #tpu.memory_space<vmem>>, vector<8x32xf32>,
    %c7_i32 = arith.constant 7 : i32
    %c8_i32_64 = arith.constant 8 : i32
    %245 = arith.muli %c7_i32, %c8_i32_64 : i32
    %246 = tpu.assume_multiple %245, 8 : i32
    %247 = arith.index_cast %246 : i32 to index
    %c0_65 = arith.constant 0 : index
    %248 = vector.load %arg12[%247, %c0_65] : memref<64x128xf32, #tpu.memory_space<vmem>>, vector<8x128xf32>
    %cst_66 = arith.constant dense<0.000000e+00> : vector<8x128xf32>
    %249 = tpu.matmul %242, %11, %cst_66 {dimension_numbers = #tpu.dot_dimension_numbers<[1], [0], [0], [1], [0, 0, 1, 1], [], []>} : vector<8x32xf32>, vector<32x128xf32>, vector<8x128xf32> -> vector<8x128xf32>
    %250 = arith.addf %248, %249 : vector<8x128xf32>
    %251 = vector.extract_strided_slice %250 {offsets = [0, 0], sizes = [8, 32], strides = [1, 1]} : vector<8x128xf32> to vector<8x32xf32>
    %252 = arith.negf %251 : vector<8x32xf32>
    %253 = math.exp %252 : vector<8x32xf32>
    %cst_67 = arith.constant 1.000000e+00 : f32
    %254 = vector.broadcast %cst_67 : f32 to vector<8x32xf32>
    %255 = arith.addf %254, %253 : vector<8x32xf32>
    %256 = arith.divf %254, %255 : vector<8x32xf32>
    %257 = vector.extract_strided_slice %250 {offsets = [0, 32], sizes = [8, 32], strides = [1, 1]} : vector<8x128xf32> to vector<8x32xf32>
    %258 = arith.negf %257 : vector<8x32xf32>
    %259 = math.exp %258 : vector<8x32xf32>
    %cst_68 = arith.constant 1.000000e+00 : f32
    %260 = vector.broadcast %cst_68 : f32 to vector<8x32xf32>
    %261 = arith.addf %260, %259 : vector<8x32xf32>
    %262 = arith.divf %260, %261 : vector<8x32xf32>
    %263 = vector.extract_strided_slice %250 {offsets = [0, 64], sizes = [8, 32], strides = [1, 1]} : vector<8x128xf32> to vector<8x32xf32>
    %264 = math.tanh %263 : vector<8x32xf32>
    %265 = vector.extract_strided_slice %250 {offsets = [0, 96], sizes = [8, 32], strides = [1, 1]} : vector<8x128xf32> to vector<8x32xf32>
    %266 = arith.negf %265 : vector<8x32xf32>
    %267 = math.exp %266 : vector<8x32xf32>
    %cst_69 = arith.constant 1.000000e+00 : f32
    %268 = vector.broadcast %cst_69 : f32 to vector<8x32xf32>
    %269 = arith.addf %268, %267 : vector<8x32xf32>
    %270 = arith.divf %268, %269 : vector<8x32xf32>
    %271 = arith.mulf %262, %240 : vector<8x32xf32>
    %272 = arith.mulf %256, %264 : vector<8x32xf32>
    %273 = arith.addf %271, %272 : vector<8x32xf32>
    %274 = math.tanh %273 : vector<8x32xf32>
    %275 = arith.mulf %270, %274 : vector<8x32xf32>
    %276 = arith.index_cast %246 : i32 to index
    %c0_70 = arith.constant 0 : index
    %277 = vector.load %arg13[%276, %c0_70] : memref<64x32xf32, #tpu.memory_space<vmem>>, vector<8x32xf32>
    tpu.vector_store %arg13[%276, %c0_70], %275 {strides = array<i32>} : memref<64x32xf32, #tpu.memory_space<vmem>>, vector<8x32xf32>,
    %c8_i32_71 = arith.constant 8 : i32
    %c0_72 = arith.constant 0 : index
    %c0_73 = arith.constant 0 : index
    %278 = vector.load %arg14[%c0_72, %c0_73] : memref<8x32xf32, #tpu.memory_space<vmem>>, vector<8x32xf32>
    tpu.vector_store %arg14[%c0_72, %c0_73], %275 {strides = array<i32>} : memref<8x32xf32, #tpu.memory_space<vmem>>, vector<8x32xf32>,
    %c0_74 = arith.constant 0 : index
    %c0_75 = arith.constant 0 : index
    %279 = vector.load %arg15[%c0_74, %c0_75] : memref<8x32xf32, #tpu.memory_space<vmem>>, vector<8x32xf32>
    tpu.vector_store %arg15[%c0_74, %c0_75], %273 {strides = array<i32>} : memref<8x32xf32, #tpu.memory_space<vmem>>, vector<8x32xf32>,
    %c0_76 = arith.constant 0 : index
    %c0_77 = arith.constant 0 : index
    %280 = vector.load %arg13[%c0_76, %c0_77] : memref<64x32xf32, #tpu.memory_space<vmem>>, vector<64x32xf32>
    %281 = arith.truncf %280 : vector<64x32xf32> to vector<64x32xbf16>
    %c0_78 = arith.constant 0 : index
    %c0_79 = arith.constant 0 : index
    %282 = vector.load %arg6[%c0_78, %c0_79] : memref<32x128xbf16, #tpu.memory_space<vmem>>, vector<32x128xbf16>
    %cst_80 = arith.constant dense<0.000000e+00> : vector<64x128xf32>
    %283 = tpu.matmul %281, %282, %cst_80 {dimension_numbers = #tpu.dot_dimension_numbers<[1], [0], [0], [1], [0, 0, 1, 1], [], []>} : vector<64x32xbf16>, vector<32x128xbf16>, vector<64x128xf32> -> vector<64x128xf32>
    %c0_81 = arith.constant 0 : index
    %c0_82 = arith.constant 0 : index
    %284 = vector.load %arg8[%c0_81, %c0_82] : memref<1x128xf32, #tpu.memory_space<vmem>>, vector<1x128xf32>
    %285 = vector.broadcast %284 : vector<1x128xf32> to vector<64x128xf32>
    %286 = arith.addf %283, %285 : vector<64x128xf32>
    %c0_83 = arith.constant 0 : index
    %c0_84 = arith.constant 0 : index
    %287 = vector.load %arg12[%c0_83, %c0_84] : memref<64x128xf32, #tpu.memory_space<vmem>>, vector<64x128xf32>
    tpu.vector_store %arg12[%c0_83, %c0_84], %286 {strides = array<i32>} : memref<64x128xf32, #tpu.memory_space<vmem>>, vector<64x128xf32>,
    %c0_85 = arith.constant 0 : index
    %c0_86 = arith.constant 0 : index
    %288 = vector.load %arg7[%c0_85, %c0_86] : memref<32x128xf32, #tpu.memory_space<vmem>>, vector<32x128xf32>
    %c0_87 = arith.constant 0 : index
    %c0_88 = arith.constant 0 : index
    %289 = vector.load %arg16[%c0_87, %c0_88] : memref<8x32xf32, #tpu.memory_space<vmem>>, vector<8x32xf32>
    %c0_89 = arith.constant 0 : index
    %c0_90 = arith.constant 0 : index
    %290 = vector.load %arg17[%c0_89, %c0_90] : memref<8x32xf32, #tpu.memory_space<vmem>>, vector<8x32xf32>
    %c0_i32_91 = arith.constant 0 : i32
    %c8_i32_92 = arith.constant 8 : i32
    %291 = arith.muli %c0_i32_91, %c8_i32_92 : i32
    %292 = tpu.assume_multiple %291, 8 : i32
    %293 = arith.index_cast %292 : i32 to index
    %c0_93 = arith.constant 0 : index
    %294 = vector.load %arg12[%293, %c0_93] : memref<64x128xf32, #tpu.memory_space<vmem>>, vector<8x128xf32>
    %cst_94 = arith.constant dense<0.000000e+00> : vector<8x128xf32>
    %295 = tpu.matmul %289, %288, %cst_94 {dimension_numbers = #tpu.dot_dimension_numbers<[1], [0], [0], [1], [0, 0, 1, 1], [], []>} : vector<8x32xf32>, vector<32x128xf32>, vector<8x128xf32> -> vector<8x128xf32>
    %296 = arith.addf %294, %295 : vector<8x128xf32>
    %297 = vector.extract_strided_slice %296 {offsets = [0, 0], sizes = [8, 32], strides = [1, 1]} : vector<8x128xf32> to vector<8x32xf32>
    %298 = arith.negf %297 : vector<8x32xf32>
    %299 = math.exp %298 : vector<8x32xf32>
    %cst_95 = arith.constant 1.000000e+00 : f32
    %300 = vector.broadcast %cst_95 : f32 to vector<8x32xf32>
    %301 = arith.addf %300, %299 : vector<8x32xf32>
    %302 = arith.divf %300, %301 : vector<8x32xf32>
    %303 = vector.extract_strided_slice %296 {offsets = [0, 32], sizes = [8, 32], strides = [1, 1]} : vector<8x128xf32> to vector<8x32xf32>
    %304 = arith.negf %303 : vector<8x32xf32>
    %305 = math.exp %304 : vector<8x32xf32>
    %cst_96 = arith.constant 1.000000e+00 : f32
    %306 = vector.broadcast %cst_96 : f32 to vector<8x32xf32>
    %307 = arith.addf %306, %305 : vector<8x32xf32>
    %308 = arith.divf %306, %307 : vector<8x32xf32>
    %309 = vector.extract_strided_slice %296 {offsets = [0, 64], sizes = [8, 32], strides = [1, 1]} : vector<8x128xf32> to vector<8x32xf32>
    %310 = math.tanh %309 : vector<8x32xf32>
    %311 = vector.extract_strided_slice %296 {offsets = [0, 96], sizes = [8, 32], strides = [1, 1]} : vector<8x128xf32> to vector<8x32xf32>
    %312 = arith.negf %311 : vector<8x32xf32>
    %313 = math.exp %312 : vector<8x32xf32>
    %cst_97 = arith.constant 1.000000e+00 : f32
    %314 = vector.broadcast %cst_97 : f32 to vector<8x32xf32>
    %315 = arith.addf %314, %313 : vector<8x32xf32>
    %316 = arith.divf %314, %315 : vector<8x32xf32>
    %317 = arith.mulf %308, %290 : vector<8x32xf32>
    %318 = arith.mulf %302, %310 : vector<8x32xf32>
    %319 = arith.addf %317, %318 : vector<8x32xf32>
    %320 = math.tanh %319 : vector<8x32xf32>
    %321 = arith.mulf %316, %320 : vector<8x32xf32>
    %322 = arith.index_cast %292 : i32 to index
    %c0_98 = arith.constant 0 : index
    %323 = vector.load %arg13[%322, %c0_98] : memref<64x32xf32, #tpu.memory_space<vmem>>, vector<8x32xf32>
    tpu.vector_store %arg13[%322, %c0_98], %321 {strides = array<i32>} : memref<64x32xf32, #tpu.memory_space<vmem>>, vector<8x32xf32>,
    %c1_i32_99 = arith.constant 1 : i32
    %c8_i32_100 = arith.constant 8 : i32
    %324 = arith.muli %c1_i32_99, %c8_i32_100 : i32
    %325 = tpu.assume_multiple %324, 8 : i32
    %326 = arith.index_cast %325 : i32 to index
    %c0_101 = arith.constant 0 : index
    %327 = vector.load %arg12[%326, %c0_101] : memref<64x128xf32, #tpu.memory_space<vmem>>, vector<8x128xf32>
    %cst_102 = arith.constant dense<0.000000e+00> : vector<8x128xf32>
    %328 = tpu.matmul %321, %288, %cst_102 {dimension_numbers = #tpu.dot_dimension_numbers<[1], [0], [0], [1], [0, 0, 1, 1], [], []>} : vector<8x32xf32>, vector<32x128xf32>, vector<8x128xf32> -> vector<8x128xf32>
    %329 = arith.addf %327, %328 : vector<8x128xf32>
    %330 = vector.extract_strided_slice %329 {offsets = [0, 0], sizes = [8, 32], strides = [1, 1]} : vector<8x128xf32> to vector<8x32xf32>
    %331 = arith.negf %330 : vector<8x32xf32>
    %332 = math.exp %331 : vector<8x32xf32>
    %cst_103 = arith.constant 1.000000e+00 : f32
    %333 = vector.broadcast %cst_103 : f32 to vector<8x32xf32>
    %334 = arith.addf %333, %332 : vector<8x32xf32>
    %335 = arith.divf %333, %334 : vector<8x32xf32>
    %336 = vector.extract_strided_slice %329 {offsets = [0, 32], sizes = [8, 32], strides = [1, 1]} : vector<8x128xf32> to vector<8x32xf32>
    %337 = arith.negf %336 : vector<8x32xf32>
    %338 = math.exp %337 : vector<8x32xf32>
    %cst_104 = arith.constant 1.000000e+00 : f32
    %339 = vector.broadcast %cst_104 : f32 to vector<8x32xf32>
    %340 = arith.addf %339, %338 : vector<8x32xf32>
    %341 = arith.divf %339, %340 : vector<8x32xf32>
    %342 = vector.extract_strided_slice %329 {offsets = [0, 64], sizes = [8, 32], strides = [1, 1]} : vector<8x128xf32> to vector<8x32xf32>
    %343 = math.tanh %342 : vector<8x32xf32>
    %344 = vector.extract_strided_slice %329 {offsets = [0, 96], sizes = [8, 32], strides = [1, 1]} : vector<8x128xf32> to vector<8x32xf32>
    %345 = arith.negf %344 : vector<8x32xf32>
    %346 = math.exp %345 : vector<8x32xf32>
    %cst_105 = arith.constant 1.000000e+00 : f32
    %347 = vector.broadcast %cst_105 : f32 to vector<8x32xf32>
    %348 = arith.addf %347, %346 : vector<8x32xf32>
    %349 = arith.divf %347, %348 : vector<8x32xf32>
    %350 = arith.mulf %341, %319 : vector<8x32xf32>
    %351 = arith.mulf %335, %343 : vector<8x32xf32>
    %352 = arith.addf %350, %351 : vector<8x32xf32>
    %353 = math.tanh %352 : vector<8x32xf32>
    %354 = arith.mulf %349, %353 : vector<8x32xf32>
    %355 = arith.index_cast %325 : i32 to index
    %c0_106 = arith.constant 0 : index
    %356 = vector.load %arg13[%355, %c0_106] : memref<64x32xf32, #tpu.memory_space<vmem>>, vector<8x32xf32>
    tpu.vector_store %arg13[%355, %c0_106], %354 {strides = array<i32>} : memref<64x32xf32, #tpu.memory_space<vmem>>, vector<8x32xf32>,
    %c2_i32_107 = arith.constant 2 : i32
    %c8_i32_108 = arith.constant 8 : i32
    %357 = arith.muli %c2_i32_107, %c8_i32_108 : i32
    %358 = tpu.assume_multiple %357, 8 : i32
    %359 = arith.index_cast %358 : i32 to index
    %c0_109 = arith.constant 0 : index
    %360 = vector.load %arg12[%359, %c0_109] : memref<64x128xf32, #tpu.memory_space<vmem>>, vector<8x128xf32>
    %cst_110 = arith.constant dense<0.000000e+00> : vector<8x128xf32>
    %361 = tpu.matmul %354, %288, %cst_110 {dimension_numbers = #tpu.dot_dimension_numbers<[1], [0], [0], [1], [0, 0, 1, 1], [], []>} : vector<8x32xf32>, vector<32x128xf32>, vector<8x128xf32> -> vector<8x128xf32>
    %362 = arith.addf %360, %361 : vector<8x128xf32>
    %363 = vector.extract_strided_slice %362 {offsets = [0, 0], sizes = [8, 32], strides = [1, 1]} : vector<8x128xf32> to vector<8x32xf32>
    %364 = arith.negf %363 : vector<8x32xf32>
    %365 = math.exp %364 : vector<8x32xf32>
    %cst_111 = arith.constant 1.000000e+00 : f32
    %366 = vector.broadcast %cst_111 : f32 to vector<8x32xf32>
    %367 = arith.addf %366, %365 : vector<8x32xf32>
    %368 = arith.divf %366, %367 : vector<8x32xf32>
    %369 = vector.extract_strided_slice %362 {offsets = [0, 32], sizes = [8, 32], strides = [1, 1]} : vector<8x128xf32> to vector<8x32xf32>
    %370 = arith.negf %369 : vector<8x32xf32>
    %371 = math.exp %370 : vector<8x32xf32>
    %cst_112 = arith.constant 1.000000e+00 : f32
    %372 = vector.broadcast %cst_112 : f32 to vector<8x32xf32>
    %373 = arith.addf %372, %371 : vector<8x32xf32>
    %374 = arith.divf %372, %373 : vector<8x32xf32>
    %375 = vector.extract_strided_slice %362 {offsets = [0, 64], sizes = [8, 32], strides = [1, 1]} : vector<8x128xf32> to vector<8x32xf32>
    %376 = math.tanh %375 : vector<8x32xf32>
    %377 = vector.extract_strided_slice %362 {offsets = [0, 96], sizes = [8, 32], strides = [1, 1]} : vector<8x128xf32> to vector<8x32xf32>
    %378 = arith.negf %377 : vector<8x32xf32>
    %379 = math.exp %378 : vector<8x32xf32>
    %cst_113 = arith.constant 1.000000e+00 : f32
    %380 = vector.broadcast %cst_113 : f32 to vector<8x32xf32>
    %381 = arith.addf %380, %379 : vector<8x32xf32>
    %382 = arith.divf %380, %381 : vector<8x32xf32>
    %383 = arith.mulf %374, %352 : vector<8x32xf32>
    %384 = arith.mulf %368, %376 : vector<8x32xf32>
    %385 = arith.addf %383, %384 : vector<8x32xf32>
    %386 = math.tanh %385 : vector<8x32xf32>
    %387 = arith.mulf %382, %386 : vector<8x32xf32>
    %388 = arith.index_cast %358 : i32 to index
    %c0_114 = arith.constant 0 : index
    %389 = vector.load %arg13[%388, %c0_114] : memref<64x32xf32, #tpu.memory_space<vmem>>, vector<8x32xf32>
    tpu.vector_store %arg13[%388, %c0_114], %387 {strides = array<i32>} : memref<64x32xf32, #tpu.memory_space<vmem>>, vector<8x32xf32>,
    %c3_i32_115 = arith.constant 3 : i32
    %c8_i32_116 = arith.constant 8 : i32
    %390 = arith.muli %c3_i32_115, %c8_i32_116 : i32
    %391 = tpu.assume_multiple %390, 8 : i32
    %392 = arith.index_cast %391 : i32 to index
    %c0_117 = arith.constant 0 : index
    %393 = vector.load %arg12[%392, %c0_117] : memref<64x128xf32, #tpu.memory_space<vmem>>, vector<8x128xf32>
    %cst_118 = arith.constant dense<0.000000e+00> : vector<8x128xf32>
    %394 = tpu.matmul %387, %288, %cst_118 {dimension_numbers = #tpu.dot_dimension_numbers<[1], [0], [0], [1], [0, 0, 1, 1], [], []>} : vector<8x32xf32>, vector<32x128xf32>, vector<8x128xf32> -> vector<8x128xf32>
    %395 = arith.addf %393, %394 : vector<8x128xf32>
    %396 = vector.extract_strided_slice %395 {offsets = [0, 0], sizes = [8, 32], strides = [1, 1]} : vector<8x128xf32> to vector<8x32xf32>
    %397 = arith.negf %396 : vector<8x32xf32>
    %398 = math.exp %397 : vector<8x32xf32>
    %cst_119 = arith.constant 1.000000e+00 : f32
    %399 = vector.broadcast %cst_119 : f32 to vector<8x32xf32>
    %400 = arith.addf %399, %398 : vector<8x32xf32>
    %401 = arith.divf %399, %400 : vector<8x32xf32>
    %402 = vector.extract_strided_slice %395 {offsets = [0, 32], sizes = [8, 32], strides = [1, 1]} : vector<8x128xf32> to vector<8x32xf32>
    %403 = arith.negf %402 : vector<8x32xf32>
    %404 = math.exp %403 : vector<8x32xf32>
    %cst_120 = arith.constant 1.000000e+00 : f32
    %405 = vector.broadcast %cst_120 : f32 to vector<8x32xf32>
    %406 = arith.addf %405, %404 : vector<8x32xf32>
    %407 = arith.divf %405, %406 : vector<8x32xf32>
    %408 = vector.extract_strided_slice %395 {offsets = [0, 64], sizes = [8, 32], strides = [1, 1]} : vector<8x128xf32> to vector<8x32xf32>
    %409 = math.tanh %408 : vector<8x32xf32>
    %410 = vector.extract_strided_slice %395 {offsets = [0, 96], sizes = [8, 32], strides = [1, 1]} : vector<8x128xf32> to vector<8x32xf32>
    %411 = arith.negf %410 : vector<8x32xf32>
    %412 = math.exp %411 : vector<8x32xf32>
    %cst_121 = arith.constant 1.000000e+00 : f32
    %413 = vector.broadcast %cst_121 : f32 to vector<8x32xf32>
    %414 = arith.addf %413, %412 : vector<8x32xf32>
    %415 = arith.divf %413, %414 : vector<8x32xf32>
    %416 = arith.mulf %407, %385 : vector<8x32xf32>
    %417 = arith.mulf %401, %409 : vector<8x32xf32>
    %418 = arith.addf %416, %417 : vector<8x32xf32>
    %419 = math.tanh %418 : vector<8x32xf32>
    %420 = arith.mulf %415, %419 : vector<8x32xf32>
    %421 = arith.index_cast %391 : i32 to index
    %c0_122 = arith.constant 0 : index
    %422 = vector.load %arg13[%421, %c0_122] : memref<64x32xf32, #tpu.memory_space<vmem>>, vector<8x32xf32>
    tpu.vector_store %arg13[%421, %c0_122], %420 {strides = array<i32>} : memref<64x32xf32, #tpu.memory_space<vmem>>, vector<8x32xf32>,
    %c4_i32_123 = arith.constant 4 : i32
    %c8_i32_124 = arith.constant 8 : i32
    %423 = arith.muli %c4_i32_123, %c8_i32_124 : i32
    %424 = tpu.assume_multiple %423, 8 : i32
    %425 = arith.index_cast %424 : i32 to index
    %c0_125 = arith.constant 0 : index
    %426 = vector.load %arg12[%425, %c0_125] : memref<64x128xf32, #tpu.memory_space<vmem>>, vector<8x128xf32>
    %cst_126 = arith.constant dense<0.000000e+00> : vector<8x128xf32>
    %427 = tpu.matmul %420, %288, %cst_126 {dimension_numbers = #tpu.dot_dimension_numbers<[1], [0], [0], [1], [0, 0, 1, 1], [], []>} : vector<8x32xf32>, vector<32x128xf32>, vector<8x128xf32> -> vector<8x128xf32>
    %428 = arith.addf %426, %427 : vector<8x128xf32>
    %429 = vector.extract_strided_slice %428 {offsets = [0, 0], sizes = [8, 32], strides = [1, 1]} : vector<8x128xf32> to vector<8x32xf32>
    %430 = arith.negf %429 : vector<8x32xf32>
    %431 = math.exp %430 : vector<8x32xf32>
    %cst_127 = arith.constant 1.000000e+00 : f32
    %432 = vector.broadcast %cst_127 : f32 to vector<8x32xf32>
    %433 = arith.addf %432, %431 : vector<8x32xf32>
    %434 = arith.divf %432, %433 : vector<8x32xf32>
    %435 = vector.extract_strided_slice %428 {offsets = [0, 32], sizes = [8, 32], strides = [1, 1]} : vector<8x128xf32> to vector<8x32xf32>
    %436 = arith.negf %435 : vector<8x32xf32>
    %437 = math.exp %436 : vector<8x32xf32>
    %cst_128 = arith.constant 1.000000e+00 : f32
    %438 = vector.broadcast %cst_128 : f32 to vector<8x32xf32>
    %439 = arith.addf %438, %437 : vector<8x32xf32>
    %440 = arith.divf %438, %439 : vector<8x32xf32>
    %441 = vector.extract_strided_slice %428 {offsets = [0, 64], sizes = [8, 32], strides = [1, 1]} : vector<8x128xf32> to vector<8x32xf32>
    %442 = math.tanh %441 : vector<8x32xf32>
    %443 = vector.extract_strided_slice %428 {offsets = [0, 96], sizes = [8, 32], strides = [1, 1]} : vector<8x128xf32> to vector<8x32xf32>
    %444 = arith.negf %443 : vector<8x32xf32>
    %445 = math.exp %444 : vector<8x32xf32>
    %cst_129 = arith.constant 1.000000e+00 : f32
    %446 = vector.broadcast %cst_129 : f32 to vector<8x32xf32>
    %447 = arith.addf %446, %445 : vector<8x32xf32>
    %448 = arith.divf %446, %447 : vector<8x32xf32>
    %449 = arith.mulf %440, %418 : vector<8x32xf32>
    %450 = arith.mulf %434, %442 : vector<8x32xf32>
    %451 = arith.addf %449, %450 : vector<8x32xf32>
    %452 = math.tanh %451 : vector<8x32xf32>
    %453 = arith.mulf %448, %452 : vector<8x32xf32>
    %454 = arith.index_cast %424 : i32 to index
    %c0_130 = arith.constant 0 : index
    %455 = vector.load %arg13[%454, %c0_130] : memref<64x32xf32, #tpu.memory_space<vmem>>, vector<8x32xf32>
    tpu.vector_store %arg13[%454, %c0_130], %453 {strides = array<i32>} : memref<64x32xf32, #tpu.memory_space<vmem>>, vector<8x32xf32>,
    %c5_i32_131 = arith.constant 5 : i32
    %c8_i32_132 = arith.constant 8 : i32
    %456 = arith.muli %c5_i32_131, %c8_i32_132 : i32
    %457 = tpu.assume_multiple %456, 8 : i32
    %458 = arith.index_cast %457 : i32 to index
    %c0_133 = arith.constant 0 : index
    %459 = vector.load %arg12[%458, %c0_133] : memref<64x128xf32, #tpu.memory_space<vmem>>, vector<8x128xf32>
    %cst_134 = arith.constant dense<0.000000e+00> : vector<8x128xf32>
    %460 = tpu.matmul %453, %288, %cst_134 {dimension_numbers = #tpu.dot_dimension_numbers<[1], [0], [0], [1], [0, 0, 1, 1], [], []>} : vector<8x32xf32>, vector<32x128xf32>, vector<8x128xf32> -> vector<8x128xf32>
    %461 = arith.addf %459, %460 : vector<8x128xf32>
    %462 = vector.extract_strided_slice %461 {offsets = [0, 0], sizes = [8, 32], strides = [1, 1]} : vector<8x128xf32> to vector<8x32xf32>
    %463 = arith.negf %462 : vector<8x32xf32>
    %464 = math.exp %463 : vector<8x32xf32>
    %cst_135 = arith.constant 1.000000e+00 : f32
    %465 = vector.broadcast %cst_135 : f32 to vector<8x32xf32>
    %466 = arith.addf %465, %464 : vector<8x32xf32>
    %467 = arith.divf %465, %466 : vector<8x32xf32>
    %468 = vector.extract_strided_slice %461 {offsets = [0, 32], sizes = [8, 32], strides = [1, 1]} : vector<8x128xf32> to vector<8x32xf32>
    %469 = arith.negf %468 : vector<8x32xf32>
    %470 = math.exp %469 : vector<8x32xf32>
    %cst_136 = arith.constant 1.000000e+00 : f32
    %471 = vector.broadcast %cst_136 : f32 to vector<8x32xf32>
    %472 = arith.addf %471, %470 : vector<8x32xf32>
    %473 = arith.divf %471, %472 : vector<8x32xf32>
    %474 = vector.extract_strided_slice %461 {offsets = [0, 64], sizes = [8, 32], strides = [1, 1]} : vector<8x128xf32> to vector<8x32xf32>
    %475 = math.tanh %474 : vector<8x32xf32>
    %476 = vector.extract_strided_slice %461 {offsets = [0, 96], sizes = [8, 32], strides = [1, 1]} : vector<8x128xf32> to vector<8x32xf32>
    %477 = arith.negf %476 : vector<8x32xf32>
    %478 = math.exp %477 : vector<8x32xf32>
    %cst_137 = arith.constant 1.000000e+00 : f32
    %479 = vector.broadcast %cst_137 : f32 to vector<8x32xf32>
    %480 = arith.addf %479, %478 : vector<8x32xf32>
    %481 = arith.divf %479, %480 : vector<8x32xf32>
    %482 = arith.mulf %473, %451 : vector<8x32xf32>
    %483 = arith.mulf %467, %475 : vector<8x32xf32>
    %484 = arith.addf %482, %483 : vector<8x32xf32>
    %485 = math.tanh %484 : vector<8x32xf32>
    %486 = arith.mulf %481, %485 : vector<8x32xf32>
    %487 = arith.index_cast %457 : i32 to index
    %c0_138 = arith.constant 0 : index
    %488 = vector.load %arg13[%487, %c0_138] : memref<64x32xf32, #tpu.memory_space<vmem>>, vector<8x32xf32>
    tpu.vector_store %arg13[%487, %c0_138], %486 {strides = array<i32>} : memref<64x32xf32, #tpu.memory_space<vmem>>, vector<8x32xf32>,
    %c6_i32_139 = arith.constant 6 : i32
    %c8_i32_140 = arith.constant 8 : i32
    %489 = arith.muli %c6_i32_139, %c8_i32_140 : i32
    %490 = tpu.assume_multiple %489, 8 : i32
    %491 = arith.index_cast %490 : i32 to index
    %c0_141 = arith.constant 0 : index
    %492 = vector.load %arg12[%491, %c0_141] : memref<64x128xf32, #tpu.memory_space<vmem>>, vector<8x128xf32>
    %cst_142 = arith.constant dense<0.000000e+00> : vector<8x128xf32>
    %493 = tpu.matmul %486, %288, %cst_142 {dimension_numbers = #tpu.dot_dimension_numbers<[1], [0], [0], [1], [0, 0, 1, 1], [], []>} : vector<8x32xf32>, vector<32x128xf32>, vector<8x128xf32> -> vector<8x128xf32>
    %494 = arith.addf %492, %493 : vector<8x128xf32>
    %495 = vector.extract_strided_slice %494 {offsets = [0, 0], sizes = [8, 32], strides = [1, 1]} : vector<8x128xf32> to vector<8x32xf32>
    %496 = arith.negf %495 : vector<8x32xf32>
    %497 = math.exp %496 : vector<8x32xf32>
    %cst_143 = arith.constant 1.000000e+00 : f32
    %498 = vector.broadcast %cst_143 : f32 to vector<8x32xf32>
    %499 = arith.addf %498, %497 : vector<8x32xf32>
    %500 = arith.divf %498, %499 : vector<8x32xf32>
    %501 = vector.extract_strided_slice %494 {offsets = [0, 32], sizes = [8, 32], strides = [1, 1]} : vector<8x128xf32> to vector<8x32xf32>
    %502 = arith.negf %501 : vector<8x32xf32>
    %503 = math.exp %502 : vector<8x32xf32>
    %cst_144 = arith.constant 1.000000e+00 : f32
    %504 = vector.broadcast %cst_144 : f32 to vector<8x32xf32>
    %505 = arith.addf %504, %503 : vector<8x32xf32>
    %506 = arith.divf %504, %505 : vector<8x32xf32>
    %507 = vector.extract_strided_slice %494 {offsets = [0, 64], sizes = [8, 32], strides = [1, 1]} : vector<8x128xf32> to vector<8x32xf32>
    %508 = math.tanh %507 : vector<8x32xf32>
    %509 = vector.extract_strided_slice %494 {offsets = [0, 96], sizes = [8, 32], strides = [1, 1]} : vector<8x128xf32> to vector<8x32xf32>
    %510 = arith.negf %509 : vector<8x32xf32>
    %511 = math.exp %510 : vector<8x32xf32>
    %cst_145 = arith.constant 1.000000e+00 : f32
    %512 = vector.broadcast %cst_145 : f32 to vector<8x32xf32>
    %513 = arith.addf %512, %511 : vector<8x32xf32>
    %514 = arith.divf %512, %513 : vector<8x32xf32>
    %515 = arith.mulf %506, %484 : vector<8x32xf32>
    %516 = arith.mulf %500, %508 : vector<8x32xf32>
    %517 = arith.addf %515, %516 : vector<8x32xf32>
    %518 = math.tanh %517 : vector<8x32xf32>
    %519 = arith.mulf %514, %518 : vector<8x32xf32>
    %520 = arith.index_cast %490 : i32 to index
    %c0_146 = arith.constant 0 : index
    %521 = vector.load %arg13[%520, %c0_146] : memref<64x32xf32, #tpu.memory_space<vmem>>, vector<8x32xf32>
    tpu.vector_store %arg13[%520, %c0_146], %519 {strides = array<i32>} : memref<64x32xf32, #tpu.memory_space<vmem>>, vector<8x32xf32>,
    %c7_i32_147 = arith.constant 7 : i32
    %c8_i32_148 = arith.constant 8 : i32
    %522 = arith.muli %c7_i32_147, %c8_i32_148 : i32
    %523 = tpu.assume_multiple %522, 8 : i32
    %524 = arith.index_cast %523 : i32 to index
    %c0_149 = arith.constant 0 : index
    %525 = vector.load %arg12[%524, %c0_149] : memref<64x128xf32, #tpu.memory_space<vmem>>, vector<8x128xf32>
    %cst_150 = arith.constant dense<0.000000e+00> : vector<8x128xf32>
    %526 = tpu.matmul %519, %288, %cst_150 {dimension_numbers = #tpu.dot_dimension_numbers<[1], [0], [0], [1], [0, 0, 1, 1], [], []>} : vector<8x32xf32>, vector<32x128xf32>, vector<8x128xf32> -> vector<8x128xf32>
    %527 = arith.addf %525, %526 : vector<8x128xf32>
    %528 = vector.extract_strided_slice %527 {offsets = [0, 0], sizes = [8, 32], strides = [1, 1]} : vector<8x128xf32> to vector<8x32xf32>
    %529 = arith.negf %528 : vector<8x32xf32>
    %530 = math.exp %529 : vector<8x32xf32>
    %cst_151 = arith.constant 1.000000e+00 : f32
    %531 = vector.broadcast %cst_151 : f32 to vector<8x32xf32>
    %532 = arith.addf %531, %530 : vector<8x32xf32>
    %533 = arith.divf %531, %532 : vector<8x32xf32>
    %534 = vector.extract_strided_slice %527 {offsets = [0, 32], sizes = [8, 32], strides = [1, 1]} : vector<8x128xf32> to vector<8x32xf32>
    %535 = arith.negf %534 : vector<8x32xf32>
    %536 = math.exp %535 : vector<8x32xf32>
    %cst_152 = arith.constant 1.000000e+00 : f32
    %537 = vector.broadcast %cst_152 : f32 to vector<8x32xf32>
    %538 = arith.addf %537, %536 : vector<8x32xf32>
    %539 = arith.divf %537, %538 : vector<8x32xf32>
    %540 = vector.extract_strided_slice %527 {offsets = [0, 64], sizes = [8, 32], strides = [1, 1]} : vector<8x128xf32> to vector<8x32xf32>
    %541 = math.tanh %540 : vector<8x32xf32>
    %542 = vector.extract_strided_slice %527 {offsets = [0, 96], sizes = [8, 32], strides = [1, 1]} : vector<8x128xf32> to vector<8x32xf32>
    %543 = arith.negf %542 : vector<8x32xf32>
    %544 = math.exp %543 : vector<8x32xf32>
    %cst_153 = arith.constant 1.000000e+00 : f32
    %545 = vector.broadcast %cst_153 : f32 to vector<8x32xf32>
    %546 = arith.addf %545, %544 : vector<8x32xf32>
    %547 = arith.divf %545, %546 : vector<8x32xf32>
    %548 = arith.mulf %539, %517 : vector<8x32xf32>
    %549 = arith.mulf %533, %541 : vector<8x32xf32>
    %550 = arith.addf %548, %549 : vector<8x32xf32>
    %551 = math.tanh %550 : vector<8x32xf32>
    %552 = arith.mulf %547, %551 : vector<8x32xf32>
    %553 = arith.index_cast %523 : i32 to index
    %c0_154 = arith.constant 0 : index
    %554 = vector.load %arg13[%553, %c0_154] : memref<64x32xf32, #tpu.memory_space<vmem>>, vector<8x32xf32>
    tpu.vector_store %arg13[%553, %c0_154], %552 {strides = array<i32>} : memref<64x32xf32, #tpu.memory_space<vmem>>, vector<8x32xf32>,
    %c8_i32_155 = arith.constant 8 : i32
    %c0_156 = arith.constant 0 : index
    %c0_157 = arith.constant 0 : index
    %555 = vector.load %arg16[%c0_156, %c0_157] : memref<8x32xf32, #tpu.memory_space<vmem>>, vector<8x32xf32>
    tpu.vector_store %arg16[%c0_156, %c0_157], %552 {strides = array<i32>} : memref<8x32xf32, #tpu.memory_space<vmem>>, vector<8x32xf32>,
    %c0_158 = arith.constant 0 : index
    %c0_159 = arith.constant 0 : index
    %556 = vector.load %arg17[%c0_158, %c0_159] : memref<8x32xf32, #tpu.memory_space<vmem>>, vector<8x32xf32>
    tpu.vector_store %arg17[%c0_158, %c0_159], %550 {strides = array<i32>} : memref<8x32xf32, #tpu.memory_space<vmem>>, vector<8x32xf32>,
    %c0_160 = arith.constant 0 : index
    %c0_161 = arith.constant 0 : index
    %557 = vector.load %arg13[%c0_160, %c0_161] : memref<64x32xf32, #tpu.memory_space<vmem>>, vector<64x32xf32>
    %558 = arith.truncf %557 : vector<64x32xf32> to vector<64x32xbf16>
    %c0_162 = arith.constant 0 : index
    %c0_163 = arith.constant 0 : index
    %559 = vector.load %arg9[%c0_162, %c0_163] : memref<32x128xbf16, #tpu.memory_space<vmem>>, vector<32x128xbf16>
    %cst_164 = arith.constant dense<0.000000e+00> : vector<64x128xf32>
    %560 = tpu.matmul %558, %559, %cst_164 {dimension_numbers = #tpu.dot_dimension_numbers<[1], [0], [0], [1], [0, 0, 1, 1], [], []>} : vector<64x32xbf16>, vector<32x128xbf16>, vector<64x128xf32> -> vector<64x128xf32>
    %c0_165 = arith.constant 0 : index
    %c0_166 = arith.constant 0 : index
    %561 = vector.load %arg10[%c0_165, %c0_166] : memref<1x128xf32, #tpu.memory_space<vmem>>, vector<1x128xf32>
    %562 = vector.broadcast %561 : vector<1x128xf32> to vector<64x128xf32>
    %563 = arith.addf %560, %562 : vector<64x128xf32>
    %c0_167 = arith.constant 0 : index
    %c0_168 = arith.constant 0 : index
    %c0_169 = arith.constant 0 : index
    %564 = vector.load %arg11[%c0_167, %c0_168, %c0_169] : memref<1x64x128xf32, #tpu.memory_space<vmem>>, vector<1x64x128xf32>
    %565 = vector.shape_cast %564 : vector<1x64x128xf32> to vector<64x128xf32>
    %566 = vector.shape_cast %563 : vector<64x128xf32> to vector<1x64x128xf32>
    tpu.vector_store %arg11[%c0_167, %c0_168, %c0_169], %566 {strides = array<i32>} : memref<1x64x128xf32, #tpu.memory_space<vmem>>, vector<1x64x128xf32>,
    return
  }
  func.func @transform_0(%arg0: i32, %arg1: i32) -> (i32, i32, i32) {
    %c0_i32 = arith.constant 0 : i32
    %c0_i32_0 = arith.constant 0 : i32
    return %arg0, %arg1, %c0_i32 : i32, i32, i32
  }
  func.func @transform_1(%arg0: i32, %arg1: i32) -> (i32, i32) {
    %c0_i32 = arith.constant 0 : i32
    %c0_i32_0 = arith.constant 0 : i32
    %c0_i32_1 = arith.constant 0 : i32
    return %c0_i32, %c0_i32_0 : i32, i32
  }
  func.func @transform_2(%arg0: i32, %arg1: i32) -> (i32, i32) {
    %c0_i32 = arith.constant 0 : i32
    %c0_i32_0 = arith.constant 0 : i32
    %c0_i32_1 = arith.constant 0 : i32
    return %c0_i32, %c0_i32_0 : i32, i32
  }
  func.func @transform_3(%arg0: i32, %arg1: i32) -> (i32, i32) {
    %c0_i32 = arith.constant 0 : i32
    %c0_i32_0 = arith.constant 0 : i32
    %c0_i32_1 = arith.constant 0 : i32
    return %c0_i32, %c0_i32_0 : i32, i32
  }
  func.func @transform_4(%arg0: i32, %arg1: i32) -> (i32, i32) {
    %c0_i32 = arith.constant 0 : i32
    %c0_i32_0 = arith.constant 0 : i32
    %c0_i32_1 = arith.constant 0 : i32
    return %c0_i32, %c0_i32_0 : i32, i32
  }
  func.func @transform_5(%arg0: i32, %arg1: i32) -> (i32, i32) {
    %c0_i32 = arith.constant 0 : i32
    %c0_i32_0 = arith.constant 0 : i32
    %c0_i32_1 = arith.constant 0 : i32
    return %c0_i32, %c0_i32_0 : i32, i32
  }
  func.func @transform_6(%arg0: i32, %arg1: i32) -> (i32, i32) {
    %c0_i32 = arith.constant 0 : i32
    %c0_i32_0 = arith.constant 0 : i32
    %c0_i32_1 = arith.constant 0 : i32
    return %c0_i32, %c0_i32_0 : i32, i32
  }
  func.func @transform_7(%arg0: i32, %arg1: i32) -> (i32, i32) {
    %c0_i32 = arith.constant 0 : i32
    %c0_i32_0 = arith.constant 0 : i32
    %c0_i32_1 = arith.constant 0 : i32
    return %c0_i32, %c0_i32_0 : i32, i32
  }
  func.func @transform_8(%arg0: i32, %arg1: i32) -> (i32, i32) {
    %c0_i32 = arith.constant 0 : i32
    %c0_i32_0 = arith.constant 0 : i32
    %c0_i32_1 = arith.constant 0 : i32
    return %c0_i32, %c0_i32_0 : i32, i32
  }
  func.func @transform_9(%arg0: i32, %arg1: i32) -> (i32, i32, i32) {
    %c0_i32 = arith.constant 0 : i32
    %c0_i32_0 = arith.constant 0 : i32
    return %arg0, %arg1, %c0_i32 : i32, i32, i32
  }
}

</mosaic_0001>

<llo_original>
// kernel: tpu_custom_call.1
$region0: #{tpu_custom_call.1}
  #allocation0 [shape = 'u32[]', space=smem, size = 0x4, offset = 0x4, fixed_abs, tag = 'smem constant byte address 0x4 - core index']
  #allocation1 [shape = 'u32[144,128]{1,0:T(1,128)}', space=vmem, size = 0x12000, scoped, tag = 'internal scratch']
  #allocation2 [shape = 'f32[64,128]{1,0:T(8,128)}', space=vmem, size = 0x8000, scoped, tag = 'scratch operand']
  #allocation3 [shape = 'f32[64,32]{1,0:T(8,128)}', space=vmem, size = 0x8000, scoped, tag = 'scratch operand']
  #allocation4 [shape = 'f32[8,32]{1,0:T(8,128)}', space=vmem, size = 0x1000, scoped, tag = 'scratch operand']
  #allocation5 [shape = 'f32[8,32]{1,0:T(8,128)}', space=vmem, size = 0x1000, scoped, tag = 'scratch operand']
  #allocation6 [shape = 'f32[8,32]{1,0:T(8,128)}', space=vmem, size = 0x1000, scoped, tag = 'scratch operand']
  #allocation7 [shape = 'f32[8,32]{1,0:T(8,128)}', space=vmem, size = 0x1000, scoped, tag = 'scratch operand']
  %s0 = inlined_call_operand.vmem [shape: bf16[1,64,16], index: 0, kind: input, shape index: {}]
  %s1 = inlined_call_operand.hbm [shape: bf16[16,128], index: 1, kind: input, shape index: {}]
  %s2 = inlined_call_operand.vmem [shape: f32[32,128], index: 2, kind: input, shape index: {}]
  %s3 = inlined_call_operand.vmem [shape: f32[1,128], index: 3, kind: input, shape index: {}]
  %s4 = inlined_call_operand.hbm [shape: bf16[32,128], index: 4, kind: input, shape index: {}]
  %s5 = inlined_call_operand.hbm [shape: f32[32,128], index: 5, kind: input, shape index: {}]
  %s6 = inlined_call_operand.vmem [shape: f32[1,128], index: 6, kind: input, shape index: {}]
  %s7 = inlined_call_operand.vmem [shape: bf16[32,128], index: 7, kind: input, shape index: {}]
  %s8 = inlined_call_operand.vmem [shape: f32[1,128], index: 8, kind: input, shape index: {}]
  %s9 = inlined_call_operand.hbm [shape: f32[1,64,128], index: 9, kind: output, shape index: {}]
  %s10 = sld [smem:[#allocation0]]
  $region62: #{tpu_custom_call.1} parent=0
    _
  %s12 = ssub.s32 1, %s10
  %s13 = scalar_select 0, %s12, %s10
  $region1: #{tpu_custom_call.1} parent=0
    #allocation8 [shape = 'u8[4096]{0}', space=vmem, size = 0x1000, scoped, tag = 'input window, operand 1, single buffered']
    #allocation9 [shape = 's32[1]{0}', space=sflag, size = 0x4, scoped, tag = 'scoped memory for tpu_custom_call.1']
    #allocation10 [shape = 's32[1]{0}', space=sflag, size = 0x4, scoped, tag = 'scoped memory for tpu_custom_call.1']
    #allocation11 [shape = 'u8[8192]{0}', space=vmem, size = 0x2000, scoped, tag = 'input window, operand 4, single buffered']
    #allocation12 [shape = 's32[1]{0}', space=sflag, size = 0x4, scoped, tag = 'scoped memory for tpu_custom_call.1']
    #allocation13 [shape = 'u8[16384]{0}', space=vmem, size = 0x4000, scoped, tag = 'input window, operand 5, single buffered']
    #allocation14 [shape = 'u8[32768]{0}', space=vmem, size = 0x8000, scoped, tag = 'output window, operand 0, single buffered']
    %14 = vsyncpa [#allocation9], 0
    %15 = vsyncpa [#allocation12], 0
    %16 = vsyncpa [#allocation10], 0
    // Predicated region
    $region2: #{tpu_custom_call.1} parent=1 // pred_check
      _
    $region3: #{tpu_custom_call.1} parent=1 // pred_check_branch
      %18 = sbr.rel (0) target = $region5
    $region4: #{tpu_custom_call.1} parent=1 // pred_region
      _
    $region5: #{tpu_custom_call.1} parent=1 // pred_fallthru
      _
    // Predicated region
    $region6: #{tpu_custom_call.1} parent=1 // pred_check
      _
    $region7: #{tpu_custom_call.1} parent=1 // pred_check_branch
      %20 = sbr.rel (0) target = $region9
    $region8: #{tpu_custom_call.1} parent=1 // pred_region
      %s22 = ssub.s32 128, 128
      %23 = vsyncadd [#allocation9], %s22
      %s24 = sshll.u32 [#allocation8], 4
      %s25 = int_to_ptr.vmem [resolvable:$true] %s24
      %30 = dma.hbm_to_vmem [thread:$0]  %s1, 128, %s25, [#allocation9], 64, 64, 4
    $region9: #{tpu_custom_call.1} parent=1 // pred_fallthru
      _
    // Predicated region
    $region10: #{tpu_custom_call.1} parent=1 // pred_check
      _
    $region11: #{tpu_custom_call.1} parent=1 // pred_check_branch
      %32 = sbr.rel (0) target = $region13
    $region12: #{tpu_custom_call.1} parent=1 // pred_region
      _
    $region13: #{tpu_custom_call.1} parent=1 // pred_fallthru
      _
    // Predicated region
    $region14: #{tpu_custom_call.1} parent=1 // pred_check
      _
    $region15: #{tpu_custom_call.1} parent=1 // pred_check_branch
      %34 = sbr.rel (0) target = $region17
    $region16: #{tpu_custom_call.1} parent=1 // pred_region
      _
    $region17: #{tpu_custom_call.1} parent=1 // pred_fallthru
      _
    // Predicated region
    $region18: #{tpu_custom_call.1} parent=1 // pred_check
      _
    $region19: #{tpu_custom_call.1} parent=1 // pred_check_branch
      %36 = sbr.rel (0) target = $region21
    $region20: #{tpu_custom_call.1} parent=1 // pred_region
      %s38 = ssub.s32 256, 256
      %39 = vsyncadd [#allocation12], %s38
      %s40 = sshll.u32 [#allocation11], 4
      %s41 = int_to_ptr.vmem [resolvable:$true] %s40
      %46 = dma.hbm_to_vmem [thread:$0]  %s4, 256, %s41, [#allocation12], 64, 64, 4
    $region21: #{tpu_custom_call.1} parent=1 // pred_fallthru
      _
    // Predicated region
    $region22: #{tpu_custom_call.1} parent=1 // pred_check
      _
    $region23: #{tpu_custom_call.1} parent=1 // pred_check_branch
      %48 = sbr.rel (0) target = $region25
    $region24: #{tpu_custom_call.1} parent=1 // pred_region
      %s50 = ssub.s32 512, 512
      %51 = vsyncadd [#allocation12], %s50
      %s52 = sshll.u32 [#allocation13], 4
      %s53 = int_to_ptr.vmem [resolvable:$true] %s52
      %58 = dma.hbm_to_vmem [thread:$0]  %s5, 512, %s53, [#allocation12], 128, 128, 8
    $region25: #{tpu_custom_call.1} parent=1 // pred_fallthru
      _
    // Predicated region
    $region26: #{tpu_custom_call.1} parent=1 // pred_check
      _
    $region27: #{tpu_custom_call.1} parent=1 // pred_check_branch
      %60 = sbr.rel (0) target = $region29
    $region28: #{tpu_custom_call.1} parent=1 // pred_region
      _
    $region29: #{tpu_custom_call.1} parent=1 // pred_fallthru
      _
    // Predicated region
    $region30: #{tpu_custom_call.1} parent=1 // pred_check
      _
    $region31: #{tpu_custom_call.1} parent=1 // pred_check_branch
      %62 = sbr.rel (0) target = $region33
    $region32: #{tpu_custom_call.1} parent=1 // pred_region
      _
    $region33: #{tpu_custom_call.1} parent=1 // pred_fallthru
      _
    // Predicated region
    $region34: #{tpu_custom_call.1} parent=1 // pred_check
      _
    $region35: #{tpu_custom_call.1} parent=1 // pred_check_branch
      %64 = sbr.rel (0) target = $region37
    $region36: #{tpu_custom_call.1} parent=1 // pred_region
      _
    $region37: #{tpu_custom_call.1} parent=1 // pred_fallthru
      _
    // Predicated region
    $region38: #{tpu_custom_call.1} parent=1 // pred_check
      _
    $region39: #{tpu_custom_call.1} parent=1 // pred_check_branch
      %66 = sbr.rel (0) target = $region41
    $region40: #{tpu_custom_call.1} parent=1 // pred_region
      %67 = dma.done [#allocation9], 128
    $region41: #{tpu_custom_call.1} parent=1 // pred_fallthru
      _
    // Predicated region
    $region42: #{tpu_custom_call.1} parent=1 // pred_check
      _
    $region43: #{tpu_custom_call.1} parent=1 // pred_check_branch
      %69 = sbr.rel (0) target = $region45
    $region44: #{tpu_custom_call.1} parent=1 // pred_region
      %70 = dma.done [#allocation12], 256
    $region45: #{tpu_custom_call.1} parent=1 // pred_fallthru
      _
    // Predicated region
    $region46: #{tpu_custom_call.1} parent=1 // pred_check
      _
    $region47: #{tpu_custom_call.1} parent=1 // pred_check_branch
      %72 = sbr.rel (0) target = $region49
    $region48: #{tpu_custom_call.1} parent=1 // pred_region
      %73 = dma.done [#allocation12], 512
    $region49: #{tpu_custom_call.1} parent=1 // pred_fallthru
      _
    %p75 = scmp.eq.s32.totalorder 0, 0
    // Predicated region
    $region50: #{tpu_custom_call.1} parent=1 // pred_check
      %p76 = pneg %p75
    $region51: #{tpu_custom_call.1} parent=1 // pred_check_branch
      %78 = sbr.rel (%p76) target = $region53
    $region52: #{tpu_custom_call.1} parent=1 // pred_region
      %vm79 = vcmask 261120
      %80 = vst.msk [vmem:[#allocation4] sm:$0xff] %vm79, 0.0
      %81 = vst.msk [vmem:[#allocation5] sm:$0xff] %vm79, 0.0
      %82 = vst.msk [vmem:[#allocation6] sm:$0xff] %vm79, 0.0
      %83 = vst.msk [vmem:[#allocation7] sm:$0xff] %vm79, 0.0
    $region53: #{tpu_custom_call.1} parent=1 // pred_fallthru
      _
    %v84 = vld [vmem:[%s0] sm:$0xf]
    %v85 = vld [vmem:[%s0 + $0x4] sm:$0xf]
    %v86 = vld [vmem:[%s0 + $0x8] sm:$0xf]
    %v87 = vld [vmem:[%s0 + $0xc] sm:$0xf]
    %v88 = vld [vmem:[%s0 + $0x10] sm:$0xf]
    %v89 = vld [vmem:[%s0 + $0x14] sm:$0xf]
    %v90 = vld [vmem:[%s0 + $0x18] sm:$0xf]
    %v91 = vld [vmem:[%s0 + $0x1c] sm:$0xf]
    %v92 = vld [vmem:[#allocation8] sm:$0xf]
    %v93 = vld [vmem:[#allocation8 + $0x4] sm:$0xf]
    %v94 = vld [vmem:[%s3] sm:$0x1]
    %v96 = vlaneseq
    %v97 = vshrl.u32 %v96, 7
    %v98 = vsub.s32 0, %v97
    %v99 = vrot.slane %v94, %v98
    %v109 = vunpack.c.l.b16 %v84
    %v110 = vunpack.c.l.b16 %v85
    %v111 = vunpack.c.l.b16 %v86
    %v112 = vunpack.c.l.b16 %v87
    %v113 = vunpack.c.l.b16 %v88
    %v114 = vunpack.c.l.b16 %v89
    %v115 = vunpack.c.l.b16 %v90
    %v116 = vunpack.c.l.b16 %v91
    %v117 = vpack.c.b16 %v110, %v109
    %v118 = vpack.c.b16 %v112, %v111
    %v119 = vpack.c.b16 %v114, %v113
    %v120 = vpack.c.b16 %v116, %v115
    %v123 = vunpack.c.l.b16 %v92
    %v124 = vunpack.c.l.b16 %v93
    %v125 = vpack.c.b16 %v124, %v123
    %vm127 = vcmask 130048
    %v129 = vsel %vm127, %v117, 0
    %v132 = vsel %vm127, %v118, 0
    %v135 = vsel %vm127, %v119, 0
    %v138 = vsel %vm127, %v120, 0
    %140 = vmatprep.subr.bf16.mxu0 0
    %141 = vmatpush1.bf16.msra.mxu0 0
    %142 = vmatprep.subr.bf16.mxu0 0
    %143 = vmatpush1.bf16.msra.mxu0 0
    %144 = vmatprep.subr.bf16.mxu0 0
    %145 = vmatpush1.bf16.msra.mxu0 0
    %146 = vmatprep.subr.bf16.mxu0 0
    %147 = vmatpush1.bf16.msra.mxu0 0
    %148 = vmatprep.subr.bf16.mxu0 0
    %149 = vmatpush1.bf16.msra.mxu0 0
    %150 = vmatprep.subr.bf16.mxu0 0
    %151 = vmatpush1.bf16.msra.mxu0 0
    %152 = vmatprep.subr.bf16.mxu0 0
    %153 = vmatpush1.bf16.msra.mxu0 0
    %154 = vmatprep.subr.bf16.mxu0 0
    %155 = vmatpush1.bf16.msra.mxu0 %v125
    %156 = vmatprep.subr.bf16.mxu0 0
    %157 = vmatpush2.bf16.msra.mxu0 0
    %158 = vmatprep.subr.bf16.mxu0 0
    %159 = vmatpush2.bf16.msra.mxu0 0
    %160 = vmatprep.subr.bf16.mxu0 0
    %161 = vmatpush2.bf16.msra.mxu0 0
    %162 = vmatprep.subr.bf16.mxu0 0
    %163 = vmatpush2.bf16.msra.mxu0 0
    %164 = vmatprep.subr.bf16.mxu0 0
    %165 = vmatpush2.bf16.msra.mxu0 0
    %166 = vmatprep.subr.bf16.mxu0 0
    %167 = vmatpush2.bf16.msra.mxu0 0
    %168 = vmatprep.subr.bf16.mxu0 0
    %169 = vmatpush2.bf16.msra.mxu0 0
    %170 = vmatprep.subr.bf16.mxu0 0
    %171 = vmatpush2.bf16.msra.mxu0 0
    %172 = vmatprep.mubr.bf16.mxu0 0
    %173 = vmatmul.mubr.bf16.gmra.mxu0 %v129
    %v174 = vpop.f32.mrf.mxu0
    %v175 = vadd.f32 %v99, %v174
    %v176 = vpop.f32.mrf.mxu0
    %v177 = vpop.f32.mrf.mxu0
    %v178 = vadd.f32 %v99, %v177
    %v179 = vpop.f32.mrf.mxu0
    %180 = vmatprep.mubr.bf16.mxu0 0
    %181 = vmatmul.mubr.bf16.gmra.mxu0 %v132
    %v182 = vpop.f32.mrf.mxu0
    %v183 = vadd.f32 %v99, %v182
    %v184 = vpop.f32.mrf.mxu0
    %v185 = vpop.f32.mrf.mxu0
    %v186 = vadd.f32 %v99, %v185
    %v187 = vpop.f32.mrf.mxu0
    %188 = vmatprep.mubr.bf16.mxu0 0
    %189 = vmatmul.mubr.bf16.gmra.mxu0 %v135
    %v190 = vpop.f32.mrf.mxu0
    %v191 = vadd.f32 %v99, %v190
    %v192 = vpop.f32.mrf.mxu0
    %v193 = vpop.f32.mrf.mxu0
    %v194 = vadd.f32 %v99, %v193
    %v195 = vpop.f32.mrf.mxu0
    %196 = vmatprep.mubr.bf16.mxu0 0
    %197 = vmatmul.mubr.bf16.gmra.mxu0 %v138
    %v198 = vpop.f32.mrf.mxu0
    %v199 = vadd.f32 %v99, %v198
    %v200 = vpop.f32.mrf.mxu0
    %v201 = vpop.f32.mrf.mxu0
    %v202 = vadd.f32 %v99, %v201
    %v203 = vpop.f32.mrf.mxu0
    %204 = vdwg.mxu0
    %205 = vst [vmem:[#allocation2] sm:$0xff] %v175
    %206 = vst [vmem:[#allocation2 + $0x8] sm:$0xff] %v178
    %207 = vst [vmem:[#allocation2 + $0x10] sm:$0xff] %v183
    %208 = vst [vmem:[#allocation2 + $0x18] sm:$0xff] %v186
    %209 = vst [vmem:[#allocation2 + $0x20] sm:$0xff] %v191
    %210 = vst [vmem:[#allocation2 + $0x28] sm:$0xff] %v194
    %211 = vst [vmem:[#allocation2 + $0x30] sm:$0xff] %v199
    %212 = vst [vmem:[#allocation2 + $0x38] sm:$0xff] %v202
    %v213 = vld [vmem:[%s2] sm:$0xff]
    %v214 = vld [vmem:[%s2 + $0x8] sm:$0xff]
    %v215 = vld [vmem:[%s2 + $0x10] sm:$0xff]
    %v216 = vld [vmem:[%s2 + $0x18] sm:$0xff]
    %v217 = vld [vmem:[#allocation4] sm:$0xff]
    %v218 = vld [vmem:[#allocation5] sm:$0xff]
    %v219 = vld [vmem:[#allocation2] sm:$0xff]
    %vm220 = vcmask 261120
    %v222 = vsel %vm220, %v217, 0
    %224 = vmatprep.subr.mxu0 0.0
    %225 = vmatpush1.msra.mxu0 0.0
    %226 = vmatprep.subr.mxu0 0.0
    %227 = vmatpush1.msra.mxu0 0.0
    %228 = vmatprep.subr.mxu0 0.0
    %229 = vmatpush1.msra.mxu0 0.0
    %230 = vmatprep.subr.mxu0 0.0
    %231 = vmatpush1.msra.mxu0 0.0
    %232 = vmatprep.subr.mxu0 0.0
    %233 = vmatpush1.msra.mxu0 0.0
    %234 = vmatprep.subr.mxu0 0.0
    %235 = vmatpush1.msra.mxu0 0.0
    %236 = vmatprep.subr.mxu0 0.0
    %237 = vmatpush1.msra.mxu0 0.0
    %238 = vmatprep.subr.mxu0 0.0
    %239 = vmatpush1.msra.mxu0 0.0
    %240 = vmatprep.subr.mxu0 0.0
    %241 = vmatpush1.msra.mxu0 0.0
    %242 = vmatprep.subr.mxu0 0.0
    %243 = vmatpush1.msra.mxu0 0.0
    %244 = vmatprep.subr.mxu0 0.0
    %245 = vmatpush1.msra.mxu0 0.0
    %246 = vmatprep.subr.mxu0 0.0
    %247 = vmatpush1.msra.mxu0 0.0
    %248 = vmatprep.subr.mxu0 0.0
    %249 = vmatpush1.msra.mxu0 %v216
    %250 = vmatprep.subr.mxu0 0.0
    %251 = vmatpush1.msra.mxu0 %v215
    %252 = vmatprep.subr.mxu0 0.0
    %253 = vmatpush1.msra.mxu0 %v214
    %254 = vmatprep.subr.mxu0 0.0
    %255 = vmatpush1.msra.mxu0 %v213
    %256 = vmatprep.subr.mxu0 0.0
    %257 = vmatpush2.msra.mxu0 0.0
    %258 = vmatprep.subr.mxu0 0.0
    %259 = vmatpush2.msra.mxu0 0.0
    %260 = vmatprep.subr.mxu0 0.0
    %261 = vmatpush2.msra.mxu0 0.0
    %262 = vmatprep.subr.mxu0 0.0
    %263 = vmatpush2.msra.mxu0 0.0
    %264 = vmatprep.subr.mxu0 0.0
    %265 = vmatpush2.msra.mxu0 0.0
    %266 = vmatprep.subr.mxu0 0.0
    %267 = vmatpush2.msra.mxu0 0.0
    %268 = vmatprep.subr.mxu0 0.0
    %269 = vmatpush2.msra.mxu0 0.0
    %270 = vmatprep.subr.mxu0 0.0
    %271 = vmatpush2.msra.mxu0 0.0
    %272 = vmatprep.subr.mxu0 0.0
    %273 = vmatpush2.msra.mxu0 0.0
    %274 = vmatprep.subr.mxu0 0.0
    %275 = vmatpush2.msra.mxu0 0.0
    %276 = vmatprep.subr.mxu0 0.0
    %277 = vmatpush2.msra.mxu0 0.0
    %278 = vmatprep.subr.mxu0 0.0
    %279 = vmatpush2.msra.mxu0 0.0
    %280 = vmatprep.subr.mxu0 0.0
    %281 = vmatpush2.msra.mxu0 0.0
    %282 = vmatprep.subr.mxu0 0.0
    %283 = vmatpush2.msra.mxu0 0.0
    %284 = vmatprep.subr.mxu0 0.0
    %285 = vmatpush2.msra.mxu0 0.0
    %286 = vmatprep.subr.mxu0 0.0
    %287 = vmatpush2.msra.mxu0 0.0
    %288 = vmatprep.mubr.f32.mxu0 0.0
    %289 = vmatmul.mubr.f32.gmra.mxu0 %v222
    %v290 = vpop.f32.mrf.mxu0
    %v291 = vadd.f32 0.0, %v290
    %v292 = vpop.f32.mrf.mxu0
    %293 = vdwg.mxu0
    %v294 = vadd.f32 %v219, %v291
    %v295 = vxor.u32 %v294, 2147483648
    %v296 = vmul.f32 %v295, 1.442695
    %v297 = vpow.pop %v296
    %v298 = vadd.f32 %v297, 1.0
    %v299 = vrcp.pop %v298
    %v300 = vmul.f32 1.0, %v299
    %v301 = vtanh.pop %v294
    %303 = vrot.lane.b32.xlu0 %v218, 32
    %v304 = vpop.permute.xlu0 %303
    %v306 = vmul.f32 %v300, %v304
    %308 = vrot.lane.b32.xlu0 %v301, 64
    %v309 = vpop.permute.xlu0 %308
    %v311 = vmul.f32 %v300, %v309
    %313 = vrot.lane.b32.xlu0 %v311, 32
    %v314 = vpop.permute.xlu0 %313
    %v316 = vadd.f32 %v306, %v314
    %v317 = vtanh.pop %v316
    %319 = vrot.lane.b32.xlu0 %v317, 64
    %v320 = vpop.permute.xlu0 %319
    %v322 = vmul.f32 %v300, %v320
    %324 = vrot.lane.b32.xlu0 %v322, 32
    %v325 = vpop.permute.xlu0 %324
    %327 = vst.msk [vmem:[#allocation3] sm:$0xff] %vm220, %v325
    %s328 = scalar_lea.vmem [#allocation2], 8
    %v329 = vld [vmem:[%s328] sm:$0xff]
    %v330 = vsel %vm220, %v325, 0
    %332 = vmatprep.subr.mxu0 0.0
    %333 = vmatpush1.msra.mxu0 0.0
    %334 = vmatprep.subr.mxu0 0.0
    %335 = vmatpush1.msra.mxu0 0.0
    %336 = vmatprep.subr.mxu0 0.0
    %337 = vmatpush1.msra.mxu0 0.0
    %338 = vmatprep.subr.mxu0 0.0
    %339 = vmatpush1.msra.mxu0 0.0
    %340 = vmatprep.subr.mxu0 0.0
    %341 = vmatpush1.msra.mxu0 0.0
    %342 = vmatprep.subr.mxu0 0.0
    %343 = vmatpush1.msra.mxu0 0.0
    %344 = vmatprep.subr.mxu0 0.0
    %345 = vmatpush1.msra.mxu0 0.0
    %346 = vmatprep.subr.mxu0 0.0
    %347 = vmatpush1.msra.mxu0 0.0
    %348 = vmatprep.subr.mxu0 0.0
    %349 = vmatpush1.msra.mxu0 0.0
    %350 = vmatprep.subr.mxu0 0.0
    %351 = vmatpush1.msra.mxu0 0.0
    %352 = vmatprep.subr.mxu0 0.0
    %353 = vmatpush1.msra.mxu0 0.0
    %354 = vmatprep.subr.mxu0 0.0
    %355 = vmatpush1.msra.mxu0 0.0
    %356 = vmatprep.subr.mxu0 0.0
    %357 = vmatpush1.msra.mxu0 %v216
    %358 = vmatprep.subr.mxu0 0.0
    %359 = vmatpush1.msra.mxu0 %v215
    %360 = vmatprep.subr.mxu0 0.0
    %361 = vmatpush1.msra.mxu0 %v214
    %362 = vmatprep.subr.mxu0 0.0
    %363 = vmatpush1.msra.mxu0 %v213
    %364 = vmatprep.subr.mxu0 0.0
    %365 = vmatpush2.msra.mxu0 0.0
    %366 = vmatprep.subr.mxu0 0.0
    %367 = vmatpush2.msra.mxu0 0.0
    %368 = vmatprep.subr.mxu0 0.0
    %369 = vmatpush2.msra.mxu0 0.0
    %370 = vmatprep.subr.mxu0 0.0
    %371 = vmatpush2.msra.mxu0 0.0
    %372 = vmatprep.subr.mxu0 0.0
    %373 = vmatpush2.msra.mxu0 0.0
    %374 = vmatprep.subr.mxu0 0.0
    %375 = vmatpush2.msra.mxu0 0.0
    %376 = vmatprep.subr.mxu0 0.0
    %377 = vmatpush2.msra.mxu0 0.0
    %378 = vmatprep.subr.mxu0 0.0
    %379 = vmatpush2.msra.mxu0 0.0
    %380 = vmatprep.subr.mxu0 0.0
    %381 = vmatpush2.msra.mxu0 0.0
    %382 = vmatprep.subr.mxu0 0.0
    %383 = vmatpush2.msra.mxu0 0.0
    %384 = vmatprep.subr.mxu0 0.0
    %385 = vmatpush2.msra.mxu0 0.0
    %386 = vmatprep.subr.mxu0 0.0
    %387 = vmatpush2.msra.mxu0 0.0
    %388 = vmatprep.subr.mxu0 0.0
    %389 = vmatpush2.msra.mxu0 0.0
    %390 = vmatprep.subr.mxu0 0.0
    %391 = vmatpush2.msra.mxu0 0.0
    %392 = vmatprep.subr.mxu0 0.0
    %393 = vmatpush2.msra.mxu0 0.0
    %394 = vmatprep.subr.mxu0 0.0
    %395 = vmatpush2.msra.mxu0 0.0
    %396 = vmatprep.mubr.f32.mxu0 0.0
    %397 = vmatmul.mubr.f32.gmra.mxu0 %v330
    %v398 = vpop.f32.mrf.mxu0
    %v399 = vadd.f32 0.0, %v398
    %v400 = vpop.f32.mrf.mxu0
    %401 = vdwg.mxu0
    %v402 = vadd.f32 %v329, %v399
    %v403 = vxor.u32 %v402, 2147483648
    %v404 = vmul.f32 %v403, 1.442695
    %v405 = vpow.pop %v404
    %v406 = vadd.f32 %v405, 1.0
    %v407 = vrcp.pop %v406
    %v408 = vmul.f32 1.0, %v407
    %v409 = vtanh.pop %v402
    %v410 = vmul.f32 %v408, %v316
    %412 = vrot.lane.b32.xlu0 %v409, 64
    %v413 = vpop.permute.xlu0 %412
    %v415 = vmul.f32 %v408, %v413
    %417 = vrot.lane.b32.xlu0 %v415, 32
    %v418 = vpop.permute.xlu0 %417
    %v420 = vadd.f32 %v410, %v418
    %v421 = vtanh.pop %v420
    %423 = vrot.lane.b32.xlu0 %v421, 64
    %v424 = vpop.permute.xlu0 %423
    %v426 = vmul.f32 %v408, %v424
    %428 = vrot.lane.b32.xlu0 %v426, 32
    %v429 = vpop.permute.xlu0 %428
    %s431 = scalar_lea.vmem [#allocation3], 8
    %432 = vst.msk [vmem:[%s431] sm:$0xff] %vm220, %v429
    %s433 = scalar_lea.vmem [#allocation2], 16
    %v434 = vld [vmem:[%s433] sm:$0xff]
    %v435 = vsel %vm220, %v429, 0
    %437 = vmatprep.subr.mxu0 0.0
    %438 = vmatpush1.msra.mxu0 0.0
    %439 = vmatprep.subr.mxu0 0.0
    %440 = vmatpush1.msra.mxu0 0.0
    %441 = vmatprep.subr.mxu0 0.0
    %442 = vmatpush1.msra.mxu0 0.0
    %443 = vmatprep.subr.mxu0 0.0
    %444 = vmatpush1.msra.mxu0 0.0
    %445 = vmatprep.subr.mxu0 0.0
    %446 = vmatpush1.msra.mxu0 0.0
    %447 = vmatprep.subr.mxu0 0.0
    %448 = vmatpush1.msra.mxu0 0.0
    %449 = vmatprep.subr.mxu0 0.0
    %450 = vmatpush1.msra.mxu0 0.0
    %451 = vmatprep.subr.mxu0 0.0
    %452 = vmatpush1.msra.mxu0 0.0
    %453 = vmatprep.subr.mxu0 0.0
    %454 = vmatpush1.msra.mxu0 0.0
    %455 = vmatprep.subr.mxu0 0.0
    %456 = vmatpush1.msra.mxu0 0.0
    %457 = vmatprep.subr.mxu0 0.0
    %458 = vmatpush1.msra.mxu0 0.0
    %459 = vmatprep.subr.mxu0 0.0
    %460 = vmatpush1.msra.mxu0 0.0
    %461 = vmatprep.subr.mxu0 0.0
    %462 = vmatpush1.msra.mxu0 %v216
    %463 = vmatprep.subr.mxu0 0.0
    %464 = vmatpush1.msra.mxu0 %v215
    %465 = vmatprep.subr.mxu0 0.0
    %466 = vmatpush1.msra.mxu0 %v214
    %467 = vmatprep.subr.mxu0 0.0
    %468 = vmatpush1.msra.mxu0 %v213
    %469 = vmatprep.subr.mxu0 0.0
    %470 = vmatpush2.msra.mxu0 0.0
    %471 = vmatprep.subr.mxu0 0.0
    %472 = vmatpush2.msra.mxu0 0.0
    %473 = vmatprep.subr.mxu0 0.0
    %474 = vmatpush2.msra.mxu0 0.0
    %475 = vmatprep.subr.mxu0 0.0
    %476 = vmatpush2.msra.mxu0 0.0
    %477 = vmatprep.subr.mxu0 0.0
    %478 = vmatpush2.msra.mxu0 0.0
    %479 = vmatprep.subr.mxu0 0.0
    %480 = vmatpush2.msra.mxu0 0.0
    %481 = vmatprep.subr.mxu0 0.0
    %482 = vmatpush2.msra.mxu0 0.0
    %483 = vmatprep.subr.mxu0 0.0
    %484 = vmatpush2.msra.mxu0 0.0
    %485 = vmatprep.subr.mxu0 0.0
    %486 = vmatpush2.msra.mxu0 0.0
    %487 = vmatprep.subr.mxu0 0.0
    %488 = vmatpush2.msra.mxu0 0.0
    %489 = vmatprep.subr.mxu0 0.0
    %490 = vmatpush2.msra.mxu0 0.0
    %491 = vmatprep.subr.mxu0 0.0
    %492 = vmatpush2.msra.mxu0 0.0
    %493 = vmatprep.subr.mxu0 0.0
    %494 = vmatpush2.msra.mxu0 0.0
    %495 = vmatprep.subr.mxu0 0.0
    %496 = vmatpush2.msra.mxu0 0.0
    %497 = vmatprep.subr.mxu0 0.0
    %498 = vmatpush2.msra.mxu0 0.0
    %499 = vmatprep.subr.mxu0 0.0
    %500 = vmatpush2.msra.mxu0 0.0
    %501 = vmatprep.mubr.f32.mxu0 0.0
    %502 = vmatmul.mubr.f32.gmra.mxu0 %v435
    %v503 = vpop.f32.mrf.mxu0
    %v504 = vadd.f32 0.0, %v503
    %v505 = vpop.f32.mrf.mxu0
    %506 = vdwg.mxu0
    %v507 = vadd.f32 %v434, %v504
    %v508 = vxor.u32 %v507, 2147483648
    %v509 = vmul.f32 %v508, 1.442695
    %v510 = vpow.pop %v509
    %v511 = vadd.f32 %v510, 1.0
    %v512 = vrcp.pop %v511
    %v513 = vmul.f32 1.0, %v512
    %v514 = vtanh.pop %v507
    %v515 = vmul.f32 %v513, %v420
    %517 = vrot.lane.b32.xlu0 %v514, 64
    %v518 = vpop.permute.xlu0 %517
    %v520 = vmul.f32 %v513, %v518
    %522 = vrot.lane.b32.xlu0 %v520, 32
    %v523 = vpop.permute.xlu0 %522
    %v525 = vadd.f32 %v515, %v523
    %v526 = vtanh.pop %v525
    %528 = vrot.lane.b32.xlu0 %v526, 64
    %v529 = vpop.permute.xlu0 %528
    %v531 = vmul.f32 %v513, %v529
    %533 = vrot.lane.b32.xlu0 %v531, 32
    %v534 = vpop.permute.xlu0 %533
    %s536 = scalar_lea.vmem [#allocation3], 16
    %537 = vst.msk [vmem:[%s536] sm:$0xff] %vm220, %v534
    %s538 = scalar_lea.vmem [#allocation2], 24
    %v539 = vld [vmem:[%s538] sm:$0xff]
    %v540 = vsel %vm220, %v534, 0
    %542 = vmatprep.subr.mxu0 0.0
    %543 = vmatpush1.msra.mxu0 0.0
    %544 = vmatprep.subr.mxu0 0.0
    %545 = vmatpush1.msra.mxu0 0.0
    %546 = vmatprep.subr.mxu0 0.0
    %547 = vmatpush1.msra.mxu0 0.0
    %548 = vmatprep.subr.mxu0 0.0
    %549 = vmatpush1.msra.mxu0 0.0
    %550 = vmatprep.subr.mxu0 0.0
    %551 = vmatpush1.msra.mxu0 0.0
    %552 = vmatprep.subr.mxu0 0.0
    %553 = vmatpush1.msra.mxu0 0.0
    %554 = vmatprep.subr.mxu0 0.0
    %555 = vmatpush1.msra.mxu0 0.0
    %556 = vmatprep.subr.mxu0 0.0
    %557 = vmatpush1.msra.mxu0 0.0
    %558 = vmatprep.subr.mxu0 0.0
    %559 = vmatpush1.msra.mxu0 0.0
    %560 = vmatprep.subr.mxu0 0.0
    %561 = vmatpush1.msra.mxu0 0.0
    %562 = vmatprep.subr.mxu0 0.0
    %563 = vmatpush1.msra.mxu0 0.0
    %564 = vmatprep.subr.mxu0 0.0
    %565 = vmatpush1.msra.mxu0 0.0
    %566 = vmatprep.subr.mxu0 0.0
    %567 = vmatpush1.msra.mxu0 %v216
    %568 = vmatprep.subr.mxu0 0.0
    %569 = vmatpush1.msra.mxu0 %v215
    %570 = vmatprep.subr.mxu0 0.0
    %571 = vmatpush1.msra.mxu0 %v214
    %572 = vmatprep.subr.mxu0 0.0
    %573 = vmatpush1.msra.mxu0 %v213
    %574 = vmatprep.subr.mxu0 0.0
    %575 = vmatpush2.msra.mxu0 0.0
    %576 = vmatprep.subr.mxu0 0.0
    %577 = vmatpush2.msra.mxu0 0.0
    %578 = vmatprep.subr.mxu0 0.0
    %579 = vmatpush2.msra.mxu0 0.0
    %580 = vmatprep.subr.mxu0 0.0
    %581 = vmatpush2.msra.mxu0 0.0
    %582 = vmatprep.subr.mxu0 0.0
    %583 = vmatpush2.msra.mxu0 0.0
    %584 = vmatprep.subr.mxu0 0.0
    %585 = vmatpush2.msra.mxu0 0.0
    %586 = vmatprep.subr.mxu0 0.0
    %587 = vmatpush2.msra.mxu0 0.0
    %588 = vmatprep.subr.mxu0 0.0
    %589 = vmatpush2.msra.mxu0 0.0
    %590 = vmatprep.subr.mxu0 0.0
    %591 = vmatpush2.msra.mxu0 0.0
    %592 = vmatprep.subr.mxu0 0.0
    %593 = vmatpush2.msra.mxu0 0.0
    %594 = vmatprep.subr.mxu0 0.0
    %595 = vmatpush2.msra.mxu0 0.0
    %596 = vmatprep.subr.mxu0 0.0
    %597 = vmatpush2.msra.mxu0 0.0
    %598 = vmatprep.subr.mxu0 0.0
    %599 = vmatpush2.msra.mxu0 0.0
    %600 = vmatprep.subr.mxu0 0.0
    %601 = vmatpush2.msra.mxu0 0.0
    %602 = vmatprep.subr.mxu0 0.0
    %603 = vmatpush2.msra.mxu0 0.0
    %604 = vmatprep.subr.mxu0 0.0
    %605 = vmatpush2.msra.mxu0 0.0
    %606 = vmatprep.mubr.f32.mxu0 0.0
    %607 = vmatmul.mubr.f32.gmra.mxu0 %v540
    %v608 = vpop.f32.mrf.mxu0
    %v609 = vadd.f32 0.0, %v608
    %v610 = vpop.f32.mrf.mxu0
    %611 = vdwg.mxu0
    %v612 = vadd.f32 %v539, %v609
    %v613 = vxor.u32 %v612, 2147483648
    %v614 = vmul.f32 %v613, 1.442695
    %v615 = vpow.pop %v614
    %v616 = vadd.f32 %v615, 1.0
    %v617 = vrcp.pop %v616
    %v618 = vmul.f32 1.0, %v617
    %v619 = vtanh.pop %v612
    %v620 = vmul.f32 %v618, %v525
    %622 = vrot.lane.b32.xlu0 %v619, 64
    %v623 = vpop.permute.xlu0 %622
    %v625 = vmul.f32 %v618, %v623
    %627 = vrot.lane.b32.xlu0 %v625, 32
    %v628 = vpop.permute.xlu0 %627
    %v630 = vadd.f32 %v620, %v628
    %v631 = vtanh.pop %v630
    %633 = vrot.lane.b32.xlu0 %v631, 64
    %v634 = vpop.permute.xlu0 %633
    %v636 = vmul.f32 %v618, %v634
    %638 = vrot.lane.b32.xlu0 %v636, 32
    %v639 = vpop.permute.xlu0 %638
    %s641 = scalar_lea.vmem [#allocation3], 24
    %642 = vst.msk [vmem:[%s641] sm:$0xff] %vm220, %v639
    %s643 = scalar_lea.vmem [#allocation2], 32
    %v644 = vld [vmem:[%s643] sm:$0xff]
    %v645 = vsel %vm220, %v639, 0
    %647 = vmatprep.subr.mxu0 0.0
    %648 = vmatpush1.msra.mxu0 0.0
    %649 = vmatprep.subr.mxu0 0.0
    %650 = vmatpush1.msra.mxu0 0.0
    %651 = vmatprep.subr.mxu0 0.0
    %652 = vmatpush1.msra.mxu0 0.0
    %653 = vmatprep.subr.mxu0 0.0
    %654 = vmatpush1.msra.mxu0 0.0
    %655 = vmatprep.subr.mxu0 0.0
    %656 = vmatpush1.msra.mxu0 0.0
    %657 = vmatprep.subr.mxu0 0.0
    %658 = vmatpush1.msra.mxu0 0.0
    %659 = vmatprep.subr.mxu0 0.0
    %660 = vmatpush1.msra.mxu0 0.0
    %661 = vmatprep.subr.mxu0 0.0
    %662 = vmatpush1.msra.mxu0 0.0
    %663 = vmatprep.subr.mxu0 0.0
    %664 = vmatpush1.msra.mxu0 0.0
    %665 = vmatprep.subr.mxu0 0.0
    %666 = vmatpush1.msra.mxu0 0.0
    %667 = vmatprep.subr.mxu0 0.0
    %668 = vmatpush1.msra.mxu0 0.0
    %669 = vmatprep.subr.mxu0 0.0
    %670 = vmatpush1.msra.mxu0 0.0
    %671 = vmatprep.subr.mxu0 0.0
    %672 = vmatpush1.msra.mxu0 %v216
    %673 = vmatprep.subr.mxu0 0.0
    %674 = vmatpush1.msra.mxu0 %v215
    %675 = vmatprep.subr.mxu0 0.0
    %676 = vmatpush1.msra.mxu0 %v214
    %677 = vmatprep.subr.mxu0 0.0
    %678 = vmatpush1.msra.mxu0 %v213
    %679 = vmatprep.subr.mxu0 0.0
    %680 = vmatpush2.msra.mxu0 0.0
    %681 = vmatprep.subr.mxu0 0.0
    %682 = vmatpush2.msra.mxu0 0.0
    %683 = vmatprep.subr.mxu0 0.0
    %684 = vmatpush2.msra.mxu0 0.0
    %685 = vmatprep.subr.mxu0 0.0
    %686 = vmatpush2.msra.mxu0 0.0
    %687 = vmatprep.subr.mxu0 0.0
    %688 = vmatpush2.msra.mxu0 0.0
    %689 = vmatprep.subr.mxu0 0.0
    %690 = vmatpush2.msra.mxu0 0.0
    %691 = vmatprep.subr.mxu0 0.0
    %692 = vmatpush2.msra.mxu0 0.0
    %693 = vmatprep.subr.mxu0 0.0
    %694 = vmatpush2.msra.mxu0 0.0
    %695 = vmatprep.subr.mxu0 0.0
    %696 = vmatpush2.msra.mxu0 0.0
    %697 = vmatprep.subr.mxu0 0.0
    %698 = vmatpush2.msra.mxu0 0.0
    %699 = vmatprep.subr.mxu0 0.0
    %700 = vmatpush2.msra.mxu0 0.0
    %701 = vmatprep.subr.mxu0 0.0
    %702 = vmatpush2.msra.mxu0 0.0
    %703 = vmatprep.subr.mxu0 0.0
    %704 = vmatpush2.msra.mxu0 0.0
    %705 = vmatprep.subr.mxu0 0.0
    %706 = vmatpush2.msra.mxu0 0.0
    %707 = vmatprep.subr.mxu0 0.0
    %708 = vmatpush2.msra.mxu0 0.0
    %709 = vmatprep.subr.mxu0 0.0
    %710 = vmatpush2.msra.mxu0 0.0
    %711 = vmatprep.mubr.f32.mxu0 0.0
    %712 = vmatmul.mubr.f32.gmra.mxu0 %v645
    %v713 = vpop.f32.mrf.mxu0
    %v714 = vadd.f32 0.0, %v713
    %v715 = vpop.f32.mrf.mxu0
    %716 = vdwg.mxu0
    %v717 = vadd.f32 %v644, %v714
    %v718 = vxor.u32 %v717, 2147483648
    %v719 = vmul.f32 %v718, 1.442695
    %v720 = vpow.pop %v719
    %v721 = vadd.f32 %v720, 1.0
    %v722 = vrcp.pop %v721
    %v723 = vmul.f32 1.0, %v722
    %v724 = vtanh.pop %v717
    %v725 = vmul.f32 %v723, %v630
    %727 = vrot.lane.b32.xlu0 %v724, 64
    %v728 = vpop.permute.xlu0 %727
    %v730 = vmul.f32 %v723, %v728
    %732 = vrot.lane.b32.xlu0 %v730, 32
    %v733 = vpop.permute.xlu0 %732
    %v735 = vadd.f32 %v725, %v733
    %v736 = vtanh.pop %v735
    %738 = vrot.lane.b32.xlu0 %v736, 64
    %v739 = vpop.permute.xlu0 %738
    %v741 = vmul.f32 %v723, %v739
    %743 = vrot.lane.b32.xlu0 %v741, 32
    %v744 = vpop.permute.xlu0 %743
    %s746 = scalar_lea.vmem [#allocation3], 32
    %747 = vst.msk [vmem:[%s746] sm:$0xff] %vm220, %v744
    %s748 = scalar_lea.vmem [#allocation2], 40
    %v749 = vld [vmem:[%s748] sm:$0xff]
    %v750 = vsel %vm220, %v744, 0
    %752 = vmatprep.subr.mxu0 0.0
    %753 = vmatpush1.msra.mxu0 0.0
    %754 = vmatprep.subr.mxu0 0.0
    %755 = vmatpush1.msra.mxu0 0.0
    %756 = vmatprep.subr.mxu0 0.0
    %757 = vmatpush1.msra.mxu0 0.0
    %758 = vmatprep.subr.mxu0 0.0
    %759 = vmatpush1.msra.mxu0 0.0
    %760 = vmatprep.subr.mxu0 0.0
    %761 = vmatpush1.msra.mxu0 0.0
    %762 = vmatprep.subr.mxu0 0.0
    %763 = vmatpush1.msra.mxu0 0.0
    %764 = vmatprep.subr.mxu0 0.0
    %765 = vmatpush1.msra.mxu0 0.0
    %766 = vmatprep.subr.mxu0 0.0
    %767 = vmatpush1.msra.mxu0 0.0
    %768 = vmatprep.subr.mxu0 0.0
    %769 = vmatpush1.msra.mxu0 0.0
    %770 = vmatprep.subr.mxu0 0.0
    %771 = vmatpush1.msra.mxu0 0.0
    %772 = vmatprep.subr.mxu0 0.0
    %773 = vmatpush1.msra.mxu0 0.0
    %774 = vmatprep.subr.mxu0 0.0
    %775 = vmatpush1.msra.mxu0 0.0
    %776 = vmatprep.subr.mxu0 0.0
    %777 = vmatpush1.msra.mxu0 %v216
    %778 = vmatprep.subr.mxu0 0.0
    %779 = vmatpush1.msra.mxu0 %v215
    %780 = vmatprep.subr.mxu0 0.0
    %781 = vmatpush1.msra.mxu0 %v214
    %782 = vmatprep.subr.mxu0 0.0
    %783 = vmatpush1.msra.mxu0 %v213
    %784 = vmatprep.subr.mxu0 0.0
    %785 = vmatpush2.msra.mxu0 0.0
    %786 = vmatprep.subr.mxu0 0.0
    %787 = vmatpush2.msra.mxu0 0.0
    %788 = vmatprep.subr.mxu0 0.0
    %789 = vmatpush2.msra.mxu0 0.0
    %790 = vmatprep.subr.mxu0 0.0
    %791 = vmatpush2.msra.mxu0 0.0
    %792 = vmatprep.subr.mxu0 0.0
    %793 = vmatpush2.msra.mxu0 0.0
    %794 = vmatprep.subr.mxu0 0.0
    %795 = vmatpush2.msra.mxu0 0.0
    %796 = vmatprep.subr.mxu0 0.0
    %797 = vmatpush2.msra.mxu0 0.0
    %798 = vmatprep.subr.mxu0 0.0
    %799 = vmatpush2.msra.mxu0 0.0
    %800 = vmatprep.subr.mxu0 0.0
    %801 = vmatpush2.msra.mxu0 0.0
    %802 = vmatprep.subr.mxu0 0.0
    %803 = vmatpush2.msra.mxu0 0.0
    %804 = vmatprep.subr.mxu0 0.0
    %805 = vmatpush2.msra.mxu0 0.0
    %806 = vmatprep.subr.mxu0 0.0
    %807 = vmatpush2.msra.mxu0 0.0
    %808 = vmatprep.subr.mxu0 0.0
    %809 = vmatpush2.msra.mxu0 0.0
    %810 = vmatprep.subr.mxu0 0.0
    %811 = vmatpush2.msra.mxu0 0.0
    %812 = vmatprep.subr.mxu0 0.0
    %813 = vmatpush2.msra.mxu0 0.0
    %814 = vmatprep.subr.mxu0 0.0
    %815 = vmatpush2.msra.mxu0 0.0
    %816 = vmatprep.mubr.f32.mxu0 0.0
    %817 = vmatmul.mubr.f32.gmra.mxu0 %v750
    %v818 = vpop.f32.mrf.mxu0
    %v819 = vadd.f32 0.0, %v818
    %v820 = vpop.f32.mrf.mxu0
    %821 = vdwg.mxu0
    %v822 = vadd.f32 %v749, %v819
    %v823 = vxor.u32 %v822, 2147483648
    %v824 = vmul.f32 %v823, 1.442695
    %v825 = vpow.pop %v824
    %v826 = vadd.f32 %v825, 1.0
    %v827 = vrcp.pop %v826
    %v828 = vmul.f32 1.0, %v827
    %v829 = vtanh.pop %v822
    %v830 = vmul.f32 %v828, %v735
    %832 = vrot.lane.b32.xlu0 %v829, 64
    %v833 = vpop.permute.xlu0 %832
    %v835 = vmul.f32 %v828, %v833
    %837 = vrot.lane.b32.xlu0 %v835, 32
    %v838 = vpop.permute.xlu0 %837
    %v840 = vadd.f32 %v830, %v838
    %v841 = vtanh.pop %v840
    %843 = vrot.lane.b32.xlu0 %v841, 64
    %v844 = vpop.permute.xlu0 %843
    %v846 = vmul.f32 %v828, %v844
    %848 = vrot.lane.b32.xlu0 %v846, 32
    %v849 = vpop.permute.xlu0 %848
    %s851 = scalar_lea.vmem [#allocation3], 40
    %852 = vst.msk [vmem:[%s851] sm:$0xff] %vm220, %v849
    %s853 = scalar_lea.vmem [#allocation2], 48
    %v854 = vld [vmem:[%s853] sm:$0xff]
    %v855 = vsel %vm220, %v849, 0
    %857 = vmatprep.subr.mxu0 0.0
    %858 = vmatpush1.msra.mxu0 0.0
    %859 = vmatprep.subr.mxu0 0.0
    %860 = vmatpush1.msra.mxu0 0.0
    %861 = vmatprep.subr.mxu0 0.0
    %862 = vmatpush1.msra.mxu0 0.0
    %863 = vmatprep.subr.mxu0 0.0
    %864 = vmatpush1.msra.mxu0 0.0
    %865 = vmatprep.subr.mxu0 0.0
    %866 = vmatpush1.msra.mxu0 0.0
    %867 = vmatprep.subr.mxu0 0.0
    %868 = vmatpush1.msra.mxu0 0.0
    %869 = vmatprep.subr.mxu0 0.0
    %870 = vmatpush1.msra.mxu0 0.0
    %871 = vmatprep.subr.mxu0 0.0
    %872 = vmatpush1.msra.mxu0 0.0
    %873 = vmatprep.subr.mxu0 0.0
    %874 = vmatpush1.msra.mxu0 0.0
    %875 = vmatprep.subr.mxu0 0.0
    %876 = vmatpush1.msra.mxu0 0.0
    %877 = vmatprep.subr.mxu0 0.0
    %878 = vmatpush1.msra.mxu0 0.0
    %879 = vmatprep.subr.mxu0 0.0
    %880 = vmatpush1.msra.mxu0 0.0
    %881 = vmatprep.subr.mxu0 0.0
    %882 = vmatpush1.msra.mxu0 %v216
    %883 = vmatprep.subr.mxu0 0.0
    %884 = vmatpush1.msra.mxu0 %v215
    %885 = vmatprep.subr.mxu0 0.0
    %886 = vmatpush1.msra.mxu0 %v214
    %887 = vmatprep.subr.mxu0 0.0
    %888 = vmatpush1.msra.mxu0 %v213
    %889 = vmatprep.subr.mxu0 0.0
    %890 = vmatpush2.msra.mxu0 0.0
    %891 = vmatprep.subr.mxu0 0.0
    %892 = vmatpush2.msra.mxu0 0.0
    %893 = vmatprep.subr.mxu0 0.0
    %894 = vmatpush2.msra.mxu0 0.0
    %895 = vmatprep.subr.mxu0 0.0
    %896 = vmatpush2.msra.mxu0 0.0
    %897 = vmatprep.subr.mxu0 0.0
    %898 = vmatpush2.msra.mxu0 0.0
    %899 = vmatprep.subr.mxu0 0.0
    %900 = vmatpush2.msra.mxu0 0.0
    %901 = vmatprep.subr.mxu0 0.0
    %902 = vmatpush2.msra.mxu0 0.0
    %903 = vmatprep.subr.mxu0 0.0
    %904 = vmatpush2.msra.mxu0 0.0
    %905 = vmatprep.subr.mxu0 0.0
    %906 = vmatpush2.msra.mxu0 0.0
    %907 = vmatprep.subr.mxu0 0.0
    %908 = vmatpush2.msra.mxu0 0.0
    %909 = vmatprep.subr.mxu0 0.0
    %910 = vmatpush2.msra.mxu0 0.0
    %911 = vmatprep.subr.mxu0 0.0
    %912 = vmatpush2.msra.mxu0 0.0
    %913 = vmatprep.subr.mxu0 0.0
    %914 = vmatpush2.msra.mxu0 0.0
    %915 = vmatprep.subr.mxu0 0.0
    %916 = vmatpush2.msra.mxu0 0.0
    %917 = vmatprep.subr.mxu0 0.0
    %918 = vmatpush2.msra.mxu0 0.0
    %919 = vmatprep.subr.mxu0 0.0
    %920 = vmatpush2.msra.mxu0 0.0
    %921 = vmatprep.mubr.f32.mxu0 0.0
    %922 = vmatmul.mubr.f32.gmra.mxu0 %v855
    %v923 = vpop.f32.mrf.mxu0
    %v924 = vadd.f32 0.0, %v923
    %v925 = vpop.f32.mrf.mxu0
    %926 = vdwg.mxu0
    %v927 = vadd.f32 %v854, %v924
    %v928 = vxor.u32 %v927, 2147483648
    %v929 = vmul.f32 %v928, 1.442695
    %v930 = vpow.pop %v929
    %v931 = vadd.f32 %v930, 1.0
    %v932 = vrcp.pop %v931
    %v933 = vmul.f32 1.0, %v932
    %v934 = vtanh.pop %v927
    %v935 = vmul.f32 %v933, %v840
    %937 = vrot.lane.b32.xlu0 %v934, 64
    %v938 = vpop.permute.xlu0 %937
    %v940 = vmul.f32 %v933, %v938
    %942 = vrot.lane.b32.xlu0 %v940, 32
    %v943 = vpop.permute.xlu0 %942
    %v945 = vadd.f32 %v935, %v943
    %v946 = vtanh.pop %v945
    %948 = vrot.lane.b32.xlu0 %v946, 64
    %v949 = vpop.permute.xlu0 %948
    %v951 = vmul.f32 %v933, %v949
    %953 = vrot.lane.b32.xlu0 %v951, 32
    %v954 = vpop.permute.xlu0 %953
    %s956 = scalar_lea.vmem [#allocation3], 48
    %957 = vst.msk [vmem:[%s956] sm:$0xff] %vm220, %v954
    %s958 = scalar_lea.vmem [#allocation2], 56
    %v959 = vld [vmem:[%s958] sm:$0xff]
    %v960 = vsel %vm220, %v954, 0
    %962 = vmatprep.subr.mxu0 0.0
    %963 = vmatpush1.msra.mxu0 0.0
    %964 = vmatprep.subr.mxu0 0.0
    %965 = vmatpush1.msra.mxu0 0.0
    %966 = vmatprep.subr.mxu0 0.0
    %967 = vmatpush1.msra.mxu0 0.0
    %968 = vmatprep.subr.mxu0 0.0
    %969 = vmatpush1.msra.mxu0 0.0
    %970 = vmatprep.subr.mxu0 0.0
    %971 = vmatpush1.msra.mxu0 0.0
    %972 = vmatprep.subr.mxu0 0.0
    %973 = vmatpush1.msra.mxu0 0.0
    %974 = vmatprep.subr.mxu0 0.0
    %975 = vmatpush1.msra.mxu0 0.0
    %976 = vmatprep.subr.mxu0 0.0
    %977 = vmatpush1.msra.mxu0 0.0
    %978 = vmatprep.subr.mxu0 0.0
    %979 = vmatpush1.msra.mxu0 0.0
    %980 = vmatprep.subr.mxu0 0.0
    %981 = vmatpush1.msra.mxu0 0.0
    %982 = vmatprep.subr.mxu0 0.0
    %983 = vmatpush1.msra.mxu0 0.0
    %984 = vmatprep.subr.mxu0 0.0
    %985 = vmatpush1.msra.mxu0 0.0
    %986 = vmatprep.subr.mxu0 0.0
    %987 = vmatpush1.msra.mxu0 %v216
    %988 = vmatprep.subr.mxu0 0.0
    %989 = vmatpush1.msra.mxu0 %v215
    %990 = vmatprep.subr.mxu0 0.0
    %991 = vmatpush1.msra.mxu0 %v214
    %992 = vmatprep.subr.mxu0 0.0
    %993 = vmatpush1.msra.mxu0 %v213
    %994 = vmatprep.subr.mxu0 0.0
    %995 = vmatpush2.msra.mxu0 0.0
    %996 = vmatprep.subr.mxu0 0.0
    %997 = vmatpush2.msra.mxu0 0.0
    %998 = vmatprep.subr.mxu0 0.0
    %999 = vmatpush2.msra.mxu0 0.0
    %1000 = vmatprep.subr.mxu0 0.0
    %1001 = vmatpush2.msra.mxu0 0.0
    %1002 = vmatprep.subr.mxu0 0.0
    %1003 = vmatpush2.msra.mxu0 0.0
    %1004 = vmatprep.subr.mxu0 0.0
    %1005 = vmatpush2.msra.mxu0 0.0
    %1006 = vmatprep.subr.mxu0 0.0
    %1007 = vmatpush2.msra.mxu0 0.0
    %1008 = vmatprep.subr.mxu0 0.0
    %1009 = vmatpush2.msra.mxu0 0.0
    %1010 = vmatprep.subr.mxu0 0.0
    %1011 = vmatpush2.msra.mxu0 0.0
    %1012 = vmatprep.subr.mxu0 0.0
    %1013 = vmatpush2.msra.mxu0 0.0
    %1014 = vmatprep.subr.mxu0 0.0
    %1015 = vmatpush2.msra.mxu0 0.0
    %1016 = vmatprep.subr.mxu0 0.0
    %1017 = vmatpush2.msra.mxu0 0.0
    %1018 = vmatprep.subr.mxu0 0.0
    %1019 = vmatpush2.msra.mxu0 0.0
    %1020 = vmatprep.subr.mxu0 0.0
    %1021 = vmatpush2.msra.mxu0 0.0
    %1022 = vmatprep.subr.mxu0 0.0
    %1023 = vmatpush2.msra.mxu0 0.0
    %1024 = vmatprep.subr.mxu0 0.0
    %1025 = vmatpush2.msra.mxu0 0.0
    %1026 = vmatprep.mubr.f32.mxu0 0.0
    %1027 = vmatmul.mubr.f32.gmra.mxu0 %v960
    %v1028 = vpop.f32.mrf.mxu0
    %v1029 = vadd.f32 0.0, %v1028
    %v1030 = vpop.f32.mrf.mxu0
    %1031 = vdwg.mxu0
    %v1032 = vadd.f32 %v959, %v1029
    %v1033 = vxor.u32 %v1032, 2147483648
    %v1034 = vmul.f32 %v1033, 1.442695
    %v1035 = vpow.pop %v1034
    %v1036 = vadd.f32 %v1035, 1.0
    %v1037 = vrcp.pop %v1036
    %v1038 = vmul.f32 1.0, %v1037
    %v1039 = vtanh.pop %v1032
    %v1040 = vmul.f32 %v1038, %v945
    %1042 = vrot.lane.b32.xlu0 %v1039, 64
    %v1043 = vpop.permute.xlu0 %1042
    %v1045 = vmul.f32 %v1038, %v1043
    %1047 = vrot.lane.b32.xlu0 %v1045, 32
    %v1048 = vpop.permute.xlu0 %1047
    %v1050 = vadd.f32 %v1040, %v1048
    %v1051 = vtanh.pop %v1050
    %1053 = vrot.lane.b32.xlu0 %v1051, 64
    %v1054 = vpop.permute.xlu0 %1053
    %v1056 = vmul.f32 %v1038, %v1054
    %1058 = vrot.lane.b32.xlu0 %v1056, 32
    %v1059 = vpop.permute.xlu0 %1058
    %s1061 = scalar_lea.vmem [#allocation3], 56
    %1062 = vst.msk [vmem:[%s1061] sm:$0xff] %vm220, %v1059
    %1063 = vst.msk [vmem:[#allocation4] sm:$0xff] %vm220, %v1059
    %1065 = vrot.lane.b32.xlu0 %v1050, 96
    %v1066 = vpop.permute.xlu0 %1065
    %1068 = vst.msk [vmem:[#allocation5] sm:$0xff] %vm220, %v1066
    %v1069 = vld [vmem:[#allocation3] sm:$0xff]
    %v1070 = vld [vmem:[#allocation3 + $0x8] sm:$0xff]
    %v1071 = vld [vmem:[#allocation3 + $0x10] sm:$0xff]
    %v1072 = vld [vmem:[#allocation3 + $0x18] sm:$0xff]
    %v1073 = vld [vmem:[#allocation3 + $0x20] sm:$0xff]
    %v1074 = vld [vmem:[#allocation3 + $0x28] sm:$0xff]
    %v1075 = vld [vmem:[#allocation3 + $0x30] sm:$0xff]
    %v1076 = vld [vmem:[#allocation3 + $0x38] sm:$0xff]
    %v1077 = vpack.c.bf16 %v1070, %v1069
    %v1078 = vpack.c.bf16 %v1072, %v1071
    %v1079 = vpack.c.bf16 %v1074, %v1073
    %v1080 = vpack.c.bf16 %v1076, %v1075
    %v1081 = vld [vmem:[#allocation11] sm:$0xf]
    %v1082 = vld [vmem:[#allocation11 + $0x4] sm:$0xf]
    %v1083 = vld [vmem:[#allocation11 + $0x8] sm:$0xf]
    %v1084 = vld [vmem:[#allocation11 + $0xc] sm:$0xf]
    %v1085 = vld [vmem:[%s6] sm:$0x1]
    %v1087 = vlaneseq
    %v1088 = vshrl.u32 %v1087, 7
    %v1089 = vsub.s32 0, %v1088
    %v1090 = vrot.slane %v1085, %v1089
    %v1096 = vunpack.c.l.b16 %v1081
    %v1097 = vunpack.c.l.b16 %v1082
    %v1098 = vunpack.c.l.b16 %v1083
    %v1099 = vunpack.c.l.b16 %v1084
    %v1100 = vpack.c.b16 %v1097, %v1096
    %v1101 = vpack.c.b16 %v1099, %v1098
    %v1105 = vsel %vm220, %v1077, 0
    %v1108 = vsel %vm220, %v1078, 0
    %v1111 = vsel %vm220, %v1079, 0
    %v1114 = vsel %vm220, %v1080, 0
    %1116 = vmatprep.subr.bf16.mxu0 0
    %1117 = vmatpush1.bf16.msra.mxu0 0
    %1118 = vmatprep.subr.bf16.mxu0 0
    %1119 = vmatpush1.bf16.msra.mxu0 0
    %1120 = vmatprep.subr.bf16.mxu0 0
    %1121 = vmatpush1.bf16.msra.mxu0 0
    %1122 = vmatprep.subr.bf16.mxu0 0
    %1123 = vmatpush1.bf16.msra.mxu0 0
    %1124 = vmatprep.subr.bf16.mxu0 0
    %1125 = vmatpush1.bf16.msra.mxu0 0
    %1126 = vmatprep.subr.bf16.mxu0 0
    %1127 = vmatpush1.bf16.msra.mxu0 0
    %1128 = vmatprep.subr.bf16.mxu0 0
    %1129 = vmatpush1.bf16.msra.mxu0 %v1101
    %1130 = vmatprep.subr.bf16.mxu0 0
    %1131 = vmatpush1.bf16.msra.mxu0 %v1100
    %1132 = vmatprep.subr.bf16.mxu0 0
    %1133 = vmatpush2.bf16.msra.mxu0 0
    %1134 = vmatprep.subr.bf16.mxu0 0
    %1135 = vmatpush2.bf16.msra.mxu0 0
    %1136 = vmatprep.subr.bf16.mxu0 0
    %1137 = vmatpush2.bf16.msra.mxu0 0
    %1138 = vmatprep.subr.bf16.mxu0 0
    %1139 = vmatpush2.bf16.msra.mxu0 0
    %1140 = vmatprep.subr.bf16.mxu0 0
    %1141 = vmatpush2.bf16.msra.mxu0 0
    %1142 = vmatprep.subr.bf16.mxu0 0
    %1143 = vmatpush2.bf16.msra.mxu0 0
    %1144 = vmatprep.subr.bf16.mxu0 0
    %1145 = vmatpush2.bf16.msra.mxu0 0
    %1146 = vmatprep.subr.bf16.mxu0 0
    %1147 = vmatpush2.bf16.msra.mxu0 0
    %1148 = vmatprep.mubr.bf16.mxu0 0
    %1149 = vmatmul.mubr.bf16.gmra.mxu0 %v1105
    %v1150 = vpop.f32.mrf.mxu0
    %v1151 = vadd.f32 %v1090, %v1150
    %v1152 = vpop.f32.mrf.mxu0
    %v1153 = vpop.f32.mrf.mxu0
    %v1154 = vadd.f32 %v1090, %v1153
    %v1155 = vpop.f32.mrf.mxu0
    %1156 = vmatprep.mubr.bf16.mxu0 0
    %1157 = vmatmul.mubr.bf16.gmra.mxu0 %v1108
    %v1158 = vpop.f32.mrf.mxu0
    %v1159 = vadd.f32 %v1090, %v1158
    %v1160 = vpop.f32.mrf.mxu0
    %v1161 = vpop.f32.mrf.mxu0
    %v1162 = vadd.f32 %v1090, %v1161
    %v1163 = vpop.f32.mrf.mxu0
    %1164 = vmatprep.mubr.bf16.mxu0 0
    %1165 = vmatmul.mubr.bf16.gmra.mxu0 %v1111
    %v1166 = vpop.f32.mrf.mxu0
    %v1167 = vadd.f32 %v1090, %v1166
    %v1168 = vpop.f32.mrf.mxu0
    %v1169 = vpop.f32.mrf.mxu0
    %v1170 = vadd.f32 %v1090, %v1169
    %v1171 = vpop.f32.mrf.mxu0
    %1172 = vmatprep.mubr.bf16.mxu0 0
    %1173 = vmatmul.mubr.bf16.gmra.mxu0 %v1114
    %v1174 = vpop.f32.mrf.mxu0
    %v1175 = vadd.f32 %v1090, %v1174
    %v1176 = vpop.f32.mrf.mxu0
    %v1177 = vpop.f32.mrf.mxu0
    %v1178 = vadd.f32 %v1090, %v1177
    %v1179 = vpop.f32.mrf.mxu0
    %1180 = vdwg.mxu0
    %1181 = vst [vmem:[#allocation2] sm:$0xff] %v1151
    %1182 = vst [vmem:[#allocation2 + $0x8] sm:$0xff] %v1154
    %1183 = vst [vmem:[#allocation2 + $0x10] sm:$0xff] %v1159
    %1184 = vst [vmem:[#allocation2 + $0x18] sm:$0xff] %v1162
    %1185 = vst [vmem:[#allocation2 + $0x20] sm:$0xff] %v1167
    %1186 = vst [vmem:[#allocation2 + $0x28] sm:$0xff] %v1170
    %1187 = vst [vmem:[#allocation2 + $0x30] sm:$0xff] %v1175
    %1188 = vst [vmem:[#allocation2 + $0x38] sm:$0xff] %v1178
    %v1189 = vld [vmem:[#allocation13] sm:$0xff]
    %v1190 = vld [vmem:[#allocation13 + $0x8] sm:$0xff]
    %v1191 = vld [vmem:[#allocation13 + $0x10] sm:$0xff]
    %v1192 = vld [vmem:[#allocation13 + $0x18] sm:$0xff]
    %v1193 = vld [vmem:[#allocation6] sm:$0xff]
    %v1194 = vld [vmem:[#allocation7] sm:$0xff]
    %v1195 = vld [vmem:[#allocation2] sm:$0xff]
    %v1197 = vsel %vm220, %v1193, 0
    %1199 = vmatprep.subr.mxu0 0.0
    %1200 = vmatpush1.msra.mxu0 0.0
    %1201 = vmatprep.subr.mxu0 0.0
    %1202 = vmatpush1.msra.mxu0 0.0
    %1203 = vmatprep.subr.mxu0 0.0
    %1204 = vmatpush1.msra.mxu0 0.0
    %1205 = vmatprep.subr.mxu0 0.0
    %1206 = vmatpush1.msra.mxu0 0.0
    %1207 = vmatprep.subr.mxu0 0.0
    %1208 = vmatpush1.msra.mxu0 0.0
    %1209 = vmatprep.subr.mxu0 0.0
    %1210 = vmatpush1.msra.mxu0 0.0
    %1211 = vmatprep.subr.mxu0 0.0
    %1212 = vmatpush1.msra.mxu0 0.0
    %1213 = vmatprep.subr.mxu0 0.0
    %1214 = vmatpush1.msra.mxu0 0.0
    %1215 = vmatprep.subr.mxu0 0.0
    %1216 = vmatpush1.msra.mxu0 0.0
    %1217 = vmatprep.subr.mxu0 0.0
    %1218 = vmatpush1.msra.mxu0 0.0
    %1219 = vmatprep.subr.mxu0 0.0
    %1220 = vmatpush1.msra.mxu0 0.0
    %1221 = vmatprep.subr.mxu0 0.0
    %1222 = vmatpush1.msra.mxu0 0.0
    %1223 = vmatprep.subr.mxu0 0.0
    %1224 = vmatpush1.msra.mxu0 %v1192
    %1225 = vmatprep.subr.mxu0 0.0
    %1226 = vmatpush1.msra.mxu0 %v1191
    %1227 = vmatprep.subr.mxu0 0.0
    %1228 = vmatpush1.msra.mxu0 %v1190
    %1229 = vmatprep.subr.mxu0 0.0
    %1230 = vmatpush1.msra.mxu0 %v1189
    %1231 = vmatprep.subr.mxu0 0.0
    %1232 = vmatpush2.msra.mxu0 0.0
    %1233 = vmatprep.subr.mxu0 0.0
    %1234 = vmatpush2.msra.mxu0 0.0
    %1235 = vmatprep.subr.mxu0 0.0
    %1236 = vmatpush2.msra.mxu0 0.0
    %1237 = vmatprep.subr.mxu0 0.0
    %1238 = vmatpush2.msra.mxu0 0.0
    %1239 = vmatprep.subr.mxu0 0.0
    %1240 = vmatpush2.msra.mxu0 0.0
    %1241 = vmatprep.subr.mxu0 0.0
    %1242 = vmatpush2.msra.mxu0 0.0
    %1243 = vmatprep.subr.mxu0 0.0
    %1244 = vmatpush2.msra.mxu0 0.0
    %1245 = vmatprep.subr.mxu0 0.0
    %1246 = vmatpush2.msra.mxu0 0.0
    %1247 = vmatprep.subr.mxu0 0.0
    %1248 = vmatpush2.msra.mxu0 0.0
    %1249 = vmatprep.subr.mxu0 0.0
    %1250 = vmatpush2.msra.mxu0 0.0
    %1251 = vmatprep.subr.mxu0 0.0
    %1252 = vmatpush2.msra.mxu0 0.0
    %1253 = vmatprep.subr.mxu0 0.0
    %1254 = vmatpush2.msra.mxu0 0.0
    %1255 = vmatprep.subr.mxu0 0.0
    %1256 = vmatpush2.msra.mxu0 0.0
    %1257 = vmatprep.subr.mxu0 0.0
    %1258 = vmatpush2.msra.mxu0 0.0
    %1259 = vmatprep.subr.mxu0 0.0
    %1260 = vmatpush2.msra.mxu0 0.0
    %1261 = vmatprep.subr.mxu0 0.0
    %1262 = vmatpush2.msra.mxu0 0.0
    %1263 = vmatprep.mubr.f32.mxu0 0.0
    %1264 = vmatmul.mubr.f32.gmra.mxu0 %v1197
    %v1265 = vpop.f32.mrf.mxu0
    %v1266 = vadd.f32 0.0, %v1265
    %v1267 = vpop.f32.mrf.mxu0
    %1268 = vdwg.mxu0
    %v1269 = vadd.f32 %v1195, %v1266
    %v1270 = vxor.u32 %v1269, 2147483648
    %v1271 = vmul.f32 %v1270, 1.442695
    %v1272 = vpow.pop %v1271
    %v1273 = vadd.f32 %v1272, 1.0
    %v1274 = vrcp.pop %v1273
    %v1275 = vmul.f32 1.0, %v1274
    %v1276 = vtanh.pop %v1269
    %1278 = vrot.lane.b32.xlu0 %v1194, 32
    %v1279 = vpop.permute.xlu0 %1278
    %v1281 = vmul.f32 %v1275, %v1279
    %1283 = vrot.lane.b32.xlu0 %v1276, 64
    %v1284 = vpop.permute.xlu0 %1283
    %v1286 = vmul.f32 %v1275, %v1284
    %1288 = vrot.lane.b32.xlu0 %v1286, 32
    %v1289 = vpop.permute.xlu0 %1288
    %v1291 = vadd.f32 %v1281, %v1289
    %v1292 = vtanh.pop %v1291
    %1294 = vrot.lane.b32.xlu0 %v1292, 64
    %v1295 = vpop.permute.xlu0 %1294
    %v1297 = vmul.f32 %v1275, %v1295
    %1299 = vrot.lane.b32.xlu0 %v1297, 32
    %v1300 = vpop.permute.xlu0 %1299
    %1302 = vst.msk [vmem:[#allocation3] sm:$0xff] %vm220, %v1300
    %v1303 = vld [vmem:[%s328] sm:$0xff]
    %v1304 = vsel %vm220, %v1300, 0
    %1306 = vmatprep.subr.mxu0 0.0
    %1307 = vmatpush1.msra.mxu0 0.0
    %1308 = vmatprep.subr.mxu0 0.0
    %1309 = vmatpush1.msra.mxu0 0.0
    %1310 = vmatprep.subr.mxu0 0.0
    %1311 = vmatpush1.msra.mxu0 0.0
    %1312 = vmatprep.subr.mxu0 0.0
    %1313 = vmatpush1.msra.mxu0 0.0
    %1314 = vmatprep.subr.mxu0 0.0
    %1315 = vmatpush1.msra.mxu0 0.0
    %1316 = vmatprep.subr.mxu0 0.0
    %1317 = vmatpush1.msra.mxu0 0.0
    %1318 = vmatprep.subr.mxu0 0.0
    %1319 = vmatpush1.msra.mxu0 0.0
    %1320 = vmatprep.subr.mxu0 0.0
    %1321 = vmatpush1.msra.mxu0 0.0
    %1322 = vmatprep.subr.mxu0 0.0
    %1323 = vmatpush1.msra.mxu0 0.0
    %1324 = vmatprep.subr.mxu0 0.0
    %1325 = vmatpush1.msra.mxu0 0.0
    %1326 = vmatprep.subr.mxu0 0.0
    %1327 = vmatpush1.msra.mxu0 0.0
    %1328 = vmatprep.subr.mxu0 0.0
    %1329 = vmatpush1.msra.mxu0 0.0
    %1330 = vmatprep.subr.mxu0 0.0
    %1331 = vmatpush1.msra.mxu0 %v1192
    %1332 = vmatprep.subr.mxu0 0.0
    %1333 = vmatpush1.msra.mxu0 %v1191
    %1334 = vmatprep.subr.mxu0 0.0
    %1335 = vmatpush1.msra.mxu0 %v1190
    %1336 = vmatprep.subr.mxu0 0.0
    %1337 = vmatpush1.msra.mxu0 %v1189
    %1338 = vmatprep.subr.mxu0 0.0
    %1339 = vmatpush2.msra.mxu0 0.0
    %1340 = vmatprep.subr.mxu0 0.0
    %1341 = vmatpush2.msra.mxu0 0.0
    %1342 = vmatprep.subr.mxu0 0.0
    %1343 = vmatpush2.msra.mxu0 0.0
    %1344 = vmatprep.subr.mxu0 0.0
    %1345 = vmatpush2.msra.mxu0 0.0
    %1346 = vmatprep.subr.mxu0 0.0
    %1347 = vmatpush2.msra.mxu0 0.0
    %1348 = vmatprep.subr.mxu0 0.0
    %1349 = vmatpush2.msra.mxu0 0.0
    %1350 = vmatprep.subr.mxu0 0.0
    %1351 = vmatpush2.msra.mxu0 0.0
    %1352 = vmatprep.subr.mxu0 0.0
    %1353 = vmatpush2.msra.mxu0 0.0
    %1354 = vmatprep.subr.mxu0 0.0
    %1355 = vmatpush2.msra.mxu0 0.0
    %1356 = vmatprep.subr.mxu0 0.0
    %1357 = vmatpush2.msra.mxu0 0.0
    %1358 = vmatprep.subr.mxu0 0.0
    %1359 = vmatpush2.msra.mxu0 0.0
    %1360 = vmatprep.subr.mxu0 0.0
    %1361 = vmatpush2.msra.mxu0 0.0
    %1362 = vmatprep.subr.mxu0 0.0
    %1363 = vmatpush2.msra.mxu0 0.0
    %1364 = vmatprep.subr.mxu0 0.0
    %1365 = vmatpush2.msra.mxu0 0.0
    %1366 = vmatprep.subr.mxu0 0.0
    %1367 = vmatpush2.msra.mxu0 0.0
    %1368 = vmatprep.subr.mxu0 0.0
    %1369 = vmatpush2.msra.mxu0 0.0
    %1370 = vmatprep.mubr.f32.mxu0 0.0
    %1371 = vmatmul.mubr.f32.gmra.mxu0 %v1304
    %v1372 = vpop.f32.mrf.mxu0
    %v1373 = vadd.f32 0.0, %v1372
    %v1374 = vpop.f32.mrf.mxu0
    %1375 = vdwg.mxu0
    %v1376 = vadd.f32 %v1303, %v1373
    %v1377 = vxor.u32 %v1376, 2147483648
    %v1378 = vmul.f32 %v1377, 1.442695
    %v1379 = vpow.pop %v1378
    %v1380 = vadd.f32 %v1379, 1.0
    %v1381 = vrcp.pop %v1380
    %v1382 = vmul.f32 1.0, %v1381
    %v1383 = vtanh.pop %v1376
    %v1384 = vmul.f32 %v1382, %v1291
    %1386 = vrot.lane.b32.xlu0 %v1383, 64
    %v1387 = vpop.permute.xlu0 %1386
    %v1389 = vmul.f32 %v1382, %v1387
    %1391 = vrot.lane.b32.xlu0 %v1389, 32
    %v1392 = vpop.permute.xlu0 %1391
    %v1394 = vadd.f32 %v1384, %v1392
    %v1395 = vtanh.pop %v1394
    %1397 = vrot.lane.b32.xlu0 %v1395, 64
    %v1398 = vpop.permute.xlu0 %1397
    %v1400 = vmul.f32 %v1382, %v1398
    %1402 = vrot.lane.b32.xlu0 %v1400, 32
    %v1403 = vpop.permute.xlu0 %1402
    %1405 = vst.msk [vmem:[%s431] sm:$0xff] %vm220, %v1403
    %v1406 = vld [vmem:[%s433] sm:$0xff]
    %v1407 = vsel %vm220, %v1403, 0
    %1409 = vmatprep.subr.mxu0 0.0
    %1410 = vmatpush1.msra.mxu0 0.0
    %1411 = vmatprep.subr.mxu0 0.0
    %1412 = vmatpush1.msra.mxu0 0.0
    %1413 = vmatprep.subr.mxu0 0.0
    %1414 = vmatpush1.msra.mxu0 0.0
    %1415 = vmatprep.subr.mxu0 0.0
    %1416 = vmatpush1.msra.mxu0 0.0
    %1417 = vmatprep.subr.mxu0 0.0
    %1418 = vmatpush1.msra.mxu0 0.0
    %1419 = vmatprep.subr.mxu0 0.0
    %1420 = vmatpush1.msra.mxu0 0.0
    %1421 = vmatprep.subr.mxu0 0.0
    %1422 = vmatpush1.msra.mxu0 0.0
    %1423 = vmatprep.subr.mxu0 0.0
    %1424 = vmatpush1.msra.mxu0 0.0
    %1425 = vmatprep.subr.mxu0 0.0
    %1426 = vmatpush1.msra.mxu0 0.0
    %1427 = vmatprep.subr.mxu0 0.0
    %1428 = vmatpush1.msra.mxu0 0.0
    %1429 = vmatprep.subr.mxu0 0.0
    %1430 = vmatpush1.msra.mxu0 0.0
    %1431 = vmatprep.subr.mxu0 0.0
    %1432 = vmatpush1.msra.mxu0 0.0
    %1433 = vmatprep.subr.mxu0 0.0
    %1434 = vmatpush1.msra.mxu0 %v1192
    %1435 = vmatprep.subr.mxu0 0.0
    %1436 = vmatpush1.msra.mxu0 %v1191
    %1437 = vmatprep.subr.mxu0 0.0
    %1438 = vmatpush1.msra.mxu0 %v1190
    %1439 = vmatprep.subr.mxu0 0.0
    %1440 = vmatpush1.msra.mxu0 %v1189
    %1441 = vmatprep.subr.mxu0 0.0
    %1442 = vmatpush2.msra.mxu0 0.0
    %1443 = vmatprep.subr.mxu0 0.0
    %1444 = vmatpush2.msra.mxu0 0.0
    %1445 = vmatprep.subr.mxu0 0.0
    %1446 = vmatpush2.msra.mxu0 0.0
    %1447 = vmatprep.subr.mxu0 0.0
    %1448 = vmatpush2.msra.mxu0 0.0
    %1449 = vmatprep.subr.mxu0 0.0
    %1450 = vmatpush2.msra.mxu0 0.0
    %1451 = vmatprep.subr.mxu0 0.0
    %1452 = vmatpush2.msra.mxu0 0.0
    %1453 = vmatprep.subr.mxu0 0.0
    %1454 = vmatpush2.msra.mxu0 0.0
    %1455 = vmatprep.subr.mxu0 0.0
    %1456 = vmatpush2.msra.mxu0 0.0
    %1457 = vmatprep.subr.mxu0 0.0
    %1458 = vmatpush2.msra.mxu0 0.0
    %1459 = vmatprep.subr.mxu0 0.0
    %1460 = vmatpush2.msra.mxu0 0.0
    %1461 = vmatprep.subr.mxu0 0.0
    %1462 = vmatpush2.msra.mxu0 0.0
    %1463 = vmatprep.subr.mxu0 0.0
    %1464 = vmatpush2.msra.mxu0 0.0
    %1465 = vmatprep.subr.mxu0 0.0
    %1466 = vmatpush2.msra.mxu0 0.0
    %1467 = vmatprep.subr.mxu0 0.0
    %1468 = vmatpush2.msra.mxu0 0.0
    %1469 = vmatprep.subr.mxu0 0.0
    %1470 = vmatpush2.msra.mxu0 0.0
    %1471 = vmatprep.subr.mxu0 0.0
    %1472 = vmatpush2.msra.mxu0 0.0
    %1473 = vmatprep.mubr.f32.mxu0 0.0
    %1474 = vmatmul.mubr.f32.gmra.mxu0 %v1407
    %v1475 = vpop.f32.mrf.mxu0
    %v1476 = vadd.f32 0.0, %v1475
    %v1477 = vpop.f32.mrf.mxu0
    %1478 = vdwg.mxu0
    %v1479 = vadd.f32 %v1406, %v1476
    %v1480 = vxor.u32 %v1479, 2147483648
    %v1481 = vmul.f32 %v1480, 1.442695
    %v1482 = vpow.pop %v1481
    %v1483 = vadd.f32 %v1482, 1.0
    %v1484 = vrcp.pop %v1483
    %v1485 = vmul.f32 1.0, %v1484
    %v1486 = vtanh.pop %v1479
    %v1487 = vmul.f32 %v1485, %v1394
    %1489 = vrot.lane.b32.xlu0 %v1486, 64
    %v1490 = vpop.permute.xlu0 %1489
    %v1492 = vmul.f32 %v1485, %v1490
    %1494 = vrot.lane.b32.xlu0 %v1492, 32
    %v1495 = vpop.permute.xlu0 %1494
    %v1497 = vadd.f32 %v1487, %v1495
    %v1498 = vtanh.pop %v1497
    %1500 = vrot.lane.b32.xlu0 %v1498, 64
    %v1501 = vpop.permute.xlu0 %1500
    %v1503 = vmul.f32 %v1485, %v1501
    %1505 = vrot.lane.b32.xlu0 %v1503, 32
    %v1506 = vpop.permute.xlu0 %1505
    %1508 = vst.msk [vmem:[%s536] sm:$0xff] %vm220, %v1506
    %v1509 = vld [vmem:[%s538] sm:$0xff]
    %v1510 = vsel %vm220, %v1506, 0
    %1512 = vmatprep.subr.mxu0 0.0
    %1513 = vmatpush1.msra.mxu0 0.0
    %1514 = vmatprep.subr.mxu0 0.0
    %1515 = vmatpush1.msra.mxu0 0.0
    %1516 = vmatprep.subr.mxu0 0.0
    %1517 = vmatpush1.msra.mxu0 0.0
    %1518 = vmatprep.subr.mxu0 0.0
    %1519 = vmatpush1.msra.mxu0 0.0
    %1520 = vmatprep.subr.mxu0 0.0
    %1521 = vmatpush1.msra.mxu0 0.0
    %1522 = vmatprep.subr.mxu0 0.0
    %1523 = vmatpush1.msra.mxu0 0.0
    %1524 = vmatprep.subr.mxu0 0.0
    %1525 = vmatpush1.msra.mxu0 0.0
    %1526 = vmatprep.subr.mxu0 0.0
    %1527 = vmatpush1.msra.mxu0 0.0
    %1528 = vmatprep.subr.mxu0 0.0
    %1529 = vmatpush1.msra.mxu0 0.0
    %1530 = vmatprep.subr.mxu0 0.0
    %1531 = vmatpush1.msra.mxu0 0.0
    %1532 = vmatprep.subr.mxu0 0.0
    %1533 = vmatpush1.msra.mxu0 0.0
    %1534 = vmatprep.subr.mxu0 0.0
    %1535 = vmatpush1.msra.mxu0 0.0
    %1536 = vmatprep.subr.mxu0 0.0
    %1537 = vmatpush1.msra.mxu0 %v1192
    %1538 = vmatprep.subr.mxu0 0.0
    %1539 = vmatpush1.msra.mxu0 %v1191
    %1540 = vmatprep.subr.mxu0 0.0
    %1541 = vmatpush1.msra.mxu0 %v1190
    %1542 = vmatprep.subr.mxu0 0.0
    %1543 = vmatpush1.msra.mxu0 %v1189
    %1544 = vmatprep.subr.mxu0 0.0
    %1545 = vmatpush2.msra.mxu0 0.0
    %1546 = vmatprep.subr.mxu0 0.0
    %1547 = vmatpush2.msra.mxu0 0.0
    %1548 = vmatprep.subr.mxu0 0.0
    %1549 = vmatpush2.msra.mxu0 0.0
    %1550 = vmatprep.subr.mxu0 0.0
    %1551 = vmatpush2.msra.mxu0 0.0
    %1552 = vmatprep.subr.mxu0 0.0
    %1553 = vmatpush2.msra.mxu0 0.0
    %1554 = vmatprep.subr.mxu0 0.0
    %1555 = vmatpush2.msra.mxu0 0.0
    %1556 = vmatprep.subr.mxu0 0.0
    %1557 = vmatpush2.msra.mxu0 0.0
    %1558 = vmatprep.subr.mxu0 0.0
    %1559 = vmatpush2.msra.mxu0 0.0
    %1560 = vmatprep.subr.mxu0 0.0
    %1561 = vmatpush2.msra.mxu0 0.0
    %1562 = vmatprep.subr.mxu0 0.0
    %1563 = vmatpush2.msra.mxu0 0.0
    %1564 = vmatprep.subr.mxu0 0.0
    %1565 = vmatpush2.msra.mxu0 0.0
    %1566 = vmatprep.subr.mxu0 0.0
    %1567 = vmatpush2.msra.mxu0 0.0
    %1568 = vmatprep.subr.mxu0 0.0
    %1569 = vmatpush2.msra.mxu0 0.0
    %1570 = vmatprep.subr.mxu0 0.0
    %1571 = vmatpush2.msra.mxu0 0.0
    %1572 = vmatprep.subr.mxu0 0.0
    %1573 = vmatpush2.msra.mxu0 0.0
    %1574 = vmatprep.subr.mxu0 0.0
    %1575 = vmatpush2.msra.mxu0 0.0
    %1576 = vmatprep.mubr.f32.mxu0 0.0
    %1577 = vmatmul.mubr.f32.gmra.mxu0 %v1510
    %v1578 = vpop.f32.mrf.mxu0
    %v1579 = vadd.f32 0.0, %v1578
    %v1580 = vpop.f32.mrf.mxu0
    %1581 = vdwg.mxu0
    %v1582 = vadd.f32 %v1509, %v1579
    %v1583 = vxor.u32 %v1582, 2147483648
    %v1584 = vmul.f32 %v1583, 1.442695
    %v1585 = vpow.pop %v1584
    %v1586 = vadd.f32 %v1585, 1.0
    %v1587 = vrcp.pop %v1586
    %v1588 = vmul.f32 1.0, %v1587
    %v1589 = vtanh.pop %v1582
    %v1590 = vmul.f32 %v1588, %v1497
    %1592 = vrot.lane.b32.xlu0 %v1589, 64
    %v1593 = vpop.permute.xlu0 %1592
    %v1595 = vmul.f32 %v1588, %v1593
    %1597 = vrot.lane.b32.xlu0 %v1595, 32
    %v1598 = vpop.permute.xlu0 %1597
    %v1600 = vadd.f32 %v1590, %v1598
    %v1601 = vtanh.pop %v1600
    %1603 = vrot.lane.b32.xlu0 %v1601, 64
    %v1604 = vpop.permute.xlu0 %1603
    %v1606 = vmul.f32 %v1588, %v1604
    %1608 = vrot.lane.b32.xlu0 %v1606, 32
    %v1609 = vpop.permute.xlu0 %1608
    %1611 = vst.msk [vmem:[%s641] sm:$0xff] %vm220, %v1609
    %v1612 = vld [vmem:[%s643] sm:$0xff]
    %v1613 = vsel %vm220, %v1609, 0
    %1615 = vmatprep.subr.mxu0 0.0
    %1616 = vmatpush1.msra.mxu0 0.0
    %1617 = vmatprep.subr.mxu0 0.0
    %1618 = vmatpush1.msra.mxu0 0.0
    %1619 = vmatprep.subr.mxu0 0.0
    %1620 = vmatpush1.msra.mxu0 0.0
    %1621 = vmatprep.subr.mxu0 0.0
    %1622 = vmatpush1.msra.mxu0 0.0
    %1623 = vmatprep.subr.mxu0 0.0
    %1624 = vmatpush1.msra.mxu0 0.0
    %1625 = vmatprep.subr.mxu0 0.0
    %1626 = vmatpush1.msra.mxu0 0.0
    %1627 = vmatprep.subr.mxu0 0.0
    %1628 = vmatpush1.msra.mxu0 0.0
    %1629 = vmatprep.subr.mxu0 0.0
    %1630 = vmatpush1.msra.mxu0 0.0
    %1631 = vmatprep.subr.mxu0 0.0
    %1632 = vmatpush1.msra.mxu0 0.0
    %1633 = vmatprep.subr.mxu0 0.0
    %1634 = vmatpush1.msra.mxu0 0.0
    %1635 = vmatprep.subr.mxu0 0.0
    %1636 = vmatpush1.msra.mxu0 0.0
    %1637 = vmatprep.subr.mxu0 0.0
    %1638 = vmatpush1.msra.mxu0 0.0
    %1639 = vmatprep.subr.mxu0 0.0
    %1640 = vmatpush1.msra.mxu0 %v1192
    %1641 = vmatprep.subr.mxu0 0.0
    %1642 = vmatpush1.msra.mxu0 %v1191
    %1643 = vmatprep.subr.mxu0 0.0
    %1644 = vmatpush1.msra.mxu0 %v1190
    %1645 = vmatprep.subr.mxu0 0.0
    %1646 = vmatpush1.msra.mxu0 %v1189
    %1647 = vmatprep.subr.mxu0 0.0
    %1648 = vmatpush2.msra.mxu0 0.0
    %1649 = vmatprep.subr.mxu0 0.0
    %1650 = vmatpush2.msra.mxu0 0.0
    %1651 = vmatprep.subr.mxu0 0.0
    %1652 = vmatpush2.msra.mxu0 0.0
    %1653 = vmatprep.subr.mxu0 0.0
    %1654 = vmatpush2.msra.mxu0 0.0
    %1655 = vmatprep.subr.mxu0 0.0
    %1656 = vmatpush2.msra.mxu0 0.0
    %1657 = vmatprep.subr.mxu0 0.0
    %1658 = vmatpush2.msra.mxu0 0.0
    %1659 = vmatprep.subr.mxu0 0.0
    %1660 = vmatpush2.msra.mxu0 0.0
    %1661 = vmatprep.subr.mxu0 0.0
    %1662 = vmatpush2.msra.mxu0 0.0
    %1663 = vmatprep.subr.mxu0 0.0
    %1664 = vmatpush2.msra.mxu0 0.0
    %1665 = vmatprep.subr.mxu0 0.0
    %1666 = vmatpush2.msra.mxu0 0.0
    %1667 = vmatprep.subr.mxu0 0.0
    %1668 = vmatpush2.msra.mxu0 0.0
    %1669 = vmatprep.subr.mxu0 0.0
    %1670 = vmatpush2.msra.mxu0 0.0
    %1671 = vmatprep.subr.mxu0 0.0
    %1672 = vmatpush2.msra.mxu0 0.0
    %1673 = vmatprep.subr.mxu0 0.0
    %1674 = vmatpush2.msra.mxu0 0.0
    %1675 = vmatprep.subr.mxu0 0.0
    %1676 = vmatpush2.msra.mxu0 0.0
    %1677 = vmatprep.subr.mxu0 0.0
    %1678 = vmatpush2.msra.mxu0 0.0
    %1679 = vmatprep.mubr.f32.mxu0 0.0
    %1680 = vmatmul.mubr.f32.gmra.mxu0 %v1613
    %v1681 = vpop.f32.mrf.mxu0
    %v1682 = vadd.f32 0.0, %v1681
    %v1683 = vpop.f32.mrf.mxu0
    %1684 = vdwg.mxu0
    %v1685 = vadd.f32 %v1612, %v1682
    %v1686 = vxor.u32 %v1685, 2147483648
    %v1687 = vmul.f32 %v1686, 1.442695
    %v1688 = vpow.pop %v1687
    %v1689 = vadd.f32 %v1688, 1.0
    %v1690 = vrcp.pop %v1689
    %v1691 = vmul.f32 1.0, %v1690
    %v1692 = vtanh.pop %v1685
    %v1693 = vmul.f32 %v1691, %v1600
    %1695 = vrot.lane.b32.xlu0 %v1692, 64
    %v1696 = vpop.permute.xlu0 %1695
    %v1698 = vmul.f32 %v1691, %v1696
    %1700 = vrot.lane.b32.xlu0 %v1698, 32
    %v1701 = vpop.permute.xlu0 %1700
    %v1703 = vadd.f32 %v1693, %v1701
    %v1704 = vtanh.pop %v1703
    %1706 = vrot.lane.b32.xlu0 %v1704, 64
    %v1707 = vpop.permute.xlu0 %1706
    %v1709 = vmul.f32 %v1691, %v1707
    %1711 = vrot.lane.b32.xlu0 %v1709, 32
    %v1712 = vpop.permute.xlu0 %1711
    %1714 = vst.msk [vmem:[%s746] sm:$0xff] %vm220, %v1712
    %v1715 = vld [vmem:[%s748] sm:$0xff]
    %v1716 = vsel %vm220, %v1712, 0
    %1718 = vmatprep.subr.mxu0 0.0
    %1719 = vmatpush1.msra.mxu0 0.0
    %1720 = vmatprep.subr.mxu0 0.0
    %1721 = vmatpush1.msra.mxu0 0.0
    %1722 = vmatprep.subr.mxu0 0.0
    %1723 = vmatpush1.msra.mxu0 0.0
    %1724 = vmatprep.subr.mxu0 0.0
    %1725 = vmatpush1.msra.mxu0 0.0
    %1726 = vmatprep.subr.mxu0 0.0
    %1727 = vmatpush1.msra.mxu0 0.0
    %1728 = vmatprep.subr.mxu0 0.0
    %1729 = vmatpush1.msra.mxu0 0.0
    %1730 = vmatprep.subr.mxu0 0.0
    %1731 = vmatpush1.msra.mxu0 0.0
    %1732 = vmatprep.subr.mxu0 0.0
    %1733 = vmatpush1.msra.mxu0 0.0
    %1734 = vmatprep.subr.mxu0 0.0
    %1735 = vmatpush1.msra.mxu0 0.0
    %1736 = vmatprep.subr.mxu0 0.0
    %1737 = vmatpush1.msra.mxu0 0.0
    %1738 = vmatprep.subr.mxu0 0.0
    %1739 = vmatpush1.msra.mxu0 0.0
    %1740 = vmatprep.subr.mxu0 0.0
    %1741 = vmatpush1.msra.mxu0 0.0
    %1742 = vmatprep.subr.mxu0 0.0
    %1743 = vmatpush1.msra.mxu0 %v1192
    %1744 = vmatprep.subr.mxu0 0.0
    %1745 = vmatpush1.msra.mxu0 %v1191
    %1746 = vmatprep.subr.mxu0 0.0
    %1747 = vmatpush1.msra.mxu0 %v1190
    %1748 = vmatprep.subr.mxu0 0.0
    %1749 = vmatpush1.msra.mxu0 %v1189
    %1750 = vmatprep.subr.mxu0 0.0
    %1751 = vmatpush2.msra.mxu0 0.0
    %1752 = vmatprep.subr.mxu0 0.0
    %1753 = vmatpush2.msra.mxu0 0.0
    %1754 = vmatprep.subr.mxu0 0.0
    %1755 = vmatpush2.msra.mxu0 0.0
    %1756 = vmatprep.subr.mxu0 0.0
    %1757 = vmatpush2.msra.mxu0 0.0
    %1758 = vmatprep.subr.mxu0 0.0
    %1759 = vmatpush2.msra.mxu0 0.0
    %1760 = vmatprep.subr.mxu0 0.0
    %1761 = vmatpush2.msra.mxu0 0.0
    %1762 = vmatprep.subr.mxu0 0.0
    %1763 = vmatpush2.msra.mxu0 0.0
    %1764 = vmatprep.subr.mxu0 0.0
    %1765 = vmatpush2.msra.mxu0 0.0
    %1766 = vmatprep.subr.mxu0 0.0
    %1767 = vmatpush2.msra.mxu0 0.0
    %1768 = vmatprep.subr.mxu0 0.0
    %1769 = vmatpush2.msra.mxu0 0.0
    %1770 = vmatprep.subr.mxu0 0.0
    %1771 = vmatpush2.msra.mxu0 0.0
    %1772 = vmatprep.subr.mxu0 0.0
    %1773 = vmatpush2.msra.mxu0 0.0
    %1774 = vmatprep.subr.mxu0 0.0
    %1775 = vmatpush2.msra.mxu0 0.0
    %1776 = vmatprep.subr.mxu0 0.0
    %1777 = vmatpush2.msra.mxu0 0.0
    %1778 = vmatprep.subr.mxu0 0.0
    %1779 = vmatpush2.msra.mxu0 0.0
    %1780 = vmatprep.subr.mxu0 0.0
    %1781 = vmatpush2.msra.mxu0 0.0
    %1782 = vmatprep.mubr.f32.mxu0 0.0
    %1783 = vmatmul.mubr.f32.gmra.mxu0 %v1716
    %v1784 = vpop.f32.mrf.mxu0
    %v1785 = vadd.f32 0.0, %v1784
    %v1786 = vpop.f32.mrf.mxu0
    %1787 = vdwg.mxu0
    %v1788 = vadd.f32 %v1715, %v1785
    %v1789 = vxor.u32 %v1788, 2147483648
    %v1790 = vmul.f32 %v1789, 1.442695
    %v1791 = vpow.pop %v1790
    %v1792 = vadd.f32 %v1791, 1.0
    %v1793 = vrcp.pop %v1792
    %v1794 = vmul.f32 1.0, %v1793
    %v1795 = vtanh.pop %v1788
    %v1796 = vmul.f32 %v1794, %v1703
    %1798 = vrot.lane.b32.xlu0 %v1795, 64
    %v1799 = vpop.permute.xlu0 %1798
    %v1801 = vmul.f32 %v1794, %v1799
    %1803 = vrot.lane.b32.xlu0 %v1801, 32
    %v1804 = vpop.permute.xlu0 %1803
    %v1806 = vadd.f32 %v1796, %v1804
    %v1807 = vtanh.pop %v1806
    %1809 = vrot.lane.b32.xlu0 %v1807, 64
    %v1810 = vpop.permute.xlu0 %1809
    %v1812 = vmul.f32 %v1794, %v1810
    %1814 = vrot.lane.b32.xlu0 %v1812, 32
    %v1815 = vpop.permute.xlu0 %1814
    %1817 = vst.msk [vmem:[%s851] sm:$0xff] %vm220, %v1815
    %v1818 = vld [vmem:[%s853] sm:$0xff]
    %v1819 = vsel %vm220, %v1815, 0
    %1821 = vmatprep.subr.mxu0 0.0
    %1822 = vmatpush1.msra.mxu0 0.0
    %1823 = vmatprep.subr.mxu0 0.0
    %1824 = vmatpush1.msra.mxu0 0.0
    %1825 = vmatprep.subr.mxu0 0.0
    %1826 = vmatpush1.msra.mxu0 0.0
    %1827 = vmatprep.subr.mxu0 0.0
    %1828 = vmatpush1.msra.mxu0 0.0
    %1829 = vmatprep.subr.mxu0 0.0
    %1830 = vmatpush1.msra.mxu0 0.0
    %1831 = vmatprep.subr.mxu0 0.0
    %1832 = vmatpush1.msra.mxu0 0.0
    %1833 = vmatprep.subr.mxu0 0.0
    %1834 = vmatpush1.msra.mxu0 0.0
    %1835 = vmatprep.subr.mxu0 0.0
    %1836 = vmatpush1.msra.mxu0 0.0
    %1837 = vmatprep.subr.mxu0 0.0
    %1838 = vmatpush1.msra.mxu0 0.0
    %1839 = vmatprep.subr.mxu0 0.0
    %1840 = vmatpush1.msra.mxu0 0.0
    %1841 = vmatprep.subr.mxu0 0.0
    %1842 = vmatpush1.msra.mxu0 0.0
    %1843 = vmatprep.subr.mxu0 0.0
    %1844 = vmatpush1.msra.mxu0 0.0
    %1845 = vmatprep.subr.mxu0 0.0
    %1846 = vmatpush1.msra.mxu0 %v1192
    %1847 = vmatprep.subr.mxu0 0.0
    %1848 = vmatpush1.msra.mxu0 %v1191
    %1849 = vmatprep.subr.mxu0 0.0
    %1850 = vmatpush1.msra.mxu0 %v1190
    %1851 = vmatprep.subr.mxu0 0.0
    %1852 = vmatpush1.msra.mxu0 %v1189
    %1853 = vmatprep.subr.mxu0 0.0
    %1854 = vmatpush2.msra.mxu0 0.0
    %1855 = vmatprep.subr.mxu0 0.0
    %1856 = vmatpush2.msra.mxu0 0.0
    %1857 = vmatprep.subr.mxu0 0.0
    %1858 = vmatpush2.msra.mxu0 0.0
    %1859 = vmatprep.subr.mxu0 0.0
    %1860 = vmatpush2.msra.mxu0 0.0
    %1861 = vmatprep.subr.mxu0 0.0
    %1862 = vmatpush2.msra.mxu0 0.0
    %1863 = vmatprep.subr.mxu0 0.0
    %1864 = vmatpush2.msra.mxu0 0.0
    %1865 = vmatprep.subr.mxu0 0.0
    %1866 = vmatpush2.msra.mxu0 0.0
    %1867 = vmatprep.subr.mxu0 0.0
    %1868 = vmatpush2.msra.mxu0 0.0
    %1869 = vmatprep.subr.mxu0 0.0
    %1870 = vmatpush2.msra.mxu0 0.0
    %1871 = vmatprep.subr.mxu0 0.0
    %1872 = vmatpush2.msra.mxu0 0.0
    %1873 = vmatprep.subr.mxu0 0.0
    %1874 = vmatpush2.msra.mxu0 0.0
    %1875 = vmatprep.subr.mxu0 0.0
    %1876 = vmatpush2.msra.mxu0 0.0
    %1877 = vmatprep.subr.mxu0 0.0
    %1878 = vmatpush2.msra.mxu0 0.0
    %1879 = vmatprep.subr.mxu0 0.0
    %1880 = vmatpush2.msra.mxu0 0.0
    %1881 = vmatprep.subr.mxu0 0.0
    %1882 = vmatpush2.msra.mxu0 0.0
    %1883 = vmatprep.subr.mxu0 0.0
    %1884 = vmatpush2.msra.mxu0 0.0
    %1885 = vmatprep.mubr.f32.mxu0 0.0
    %1886 = vmatmul.mubr.f32.gmra.mxu0 %v1819
    %v1887 = vpop.f32.mrf.mxu0
    %v1888 = vadd.f32 0.0, %v1887
    %v1889 = vpop.f32.mrf.mxu0
    %1890 = vdwg.mxu0
    %v1891 = vadd.f32 %v1818, %v1888
    %v1892 = vxor.u32 %v1891, 2147483648
    %v1893 = vmul.f32 %v1892, 1.442695
    %v1894 = vpow.pop %v1893
    %v1895 = vadd.f32 %v1894, 1.0
    %v1896 = vrcp.pop %v1895
    %v1897 = vmul.f32 1.0, %v1896
    %v1898 = vtanh.pop %v1891
    %v1899 = vmul.f32 %v1897, %v1806
    %1901 = vrot.lane.b32.xlu0 %v1898, 64
    %v1902 = vpop.permute.xlu0 %1901
    %v1904 = vmul.f32 %v1897, %v1902
    %1906 = vrot.lane.b32.xlu0 %v1904, 32
    %v1907 = vpop.permute.xlu0 %1906
    %v1909 = vadd.f32 %v1899, %v1907
    %v1910 = vtanh.pop %v1909
    %1912 = vrot.lane.b32.xlu0 %v1910, 64
    %v1913 = vpop.permute.xlu0 %1912
    %v1915 = vmul.f32 %v1897, %v1913
    %1917 = vrot.lane.b32.xlu0 %v1915, 32
    %v1918 = vpop.permute.xlu0 %1917
    %1920 = vst.msk [vmem:[%s956] sm:$0xff] %vm220, %v1918
    %v1921 = vld [vmem:[%s958] sm:$0xff]
    %v1922 = vsel %vm220, %v1918, 0
    %1924 = vmatprep.subr.mxu0 0.0
    %1925 = vmatpush1.msra.mxu0 0.0
    %1926 = vmatprep.subr.mxu0 0.0
    %1927 = vmatpush1.msra.mxu0 0.0
    %1928 = vmatprep.subr.mxu0 0.0
    %1929 = vmatpush1.msra.mxu0 0.0
    %1930 = vmatprep.subr.mxu0 0.0
    %1931 = vmatpush1.msra.mxu0 0.0
    %1932 = vmatprep.subr.mxu0 0.0
    %1933 = vmatpush1.msra.mxu0 0.0
    %1934 = vmatprep.subr.mxu0 0.0
    %1935 = vmatpush1.msra.mxu0 0.0
    %1936 = vmatprep.subr.mxu0 0.0
    %1937 = vmatpush1.msra.mxu0 0.0
    %1938 = vmatprep.subr.mxu0 0.0
    %1939 = vmatpush1.msra.mxu0 0.0
    %1940 = vmatprep.subr.mxu0 0.0
    %1941 = vmatpush1.msra.mxu0 0.0
    %1942 = vmatprep.subr.mxu0 0.0
    %1943 = vmatpush1.msra.mxu0 0.0
    %1944 = vmatprep.subr.mxu0 0.0
    %1945 = vmatpush1.msra.mxu0 0.0
    %1946 = vmatprep.subr.mxu0 0.0
    %1947 = vmatpush1.msra.mxu0 0.0
    %1948 = vmatprep.subr.mxu0 0.0
    %1949 = vmatpush1.msra.mxu0 %v1192
    %1950 = vmatprep.subr.mxu0 0.0
    %1951 = vmatpush1.msra.mxu0 %v1191
    %1952 = vmatprep.subr.mxu0 0.0
    %1953 = vmatpush1.msra.mxu0 %v1190
    %1954 = vmatprep.subr.mxu0 0.0
    %1955 = vmatpush1.msra.mxu0 %v1189
    %1956 = vmatprep.subr.mxu0 0.0
    %1957 = vmatpush2.msra.mxu0 0.0
    %1958 = vmatprep.subr.mxu0 0.0
    %1959 = vmatpush2.msra.mxu0 0.0
    %1960 = vmatprep.subr.mxu0 0.0
    %1961 = vmatpush2.msra.mxu0 0.0
    %1962 = vmatprep.subr.mxu0 0.0
    %1963 = vmatpush2.msra.mxu0 0.0
    %1964 = vmatprep.subr.mxu0 0.0
    %1965 = vmatpush2.msra.mxu0 0.0
    %1966 = vmatprep.subr.mxu0 0.0
    %1967 = vmatpush2.msra.mxu0 0.0
    %1968 = vmatprep.subr.mxu0 0.0
    %1969 = vmatpush2.msra.mxu0 0.0
    %1970 = vmatprep.subr.mxu0 0.0
    %1971 = vmatpush2.msra.mxu0 0.0
    %1972 = vmatprep.subr.mxu0 0.0
    %1973 = vmatpush2.msra.mxu0 0.0
    %1974 = vmatprep.subr.mxu0 0.0
    %1975 = vmatpush2.msra.mxu0 0.0
    %1976 = vmatprep.subr.mxu0 0.0
    %1977 = vmatpush2.msra.mxu0 0.0
    %1978 = vmatprep.subr.mxu0 0.0
    %1979 = vmatpush2.msra.mxu0 0.0
    %1980 = vmatprep.subr.mxu0 0.0
    %1981 = vmatpush2.msra.mxu0 0.0
    %1982 = vmatprep.subr.mxu0 0.0
    %1983 = vmatpush2.msra.mxu0 0.0
    %1984 = vmatprep.subr.mxu0 0.0
    %1985 = vmatpush2.msra.mxu0 0.0
    %1986 = vmatprep.subr.mxu0 0.0
    %1987 = vmatpush2.msra.mxu0 0.0
    %1988 = vmatprep.mubr.f32.mxu0 0.0
    %1989 = vmatmul.mubr.f32.gmra.mxu0 %v1922
    %v1990 = vpop.f32.mrf.mxu0
    %v1991 = vadd.f32 0.0, %v1990
    %v1992 = vpop.f32.mrf.mxu0
    %1993 = vdwg.mxu0
    %v1994 = vadd.f32 %v1921, %v1991
    %v1995 = vxor.u32 %v1994, 2147483648
    %v1996 = vmul.f32 %v1995, 1.442695
    %v1997 = vpow.pop %v1996
    %v1998 = vadd.f32 %v1997, 1.0
    %v1999 = vrcp.pop %v1998
    %v2000 = vmul.f32 1.0, %v1999
    %v2001 = vtanh.pop %v1994
    %v2002 = vmul.f32 %v2000, %v1909
    %2004 = vrot.lane.b32.xlu0 %v2001, 64
    %v2005 = vpop.permute.xlu0 %2004
    %v2007 = vmul.f32 %v2000, %v2005
    %2009 = vrot.lane.b32.xlu0 %v2007, 32
    %v2010 = vpop.permute.xlu0 %2009
    %v2012 = vadd.f32 %v2002, %v2010
    %v2013 = vtanh.pop %v2012
    %2015 = vrot.lane.b32.xlu0 %v2013, 64
    %v2016 = vpop.permute.xlu0 %2015
    %v2018 = vmul.f32 %v2000, %v2016
    %2020 = vrot.lane.b32.xlu0 %v2018, 32
    %v2021 = vpop.permute.xlu0 %2020
    %2023 = vst.msk [vmem:[%s1061] sm:$0xff] %vm220, %v2021
    %2024 = vst.msk [vmem:[#allocation6] sm:$0xff] %vm220, %v2021
    %2026 = vrot.lane.b32.xlu0 %v2012, 96
    %v2027 = vpop.permute.xlu0 %2026
    %2029 = vst.msk [vmem:[#allocation7] sm:$0xff] %vm220, %v2027
    %v2030 = vld [vmem:[#allocation3] sm:$0xff]
    %v2031 = vld [vmem:[#allocation3 + $0x8] sm:$0xff]
    %v2032 = vld [vmem:[#allocation3 + $0x10] sm:$0xff]
    %v2033 = vld [vmem:[#allocation3 + $0x18] sm:$0xff]
    %v2034 = vld [vmem:[#allocation3 + $0x20] sm:$0xff]
    %v2035 = vld [vmem:[#allocation3 + $0x28] sm:$0xff]
    %v2036 = vld [vmem:[#allocation3 + $0x30] sm:$0xff]
    %v2037 = vld [vmem:[#allocation3 + $0x38] sm:$0xff]
    %v2038 = vpack.c.bf16 %v2031, %v2030
    %v2039 = vpack.c.bf16 %v2033, %v2032
    %v2040 = vpack.c.bf16 %v2035, %v2034
    %v2041 = vpack.c.bf16 %v2037, %v2036
    %v2042 = vld [vmem:[%s7] sm:$0xf]
    %v2043 = vld [vmem:[%s7 + $0x4] sm:$0xf]
    %v2044 = vld [vmem:[%s7 + $0x8] sm:$0xf]
    %v2045 = vld [vmem:[%s7 + $0xc] sm:$0xf]
    %v2046 = vld [vmem:[%s8] sm:$0x1]
    %v2048 = vlaneseq
    %v2049 = vshrl.u32 %v2048, 7
    %v2050 = vsub.s32 0, %v2049
    %v2051 = vrot.slane %v2046, %v2050
    %v2057 = vunpack.c.l.b16 %v2042
    %v2058 = vunpack.c.l.b16 %v2043
    %v2059 = vunpack.c.l.b16 %v2044
    %v2060 = vunpack.c.l.b16 %v2045
    %v2061 = vpack.c.b16 %v2058, %v2057
    %v2062 = vpack.c.b16 %v2060, %v2059
    %v2066 = vsel %vm220, %v2038, 0
    %v2069 = vsel %vm220, %v2039, 0
    %v2072 = vsel %vm220, %v2040, 0
    %v2075 = vsel %vm220, %v2041, 0
    %2077 = vmatprep.subr.bf16.mxu0 0
    %2078 = vmatpush1.bf16.msra.mxu0 0
    %2079 = vmatprep.subr.bf16.mxu0 0
    %2080 = vmatpush1.bf16.msra.mxu0 0
    %2081 = vmatprep.subr.bf16.mxu0 0
    %2082 = vmatpush1.bf16.msra.mxu0 0
    %2083 = vmatprep.subr.bf16.mxu0 0
    %2084 = vmatpush1.bf16.msra.mxu0 0
    %2085 = vmatprep.subr.bf16.mxu0 0
    %2086 = vmatpush1.bf16.msra.mxu0 0
    %2087 = vmatprep.subr.bf16.mxu0 0
    %2088 = vmatpush1.bf16.msra.mxu0 0
    %2089 = vmatprep.subr.bf16.mxu0 0
    %2090 = vmatpush1.bf16.msra.mxu0 %v2062
    %2091 = vmatprep.subr.bf16.mxu0 0
    %2092 = vmatpush1.bf16.msra.mxu0 %v2061
    %2093 = vmatprep.subr.bf16.mxu0 0
    %2094 = vmatpush2.bf16.msra.mxu0 0
    %2095 = vmatprep.subr.bf16.mxu0 0
    %2096 = vmatpush2.bf16.msra.mxu0 0
    %2097 = vmatprep.subr.bf16.mxu0 0
    %2098 = vmatpush2.bf16.msra.mxu0 0
    %2099 = vmatprep.subr.bf16.mxu0 0
    %2100 = vmatpush2.bf16.msra.mxu0 0
    %2101 = vmatprep.subr.bf16.mxu0 0
    %2102 = vmatpush2.bf16.msra.mxu0 0
    %2103 = vmatprep.subr.bf16.mxu0 0
    %2104 = vmatpush2.bf16.msra.mxu0 0
    %2105 = vmatprep.subr.bf16.mxu0 0
    %2106 = vmatpush2.bf16.msra.mxu0 0
    %2107 = vmatprep.subr.bf16.mxu0 0
    %2108 = vmatpush2.bf16.msra.mxu0 0
    %2109 = vmatprep.mubr.bf16.mxu0 0
    %2110 = vmatmul.mubr.bf16.gmra.mxu0 %v2066
    %v2111 = vpop.f32.mrf.mxu0
    %v2112 = vadd.f32 %v2051, %v2111
    %v2113 = vpop.f32.mrf.mxu0
    %v2114 = vpop.f32.mrf.mxu0
    %v2115 = vadd.f32 %v2051, %v2114
    %v2116 = vpop.f32.mrf.mxu0
    %2117 = vmatprep.mubr.bf16.mxu0 0
    %2118 = vmatmul.mubr.bf16.gmra.mxu0 %v2069
    %v2119 = vpop.f32.mrf.mxu0
    %v2120 = vadd.f32 %v2051, %v2119
    %v2121 = vpop.f32.mrf.mxu0
    %v2122 = vpop.f32.mrf.mxu0
    %v2123 = vadd.f32 %v2051, %v2122
    %v2124 = vpop.f32.mrf.mxu0
    %2125 = vmatprep.mubr.bf16.mxu0 0
    %2126 = vmatmul.mubr.bf16.gmra.mxu0 %v2072
    %v2127 = vpop.f32.mrf.mxu0
    %v2128 = vadd.f32 %v2051, %v2127
    %v2129 = vpop.f32.mrf.mxu0
    %v2130 = vpop.f32.mrf.mxu0
    %v2131 = vadd.f32 %v2051, %v2130
    %v2132 = vpop.f32.mrf.mxu0
    %2133 = vmatprep.mubr.bf16.mxu0 0
    %2134 = vmatmul.mubr.bf16.gmra.mxu0 %v2075
    %v2135 = vpop.f32.mrf.mxu0
    %v2136 = vadd.f32 %v2051, %v2135
    %v2137 = vpop.f32.mrf.mxu0
    %v2138 = vpop.f32.mrf.mxu0
    %v2139 = vadd.f32 %v2051, %v2138
    %v2140 = vpop.f32.mrf.mxu0
    %2141 = vdwg.mxu0
    %2142 = vst [vmem:[#allocation14] sm:$0xff] %v2112
    %2143 = vst [vmem:[#allocation14 + $0x8] sm:$0xff] %v2115
    %2144 = vst [vmem:[#allocation14 + $0x10] sm:$0xff] %v2120
    %2145 = vst [vmem:[#allocation14 + $0x18] sm:$0xff] %v2123
    %2146 = vst [vmem:[#allocation14 + $0x20] sm:$0xff] %v2128
    %2147 = vst [vmem:[#allocation14 + $0x28] sm:$0xff] %v2131
    %2148 = vst [vmem:[#allocation14 + $0x30] sm:$0xff] %v2136
    %2149 = vst [vmem:[#allocation14 + $0x38] sm:$0xff] %v2139
    // Predicated region
    $region54: #{tpu_custom_call.1} parent=1 // pred_check
      _
    $region55: #{tpu_custom_call.1} parent=1 // pred_check_branch
      %2151 = sbr.rel (0) target = $region57
    $region56: #{tpu_custom_call.1} parent=1 // pred_region
      %s2153 = ssub.s32 1024, 1024
      %2154 = vsyncadd [#allocation10], %s2153
      %s2155 = sshll.u32 [#allocation14], 4
      %s2156 = int_to_ptr.vmem [resolvable:$true] %s2155
      %2161 = dma.vmem_to_hbm [thread:$0]  %s2156, 1024, %s9, [#allocation10], 128, 128, 8
    $region57: #{tpu_custom_call.1} parent=1 // pred_fallthru
      _
    // Predicated region
    $region58: #{tpu_custom_call.1} parent=1 // pred_check
      _
    $region59: #{tpu_custom_call.1} parent=1 // pred_check_branch
      %2163 = sbr.rel (0) target = $region61
    $region60: #{tpu_custom_call.1} parent=1 // pred_region
      %2164 = dma.done [#allocation10], 1024
    $region61: #{tpu_custom_call.1} parent=1 // pred_fallthru
      _
    %2165 = vsyncpa [#allocation9], 1
    %2166 = vsyncpa [#allocation12], 1
    %2167 = vsyncpa [#allocation10], 1

</llo_original>
